<compile_context>
chip_gen: v5e
topology: v5e:2x2
jax: 0.10.0
libtpu: 0.0.40
codegen_flags: <defaults>
</compile_context>

<pallas_src>
import functools

import jax
import jax.numpy as jnp
from jax.experimental import pallas as pl
from jax.experimental.pallas import tpu as pltpu


# ----------------------------- helpers -----------------------------

def _round_up(x, m):
    return (x + m - 1) // m * m


def _pick_tile(dim, target, align):
    """Largest tile t <= target with dim % t == 0 and t % align == 0, falling
    back to the full extent (always a legal BlockSpec block).  All dims fed to
    this are pre-padded, so the fallback only triggers for small dims."""
    if dim <= target or dim % align != 0:
        return dim
    t = (target // align) * align
    while t >= align:
        if dim % t == 0:
            return t
        t -= align
    return dim


# ----------------------------- Pallas kernels -----------------------------

def _linear_kernel(*refs, activation, has_add, has_ln, use_acc, eps):
    """Tiled matmul.  Optional fused LayerNorm prologue on the x tile (needs
    tk == K), f32 accumulation, bias / tanh-GELU / residual fused epilogue."""
    it = iter(refs)
    x_ref = next(it)
    w_ref = next(it)
    b_ref = next(it)
    g_ref = next(it) if has_ln else None
    bb_ref = next(it) if has_ln else None
    add_ref = next(it) if has_add else None
    o_ref = next(it)
    acc_ref = next(it) if use_acc else None

    x = x_ref[...]
    if has_ln:
        xf = x.astype(jnp.float32)
        mean = jnp.mean(xf, axis=-1, keepdims=True)
        var = jnp.mean(jnp.square(xf - mean), axis=-1, keepdims=True)
        xf = (xf - mean) * jax.lax.rsqrt(var + eps)
        xf = xf * g_ref[...].astype(jnp.float32) + bb_ref[...].astype(jnp.float32)
        x = xf.astype(x_ref.dtype)

    part = jnp.dot(x, w_ref[...], preferred_element_type=jnp.float32)

    def epilogue(y):
        y = y + b_ref[...].astype(jnp.float32)
        if activation == "gelu_tanh":
            # torch.nn.functional.gelu(..., approximate='tanh'), f32 on VPU/EUP
            c = 0.7978845608028654  # sqrt(2/pi)
            y = 0.5 * y * (1.0 + jnp.tanh(c * (y + 0.044715 * y * y * y)))
        if has_add:
            y = y + add_ref[...].astype(jnp.float32)
        o_ref[...] = y.astype(o_ref.dtype)

    if use_acc:
        @pl.when(pl.program_id(2) == 0)
        def _init():
            acc_ref[...] = jnp.zeros_like(acc_ref)

        acc_ref[...] += part

        @pl.when(pl.program_id(2) == pl.num_programs(2) - 1)
        def _finalize():
            epilogue(acc_ref[...])
    else:
        epilogue(part)


def _layernorm_kernel(x_ref, g_ref, b_ref, o_ref, *, eps):
    x = x_ref[...].astype(jnp.float32)                     # (tm, D)
    mean = jnp.mean(x, axis=-1, keepdims=True)
    var = jnp.mean(jnp.square(x - mean), axis=-1, keepdims=True)
    xhat = (x - mean) * jax.lax.rsqrt(var + eps)
    y = xhat * g_ref[...].astype(jnp.float32) + b_ref[...].astype(jnp.float32)
    o_ref[...] = y.astype(o_ref.dtype)


def _attention_kernel(*refs, heads, head_dim, scale, s_real, fused_slab):
    """Attention over one (batch, head-group) tile.

    Scores via dot_general contracting last dims (no k.T transpose); softmax
    in f32; padded keys masked; each head's output stored directly into the
    output block at its static column offset (no concatenate over heads)."""
    if fused_slab:
        qkv_ref, o_ref = refs
        q_ref = k_ref = v_ref = qkv_ref
        d_all = heads * head_dim
        offs = (0, d_all, 2 * d_all)
    else:
        q_ref, k_ref, v_ref, o_ref = refs
        offs = (0, 0, 0)
    s_pad = o_ref.shape[1]
    cdt = q_ref.dtype

    for h in range(heads):
        lo = h * head_dim
        q = q_ref[0, :, offs[0] + lo: offs[0] + lo + head_dim]
        k = k_ref[0, :, offs[1] + lo: offs[1] + lo + head_dim]
        v = v_ref[0, :, offs[2] + lo: offs[2] + lo + head_dim]
        s = jax.lax.dot_general(q, k, (((1,), (1,)), ((), ())),
                                preferred_element_type=jnp.float32) * scale
        if s_real < s_pad:  # mask keys coming from sequence padding
            keymask = jax.lax.broadcasted_iota(jnp.int32, s.shape, 1) < s_real
            s = jnp.where(keymask, s, -1e30)
        m = jnp.max(s, axis=-1, keepdims=True)
        p = jnp.exp(s - m)
        p = p * pl.reciprocal(jnp.sum(p, axis=-1, keepdims=True), approx=True)
        pv = jnp.dot(p.astype(cdt), v, preferred_element_type=jnp.float32)
        o_ref[0, :, lo: lo + head_dim] = pv.astype(o_ref.dtype)


# ----------------------------- kernel wrappers -----------------------------

def _cap_vmem(nbytes):
    # generous 3x headroom for in-kernel f32 temporaries, floor 16 MiB,
    # cap well under v7x's 64 MiB physical VMEM.
    return int(min(48 << 20, max(16 << 20, 3 * nbytes)))


def pallas_linear(x2d, w, b, *, activation=None, add=None, ln=None, eps=1e-6,
                  out_dtype=None, tm=512, tn=512, tk=512):
    M, K = x2d.shape
    Kw, N = w.shape
    assert K == Kw
    out_dtype = jnp.dtype(out_dtype) if out_dtype is not None else x2d.dtype

    tm = _pick_tile(M, tm, 8)
    tn = _pick_tile(N, tn, 128)
    if ln is not None:
        tk = K  # LayerNorm prologue needs the whole row in one block
    else:
        tk = _pick_tile(K, tk, 128)
    gm, gn, gk = M // tm, N // tn, K // tk
    use_acc = gk > 1

    in_specs = [
        pl.BlockSpec((tm, tk), lambda i, j, k: (i, k)),
        pl.BlockSpec((tk, tn), lambda i, j, k: (k, j)),
        pl.BlockSpec((1, tn), lambda i, j, k: (0, j)),
    ]
    inputs = [x2d, w, b.reshape(1, N)]
    if ln is not None:
        gamma, beta = ln
        in_specs += [pl.BlockSpec((1, tk), lambda i, j, k: (0, 0)),
                     pl.BlockSpec((1, tk), lambda i, j, k: (0, 0))]
        inputs += [gamma.reshape(1, K), beta.reshape(1, K)]
    if add is not None:
        assert add.shape[0] % tm == 0 and add.shape[1] == N
        add_blocks = add.shape[0] // tm
        if add.shape[0] == M:
            add_map = lambda i, j, k: (i, j)
        else:
            # e.g. (S_pad, D) position embeddings: wrap over the batch
            add_map = lambda i, j, k: (i % add_blocks, j)
        in_specs.append(pl.BlockSpec((tm, tn), add_map))
        inputs.append(add)

    scratch = [pltpu.VMEM((tm, tn), jnp.float32)] if use_acc else []

    footprint = (2 * tm * tk * x2d.dtype.itemsize
                 + 2 * tk * tn * w.dtype.itemsize
                 + 2 * tm * tn * out_dtype.itemsize
                 + (2 * tm * tn * 2 if add is not None else 0)
                 + (tm * tn * 4 if use_acc else 0))

    flops = 2 * int(M) * int(N) * int(K)
    bytes_accessed = (int(M) * int(K) * x2d.dtype.itemsize
                      + int(K) * int(N) * w.dtype.itemsize
                      + int(M) * int(N) * out_dtype.itemsize)
    transcendentals = int(M) * int(N) if activation == "gelu_tanh" else 0

    return pl.pallas_call(
        functools.partial(_linear_kernel, activation=activation,
                          has_add=add is not None, has_ln=ln is not None,
                          use_acc=use_acc, eps=eps),
        out_shape=jax.ShapeDtypeStruct((M, N), out_dtype),
        grid=(gm, gn, gk),
        in_specs=in_specs,
        out_specs=pl.BlockSpec((tm, tn), lambda i, j, k: (i, j)),
        scratch_shapes=scratch,
        compiler_params=pltpu.CompilerParams(
            dimension_semantics=("parallel", "parallel", "arbitrary"),
            vmem_limit_bytes=_cap_vmem(footprint)),
        cost_estimate=pl.CostEstimate(flops=flops,
                                      transcendentals=transcendentals,
                                      bytes_accessed=bytes_accessed),
    )(*inputs)


def pallas_layernorm(x2d, gamma, beta, eps, *, out_dtype=None, tm=512):
    M, D = x2d.shape
    out_dtype = out_dtype if out_dtype is not None else x2d.dtype
    tm = _pick_tile(M, tm, 8)
    return pl.pallas_call(
        functools.partial(_layernorm_kernel, eps=eps),
        out_shape=jax.ShapeDtypeStruct((M, D), out_dtype),
        grid=(M // tm,),
        in_specs=[pl.BlockSpec((tm, D), lambda i: (i, 0)),
                  pl.BlockSpec((1, D), lambda i: (0, 0)),
                  pl.BlockSpec((1, D), lambda i: (0, 0))],
        out_specs=pl.BlockSpec((tm, D), lambda i: (i, 0)),
        compiler_params=pltpu.CompilerParams(
            dimension_semantics=("parallel",)),
    )(x2d, gamma.reshape(1, D), beta.reshape(1, D))


def _head_group(num_heads, head_dim):
    """Smallest group of heads whose fused column width is a 128 multiple."""
    for g in range(1, num_heads + 1):
        if num_heads % g == 0 and (g * head_dim) % 128 == 0:
            return g
    return None


def pallas_attention(qkv, num_heads, s_real, *, out_dtype=None):
    # qkv: (B, S_pad, 3*D), columns laid out [q | k | v], heads contiguous.
    B, S_pad, threeD = qkv.shape
    D = threeD // 3
    head_dim = D // num_heads
    scale = head_dim ** (-0.5)
    out_dtype = out_dtype if out_dtype is not None else qkv.dtype
    out_shape = jax.ShapeDtypeStruct((B, S_pad, D), out_dtype)

    g = _head_group(num_heads, head_dim)
    if g is not None:
        gd = g * head_dim
        G = D // gd
        footprint = 8 * S_pad * gd * qkv.dtype.itemsize + 4 * S_pad * S_pad * 4
        # Same qkv array passed three times: each spec DMAs exactly the q / k /
        # v column block of the current head group (lane-dense, 128-aligned).
        return pl.pallas_call(
            functools.partial(_attention_kernel, heads=g, head_dim=head_dim,
                              scale=scale, s_real=s_real, fused_slab=False),
            out_shape=out_shape,
            grid=(B, G),
            in_specs=[
                pl.BlockSpec((1, S_pad, gd), lambda b, hg: (b, 0, hg)),
                pl.BlockSpec((1, S_pad, gd), lambda b, hg: (b, 0, G + hg)),
                pl.BlockSpec((1, S_pad, gd), lambda b, hg: (b, 0, 2 * G + hg)),
            ],
            out_specs=pl.BlockSpec((1, S_pad, gd), lambda b, hg: (b, 0, hg)),
            compiler_params=pltpu.CompilerParams(
                dimension_semantics=("parallel", "parallel"),
                vmem_limit_bytes=_cap_vmem(footprint)),
        )(qkv, qkv, qkv)

    # Fallback: head_dim cannot compose a 128-aligned group (tiny configs).
    footprint = 4 * S_pad * threeD * qkv.dtype.itemsize + 4 * S_pad * S_pad * 4
    return pl.pallas_call(
        functools.partial(_attention_kernel, heads=num_heads,
                          head_dim=head_dim, scale=scale, s_real=s_real,
                          fused_slab=True),
        out_shape=out_shape,
        grid=(B,),
        in_specs=[pl.BlockSpec((1, S_pad, threeD), lambda b: (b, 0, 0))],
        out_specs=pl.BlockSpec((1, S_pad, D), lambda b: (b, 0, 0)),
        compiler_params=pltpu.CompilerParams(
            dimension_semantics=("parallel",),
            vmem_limit_bytes=_cap_vmem(footprint)),
    )(qkv)


# ----------------------------- model forward -----------------------------

def siglip_vision_forward(params, pixel_values, cfg):
    B, C, Himg, Wimg = pixel_values.shape
    p = cfg["patch_size"]
    D = cfg["hidden_size"]
    H = cfg["num_attention_heads"]
    eps = cfg["layer_norm_eps"]
    cdt = jnp.bfloat16  # MXU/activation dtype; accumulations & VPU math in f32

    gh, gw = Himg // p, Wimg // p
    S = gh * gw
    S_pad = _round_up(S, 8)
    tm_rows = _pick_tile(S_pad, 512, 8)  # row tile; divides S_pad and B*S_pad

    # ---- SiglipVisionEmbeddings: conv(stride=patch) == patch-matmul ----
    x = pixel_values.reshape(B, C, gh, p, gw, p)
    x = x.transpose(0, 2, 4, 1, 3, 5)                     # (B, gh, gw, C, p, p)
    patches = x.reshape(B, S, C * p * p).astype(cdt)      # flatten order (C,kh,kw)
    Kpad = params["patch_w"].shape[0]                     # K zero-padded to 128x
    patches = jnp.pad(patches, ((0, 0), (0, S_pad - S), (0, Kpad - C * p * p)))
    patches = patches.reshape(B * S_pad, Kpad)

    # Position embedding: (S_pad, D), added via a batch-wrapping index_map.
    pos = jnp.pad(params["pos_emb"], ((0, S_pad - S), (0, 0)))

    h = pallas_linear(patches, params["patch_w"], params["patch_b"],
                      add=pos, tm=tm_rows)
    # h: (B*S_pad, D) bf16; the residual stream stays in this lane-dense layout.

    # ---- SiglipEncoder ----
    for lp in params["layers"]:
        resid = h
        # LayerNorm1 fused into the QKV projection prologue.
        qkv = pallas_linear(h, lp["qkv_w"], lp["qkv_b"],
                            ln=(lp["ln1_g"], lp["ln1_b"]), eps=eps, tm=tm_rows)
        attn = pallas_attention(qkv.reshape(B, S_pad, 3 * D), H, S)
        h = pallas_linear(attn.reshape(B * S_pad, D), lp["o_w"], lp["o_b"],
                          add=resid, tm=tm_rows)

        resid = h
        # LayerNorm2 fused into fc1's prologue; tanh-GELU fused into its epilogue.
        m1 = pallas_linear(h, lp["fc1_w"], lp["fc1_b"],
                           ln=(lp["ln2_g"], lp["ln2_b"]), eps=eps,
                           activation="gelu_tanh", tm=tm_rows)
        h = pallas_linear(m1, lp["fc2_w"], lp["fc2_b"], add=resid, tm=tm_rows)

    # ---- post_layernorm (final result in f32), drop padded rows ----
    out = pallas_layernorm(h, params["post_g"], params["post_b"], eps,
                           out_dtype=jnp.float32, tm=tm_rows)
    return out.reshape(B, S_pad, D)[:, :S, :]


# ----------------------------- pure-JAX reference -----------------------------

def siglip_vision_reference(params, pixel_values, cfg):
    """Pure-JAX mirror of the kernel computation (same bf16 cast points)."""
    B, C, Himg, Wimg = pixel_values.shape
    p = cfg["patch_size"]
    D = cfg["hidden_size"]
    H = cfg["num_attention_heads"]
    dh = D // H
    eps = cfg["layer_norm_eps"]
    cdt, f32 = jnp.bfloat16, jnp.float32

    gh, gw = Himg // p, Wimg // p
    S = gh * gw
    x = pixel_values.reshape(B, C, gh, p, gw, p).transpose(0, 2, 4, 1, 3, 5)
    patches = x.reshape(B * S, C * p * p).astype(cdt)
    Kpad = params["patch_w"].shape[0]
    patches = jnp.pad(patches, ((0, 0), (0, Kpad - C * p * p)))

    def linear(xv, w, b, ln=None, act=None, add=None):
        if ln is not None:
            g, bb = ln
            xf = xv.astype(f32)
            mu = jnp.mean(xf, -1, keepdims=True)
            var = jnp.mean(jnp.square(xf - mu), -1, keepdims=True)
            xf = (xf - mu) * jax.lax.rsqrt(var + eps)
            xf = xf * g.astype(f32) + bb.astype(f32)
            xv = xf.astype(cdt)
        y = jnp.dot(xv, w, preferred_element_type=f32) + b.astype(f32)
        if act == "gelu_tanh":
            c = 0.7978845608028654
            y = 0.5 * y * (1.0 + jnp.tanh(c * (y + 0.044715 * y * y * y)))
        if add is not None:
            y = y + add.astype(f32)
        return y.astype(cdt)

    pos = jnp.tile(params["pos_emb"], (B, 1))
    h = linear(patches, params["patch_w"], params["patch_b"], add=pos)

    def attention(qkv):
        qkv = qkv.reshape(B, S, 3, H, dh)
        q = qkv[:, :, 0].transpose(0, 2, 1, 3)
        k = qkv[:, :, 1].transpose(0, 2, 1, 3)
        v = qkv[:, :, 2].transpose(0, 2, 1, 3)
        s = jnp.einsum("bhqd,bhkd->bhqk", q, k,
                       preferred_element_type=f32) * (dh ** -0.5)
        pr = jax.nn.softmax(s, axis=-1)
        o = jnp.einsum("bhqk,bhkd->bhqd", pr.astype(cdt), v,
                       preferred_element_type=f32).astype(cdt)
        return o.transpose(0, 2, 1, 3).reshape(B * S, D)

    for lp in params["layers"]:
        resid = h
        qkv = linear(h, lp["qkv_w"], lp["qkv_b"], ln=(lp["ln1_g"], lp["ln1_b"]))
        h = linear(attention(qkv), lp["o_w"], lp["o_b"], add=resid)
        resid = h
        m1 = linear(h, lp["fc1_w"], lp["fc1_b"], ln=(lp["ln2_g"], lp["ln2_b"]),
                    act="gelu_tanh")
        h = linear(m1, lp["fc2_w"], lp["fc2_b"], add=resid)

    xf = h.astype(f32)
    mu = jnp.mean(xf, -1, keepdims=True)
    var = jnp.mean(jnp.square(xf - mu), -1, keepdims=True)
    y = (xf - mu) * jax.lax.rsqrt(var + eps)
    y = y * params["post_g"].astype(f32) + params["post_b"].astype(f32)
    return y.reshape(B, S, D)


# ----------------------------- parameter init -----------------------------

def init_params(key, cfg, dtype=jnp.bfloat16):
    D = cfg["hidden_size"]
    I = cfg["intermediate_size"]
    C = cfg["num_channels"]
    p = cfg["patch_size"]
    S = (cfg["image_size"] // p) ** 2
    L = cfg["num_hidden_layers"]
    std = 0.02
    K = C * p * p
    Kpad = _round_up(K, 128)
    Ipad = _round_up(I, 128)

    state = [key]

    def nk():
        state[0], sub = jax.random.split(state[0])
        return sub

    def nrm(shape):
        return (std * jax.random.normal(nk(), shape, jnp.float32)).astype(dtype)

    def ones_ish(shape):
        return (1.0 + std * jax.random.normal(nk(), shape, jnp.float32)).astype(dtype)

    params = {
        # conv weight (out=D, in=C, kh=p, kw=p) stored flattened (C*p*p, D),
        # zero-padded along K to a 128 multiple.
        "patch_w": jnp.pad(nrm((K, D)), ((0, Kpad - K), (0, 0))),
        "patch_b": nrm((D,)),
        "pos_emb": nrm((S, D)),
        "post_g": ones_ish((D,)),
        "post_b": nrm((D,)),
        "layers": [],
    }
    for _ in range(L):
        lp = {
            "ln1_g": ones_ish((D,)), "ln1_b": nrm((D,)),
            "ln2_g": ones_ish((D,)), "ln2_b": nrm((D,)),
            # fused QKV weight, column layout [q | k | v], heads contiguous
            "qkv_w": jnp.concatenate([nrm((D, D)) for _ in range(3)], axis=1),
            "qkv_b": nrm((3 * D,)),
            "o_w": nrm((D, D)), "o_b": nrm((D,)),
            # MLP intermediate zero-padded to a 128 multiple (exact: padded
            # fc1 columns and fc2 rows are zero, so they contribute nothing).
            "fc1_w": jnp.pad(nrm((D, I)), ((0, 0), (0, Ipad - I))),
            "fc1_b": jnp.pad(nrm((I,)), ((0, Ipad - I),)),
            "fc2_w": jnp.pad(nrm((I, D)), ((0, Ipad - I), (0, 0))),
            "fc2_b": nrm((D,)),
        }
        params["layers"].append(lp)
    return params


# ----------------------------- main -----------------------------

if __name__ == "__main__":
    cfg = dict(
        hidden_size=128,          # head_dim = 64 -> exercises the 128-aligned
        intermediate_size=576,    #   head-pair attention path; 576 -> padded 640
        num_hidden_layers=2,      #   (also exercises the K-accumulator path)
        num_attention_heads=2,
        num_channels=3,
        image_size=20,            # 25 patches -> padded to 32, keys masked
        patch_size=4,
        layer_norm_eps=1e-6,
    )

    key = jax.random.PRNGKey(0)
    kp, kx = jax.random.split(key)
    params = init_params(kp, cfg)

    # pixel_values in NCHW, as in the PyTorch module
    pixel_values = jax.random.normal(
        kx, (2, cfg["num_channels"], cfg["image_size"], cfg["image_size"]),
        dtype=jnp.float32)

    fwd = jax.jit(functools.partial(siglip_vision_forward, cfg=cfg))
    out = jax.block_until_ready(fwd(params, pixel_values))

    S = (cfg["image_size"] // cfg["patch_size"]) ** 2
    assert out.shape == (2, S, cfg["hidden_size"]), out.shape
    assert out.dtype == jnp.float32
    assert bool(jnp.all(jnp.isfinite(out)))

    # Pure-JAX reference with the same dtype strategy (validates padding,
    # key masking, fused-weight layouts, LN fusion and the pos-emb wrap).
    ref = jax.jit(functools.partial(siglip_vision_reference, cfg=cfg))(
        params, pixel_values)
    max_err = float(jnp.max(jnp.abs(out - ref)))
    assert max_err < 0.1, f"max abs error vs reference: {max_err}"

    print("KERNEL_OK")
</pallas_src>

<mosaic_0001>
module attributes {stable_mosaic.version = 11 : i64} {
  func.func @_linear_kernel(%arg0: i32, %arg1: i32, %arg2: i32, %arg3: memref<32x128xbf16, #tpu.memory_space<vmem>>, %arg4: memref<128x128xbf16, #tpu.memory_space<vmem>>, %arg5: memref<1x128xbf16, #tpu.memory_space<vmem>>, %arg6: memref<32x128xbf16, #tpu.memory_space<vmem>>, %arg7: memref<32x128xbf16, #tpu.memory_space<vmem>>) attributes {dimension_semantics = [#tpu.dimension_semantics<parallel>, #tpu.dimension_semantics<parallel>, #tpu.dimension_semantics<arbitrary>], iteration_bounds = array<i64: 2, 1, 1>, scalar_prefetch = 0 : i64, scratch_operands = 0 : i64, tpu.core_type = #tpu.core_type<tc>, window_params = [{transform_indices = @transform_0, window_bounds = array<i64: 32, 128>}, {transform_indices = @transform_1, window_bounds = array<i64: 128, 128>}, {transform_indices = @transform_2, window_bounds = array<i64: 1, 128>}, {transform_indices = @transform_3, window_bounds = array<i64: 32, 128>}, {transform_indices = @transform_4, window_bounds = array<i64: 32, 128>}]} {
    %c0 = arith.constant 0 : index
    %c0_0 = arith.constant 0 : index
    %0 = vector.load %arg3[%c0, %c0_0] : memref<32x128xbf16, #tpu.memory_space<vmem>>, vector<32x128xbf16>
    %c0_1 = arith.constant 0 : index
    %c0_2 = arith.constant 0 : index
    %1 = vector.load %arg4[%c0_1, %c0_2] : memref<128x128xbf16, #tpu.memory_space<vmem>>, vector<128x128xbf16>
    %cst = arith.constant dense<0.000000e+00> : vector<32x128xf32>
    %2 = tpu.matmul %0, %1, %cst {dimension_numbers = #tpu.dot_dimension_numbers<[1], [0], [0], [1], [0, 0, 1, 1], [], []>} : vector<32x128xbf16>, vector<128x128xbf16>, vector<32x128xf32> -> vector<32x128xf32>
    %c0_3 = arith.constant 0 : index
    %c0_4 = arith.constant 0 : index
    %3 = vector.load %arg5[%c0_3, %c0_4] : memref<1x128xbf16, #tpu.memory_space<vmem>>, vector<1x128xbf16>
    %4 = arith.extf %3 : vector<1x128xbf16> to vector<1x128xf32>
    %5 = vector.broadcast %4 : vector<1x128xf32> to vector<32x128xf32>
    %6 = arith.addf %2, %5 : vector<32x128xf32>
    %c0_5 = arith.constant 0 : index
    %c0_6 = arith.constant 0 : index
    %7 = vector.load %arg6[%c0_5, %c0_6] : memref<32x128xbf16, #tpu.memory_space<vmem>>, vector<32x128xbf16>
    %8 = arith.extf %7 : vector<32x128xbf16> to vector<32x128xf32>
    %9 = arith.addf %6, %8 : vector<32x128xf32>
    %10 = arith.truncf %9 : vector<32x128xf32> to vector<32x128xbf16>
    %c0_7 = arith.constant 0 : index
    %c0_8 = arith.constant 0 : index
    %11 = vector.load %arg7[%c0_7, %c0_8] : memref<32x128xbf16, #tpu.memory_space<vmem>>, vector<32x128xbf16>
    tpu.vector_store %arg7[%c0_7, %c0_8], %10 {strides = array<i32>} : memref<32x128xbf16, #tpu.memory_space<vmem>>, vector<32x128xbf16>,
    return
  }
  func.func @transform_0(%arg0: i32, %arg1: i32, %arg2: i32) -> (i32, i32) {
    %c0_i32 = arith.constant 0 : i32
    return %arg0, %arg2 : i32, i32
  }
  func.func @transform_1(%arg0: i32, %arg1: i32, %arg2: i32) -> (i32, i32) {
    %c0_i32 = arith.constant 0 : i32
    return %arg2, %arg1 : i32, i32
  }
  func.func @transform_2(%arg0: i32, %arg1: i32, %arg2: i32) -> (i32, i32) {
    %c0_i32 = arith.constant 0 : i32
    %c0_i32_0 = arith.constant 0 : i32
    return %c0_i32, %arg1 : i32, i32
  }
  func.func @transform_3(%arg0: i32, %arg1: i32, %arg2: i32) -> (i32, i32) {
    %c1_i32 = arith.constant 1 : i32
    %c0_i32 = arith.constant 0 : i32
    %0 = arith.cmpi eq, %c1_i32, %c0_i32 : i32
    %c1_i32_0 = arith.constant 1 : i32
    %1 = arith.select %0, %c1_i32_0, %c1_i32 : i32
    %2 = arith.remsi %arg0, %1 : i32
    %c0_i32_1 = arith.constant 0 : i32
    %3 = arith.cmpi ne, %2, %c0_i32_1 : i32
    %c0_i32_2 = arith.constant 0 : i32
    %4 = arith.cmpi slt, %2, %c0_i32_2 : i32
    %c0_i32_3 = arith.constant 0 : i32
    %5 = arith.cmpi slt, %1, %c0_i32_3 : i32
    %6 = arith.xori %4, %5 : i1
    %7 = arith.andi %6, %3 : i1
    %8 = arith.addi %2, %1 : i32
    %9 = arith.select %7, %8, %2 : i32
    %c0_i32_4 = arith.constant 0 : i32
    return %9, %arg1 : i32, i32
  }
  func.func @transform_4(%arg0: i32, %arg1: i32, %arg2: i32) -> (i32, i32) {
    %c0_i32 = arith.constant 0 : i32
    return %arg0, %arg1 : i32, i32
  }
}

module attributes {stable_mosaic.version = 11 : i64} {
  func.func @_linear_kernel(%arg0: i32, %arg1: i32, %arg2: i32, %arg3: memref<32x128xbf16, #tpu.memory_space<vmem>>, %arg4: memref<128x384xbf16, #tpu.memory_space<vmem>>, %arg5: memref<1x384xbf16, #tpu.memory_space<vmem>>, %arg6: memref<1x128xbf16, #tpu.memory_space<vmem>>, %arg7: memref<1x128xbf16, #tpu.memory_space<vmem>>, %arg8: memref<32x384xbf16, #tpu.memory_space<vmem>>) attributes {dimension_semantics = [#tpu.dimension_semantics<parallel>, #tpu.dimension_semantics<parallel>, #tpu.dimension_semantics<arbitrary>], iteration_bounds = array<i64: 2, 1, 1>, scalar_prefetch = 0 : i64, scratch_operands = 0 : i64, tpu.core_type = #tpu.core_type<tc>, window_params = [{transform_indices = @transform_0, window_bounds = array<i64: 32, 128>}, {transform_indices = @transform_1, window_bounds = array<i64: 128, 384>}, {transform_indices = @transform_2, window_bounds = array<i64: 1, 384>}, {pipeline_mode = #tpu.pipeline_mode<synchronous>, transform_indices = @transform_3, window_bounds = array<i64: 1, 128>}, {pipeline_mode = #tpu.pipeline_mode<synchronous>, transform_indices = @transform_4, window_bounds = array<i64: 1, 128>}, {transform_indices = @transform_5, window_bounds = array<i64: 32, 384>}]} {
    %c0 = arith.constant 0 : index
    %c0_0 = arith.constant 0 : index
    %0 = vector.load %arg3[%c0, %c0_0] : memref<32x128xbf16, #tpu.memory_space<vmem>>, vector<32x128xbf16>
    %1 = arith.extf %0 : vector<32x128xbf16> to vector<32x128xf32>
    %cst = arith.constant dense<0.000000e+00> : vector<32xf32>
    %2 = vector.multi_reduction <add>, %1, %cst [1] : vector<32x128xf32> to vector<32xf32>
    %3 = vector.shape_cast %2 : vector<32xf32> to vector<32x1xf32>
    %cst_1 = arith.constant 1.280000e+02 : f32
    %4 = vector.broadcast %cst_1 : f32 to vector<32x1xf32>
    %5 = arith.divf %3, %4 : vector<32x1xf32>
    %6 = vector.broadcast %5 : vector<32x1xf32> to vector<32x128xf32>
    %7 = arith.subf %1, %6 : vector<32x128xf32>
    %8 = arith.mulf %7, %7 : vector<32x128xf32>
    %cst_2 = arith.constant dense<0.000000e+00> : vector<32xf32>
    %9 = vector.multi_reduction <add>, %8, %cst_2 [1] : vector<32x128xf32> to vector<32xf32>
    %10 = vector.shape_cast %9 : vector<32xf32> to vector<32x1xf32>
    %cst_3 = arith.constant 1.280000e+02 : f32
    %11 = vector.broadcast %cst_3 : f32 to vector<32x1xf32>
    %12 = arith.divf %10, %11 : vector<32x1xf32>
    %13 = vector.broadcast %5 : vector<32x1xf32> to vector<32x128xf32>
    %14 = arith.subf %1, %13 : vector<32x128xf32>
    %cst_4 = arith.constant 9.99999997E-7 : f32
    %15 = vector.broadcast %cst_4 : f32 to vector<32x1xf32>
    %16 = arith.addf %12, %15 : vector<32x1xf32>
    %17 = math.rsqrt %16 : vector<32x1xf32>
    %18 = vector.broadcast %17 : vector<32x1xf32> to vector<32x128xf32>
    %19 = arith.mulf %14, %18 : vector<32x128xf32>
    %c0_5 = arith.constant 0 : index
    %c0_6 = arith.constant 0 : index
    %20 = vector.load %arg6[%c0_5, %c0_6] : memref<1x128xbf16, #tpu.memory_space<vmem>>, vector<1x128xbf16>
    %21 = arith.extf %20 : vector<1x128xbf16> to vector<1x128xf32>
    %22 = vector.broadcast %21 : vector<1x128xf32> to vector<32x128xf32>
    %23 = arith.mulf %19, %22 : vector<32x128xf32>
    %c0_7 = arith.constant 0 : index
    %c0_8 = arith.constant 0 : index
    %24 = vector.load %arg7[%c0_7, %c0_8] : memref<1x128xbf16, #tpu.memory_space<vmem>>, vector<1x128xbf16>
    %25 = arith.extf %24 : vector<1x128xbf16> to vector<1x128xf32>
    %26 = vector.broadcast %25 : vector<1x128xf32> to vector<32x128xf32>
    %27 = arith.addf %23, %26 : vector<32x128xf32>
    %28 = arith.truncf %27 : vector<32x128xf32> to vector<32x128xbf16>
    %c0_9 = arith.constant 0 : index
    %c0_10 = arith.constant 0 : index
    %29 = vector.load %arg4[%c0_9, %c0_10] : memref<128x384xbf16, #tpu.memory_space<vmem>>, vector<128x384xbf16>
    %cst_11 = arith.constant dense<0.000000e+00> : vector<32x384xf32>
    %30 = tpu.matmul %28, %29, %cst_11 {dimension_numbers = #tpu.dot_dimension_numbers<[1], [0], [0], [1], [0, 0, 1, 1], [], []>} : vector<32x128xbf16>, vector<128x384xbf16>, vector<32x384xf32> -> vector<32x384xf32>
    %c0_12 = arith.constant 0 : index
    %c0_13 = arith.constant 0 : index
    %31 = vector.load %arg5[%c0_12, %c0_13] : memref<1x384xbf16, #tpu.memory_space<vmem>>, vector<1x384xbf16>
    %32 = arith.extf %31 : vector<1x384xbf16> to vector<1x384xf32>
    %33 = vector.broadcast %32 : vector<1x384xf32> to vector<32x384xf32>
    %34 = arith.addf %30, %33 : vector<32x384xf32>
    %35 = arith.truncf %34 : vector<32x384xf32> to vector<32x384xbf16>
    %c0_14 = arith.constant 0 : index
    %c0_15 = arith.constant 0 : index
    %36 = vector.load %arg8[%c0_14, %c0_15] : memref<32x384xbf16, #tpu.memory_space<vmem>>, vector<32x384xbf16>
    tpu.vector_store %arg8[%c0_14, %c0_15], %35 {strides = array<i32>} : memref<32x384xbf16, #tpu.memory_space<vmem>>, vector<32x384xbf16>,
    return
  }
  func.func @transform_0(%arg0: i32, %arg1: i32, %arg2: i32) -> (i32, i32) {
    %c0_i32 = arith.constant 0 : i32
    return %arg0, %arg2 : i32, i32
  }
  func.func @transform_1(%arg0: i32, %arg1: i32, %arg2: i32) -> (i32, i32) {
    %c0_i32 = arith.constant 0 : i32
    return %arg2, %arg1 : i32, i32
  }
  func.func @transform_2(%arg0: i32, %arg1: i32, %arg2: i32) -> (i32, i32) {
    %c0_i32 = arith.constant 0 : i32
    %c0_i32_0 = arith.constant 0 : i32
    return %c0_i32, %arg1 : i32, i32
  }
  func.func @transform_3(%arg0: i32, %arg1: i32, %arg2: i32) -> (i32, i32) {
    %c0_i32 = arith.constant 0 : i32
    %c0_i32_0 = arith.constant 0 : i32
    %c0_i32_1 = arith.constant 0 : i32
    return %c0_i32, %c0_i32_0 : i32, i32
  }
  func.func @transform_4(%arg0: i32, %arg1: i32, %arg2: i32) -> (i32, i32) {
    %c0_i32 = arith.constant 0 : i32
    %c0_i32_0 = arith.constant 0 : i32
    %c0_i32_1 = arith.constant 0 : i32
    return %c0_i32, %c0_i32_0 : i32, i32
  }
  func.func @transform_5(%arg0: i32, %arg1: i32, %arg2: i32) -> (i32, i32) {
    %c0_i32 = arith.constant 0 : i32
    return %arg0, %arg1 : i32, i32
  }
}

module attributes {stable_mosaic.version = 11 : i64} {
  func.func @_attention_kernel(%arg0: i32, %arg1: i32, %arg2: memref<1x32x128xbf16, #tpu.memory_space<vmem>>, %arg3: memref<1x32x128xbf16, #tpu.memory_space<vmem>>, %arg4: memref<1x32x128xbf16, #tpu.memory_space<vmem>>, %arg5: memref<1x32x128xbf16, #tpu.memory_space<vmem>>) attributes {dimension_semantics = [#tpu.dimension_semantics<parallel>, #tpu.dimension_semantics<parallel>], iteration_bounds = array<i64: 2, 1>, scalar_prefetch = 0 : i64, scratch_operands = 0 : i64, tpu.core_type = #tpu.core_type<tc>, window_params = [{transform_indices = @transform_0, window_bounds = array<i64: 1, 32, 128>}, {transform_indices = @transform_1, window_bounds = array<i64: 1, 32, 128>}, {transform_indices = @transform_2, window_bounds = array<i64: 1, 32, 128>}, {transform_indices = @transform_3, window_bounds = array<i64: 1, 32, 128>}]} {
    %c0 = arith.constant 0 : index
    %c0_0 = arith.constant 0 : index
    %c0_1 = arith.constant 0 : index
    %0 = vector.load %arg2[%c0, %c0_0, %c0_1] : memref<1x32x128xbf16, #tpu.memory_space<vmem>>, vector<1x32x64xbf16>
    %1 = vector.shape_cast %0 : vector<1x32x64xbf16> to vector<32x64xbf16>
    %c0_2 = arith.constant 0 : index
    %c0_3 = arith.constant 0 : index
    %c0_4 = arith.constant 0 : index
    %2 = vector.load %arg3[%c0_2, %c0_3, %c0_4] : memref<1x32x128xbf16, #tpu.memory_space<vmem>>, vector<1x32x64xbf16>
    %3 = vector.shape_cast %2 : vector<1x32x64xbf16> to vector<32x64xbf16>
    %c0_5 = arith.constant 0 : index
    %c0_6 = arith.constant 0 : index
    %c0_7 = arith.constant 0 : index
    %4 = vector.load %arg4[%c0_5, %c0_6, %c0_7] : memref<1x32x128xbf16, #tpu.memory_space<vmem>>, vector<1x32x64xbf16>
    %5 = vector.shape_cast %4 : vector<1x32x64xbf16> to vector<32x64xbf16>
    %cst = arith.constant dense<0.000000e+00> : vector<32x32xf32>
    %6 = tpu.matmul %1, %3, %cst {dimension_numbers = #tpu.dot_dimension_numbers<[1], [1], [0], [0], [0, 0, 1, 0], [], []>} : vector<32x64xbf16>, vector<32x64xbf16>, vector<32x32xf32> -> vector<32x32xf32>
    %cst_8 = arith.constant 1.250000e-01 : f32
    %7 = vector.broadcast %cst_8 : f32 to vector<32x32xf32>
    %8 = arith.mulf %6, %7 : vector<32x32xf32>
    %9 = tpu.iota {dimensions = array<i32: 1>} : vector<32x32xi32>
    %c25_i32 = arith.constant 25 : i32
    %10 = vector.broadcast %c25_i32 : i32 to vector<32x32xi32>
    %11 = arith.cmpi slt, %9, %10 : vector<32x32xi32>
    %cst_9 = arith.constant -1.000000e+30 : f32
    %12 = vector.broadcast %cst_9 : f32 to vector<32x32xf32>
    %13 = arith.select %11, %8, %12 : vector<32x32xi1>, vector<32x32xf32>
    %cst_10 = arith.constant dense<0xFF800000> : vector<32xf32>
    %14 = vector.multi_reduction <maximumf>, %13, %cst_10 [1] : vector<32x32xf32> to vector<32xf32>
    %15 = vector.shape_cast %14 : vector<32xf32> to vector<32x1xf32>
    %16 = vector.broadcast %15 : vector<32x1xf32> to vector<32x32xf32>
    %17 = arith.subf %13, %16 : vector<32x32xf32>
    %18 = math.exp %17 : vector<32x32xf32>
    %cst_11 = arith.constant dense<0.000000e+00> : vector<32xf32>
    %19 = vector.multi_reduction <add>, %18, %cst_11 [1] : vector<32x32xf32> to vector<32xf32>
    %20 = vector.shape_cast %19 : vector<32xf32> to vector<32x1xf32>
    %21 = tpu.reciprocal %20 {approx = true} : vector<32x1xf32> -> vector<32x1xf32>
    %22 = vector.broadcast %21 : vector<32x1xf32> to vector<32x32xf32>
    %23 = arith.mulf %18, %22 : vector<32x32xf32>
    %24 = arith.truncf %23 : vector<32x32xf32> to vector<32x32xbf16>
    %cst_12 = arith.constant dense<0.000000e+00> : vector<32x64xf32>
    %25 = tpu.matmul %24, %5, %cst_12 {dimension_numbers = #tpu.dot_dimension_numbers<[1], [0], [0], [1], [0, 0, 1, 1], [], []>} : vector<32x32xbf16>, vector<32x64xbf16>, vector<32x64xf32> -> vector<32x64xf32>
    %26 = arith.truncf %25 : vector<32x64xf32> to vector<32x64xbf16>
    %c0_13 = arith.constant 0 : index
    %c0_14 = arith.constant 0 : index
    %c0_15 = arith.constant 0 : index
    %27 = vector.load %arg5[%c0_13, %c0_14, %c0_15] : memref<1x32x128xbf16, #tpu.memory_space<vmem>>, vector<1x32x64xbf16>
    %28 = vector.shape_cast %27 : vector<1x32x64xbf16> to vector<32x64xbf16>
    %29 = vector.shape_cast %26 : vector<32x64xbf16> to vector<1x32x64xbf16>
    tpu.vector_store %arg5[%c0_13, %c0_14, %c0_15], %29 {strides = array<i32>} : memref<1x32x128xbf16, #tpu.memory_space<vmem>>, vector<1x32x64xbf16>,
    %c0_16 = arith.constant 0 : index
    %c0_17 = arith.constant 0 : index
    %c64 = arith.constant 64 : index
    %30 = vector.load %arg2[%c0_16, %c0_17, %c64] : memref<1x32x128xbf16, #tpu.memory_space<vmem>>, vector<1x32x64xbf16>
    %31 = vector.shape_cast %30 : vector<1x32x64xbf16> to vector<32x64xbf16>
    %c0_18 = arith.constant 0 : index
    %c0_19 = arith.constant 0 : index
    %c64_20 = arith.constant 64 : index
    %32 = vector.load %arg3[%c0_18, %c0_19, %c64_20] : memref<1x32x128xbf16, #tpu.memory_space<vmem>>, vector<1x32x64xbf16>
    %33 = vector.shape_cast %32 : vector<1x32x64xbf16> to vector<32x64xbf16>
    %c0_21 = arith.constant 0 : index
    %c0_22 = arith.constant 0 : index
    %c64_23 = arith.constant 64 : index
    %34 = vector.load %arg4[%c0_21, %c0_22, %c64_23] : memref<1x32x128xbf16, #tpu.memory_space<vmem>>, vector<1x32x64xbf16>
    %35 = vector.shape_cast %34 : vector<1x32x64xbf16> to vector<32x64xbf16>
    %cst_24 = arith.constant dense<0.000000e+00> : vector<32x32xf32>
    %36 = tpu.matmul %31, %33, %cst_24 {dimension_numbers = #tpu.dot_dimension_numbers<[1], [1], [0], [0], [0, 0, 1, 0], [], []>} : vector<32x64xbf16>, vector<32x64xbf16>, vector<32x32xf32> -> vector<32x32xf32>
    %cst_25 = arith.constant 1.250000e-01 : f32
    %37 = vector.broadcast %cst_25 : f32 to vector<32x32xf32>
    %38 = arith.mulf %36, %37 : vector<32x32xf32>
    %39 = tpu.iota {dimensions = array<i32: 1>} : vector<32x32xi32>
    %c25_i32_26 = arith.constant 25 : i32
    %40 = vector.broadcast %c25_i32_26 : i32 to vector<32x32xi32>
    %41 = arith.cmpi slt, %39, %40 : vector<32x32xi32>
    %cst_27 = arith.constant -1.000000e+30 : f32
    %42 = vector.broadcast %cst_27 : f32 to vector<32x32xf32>
    %43 = arith.select %41, %38, %42 : vector<32x32xi1>, vector<32x32xf32>
    %cst_28 = arith.constant dense<0xFF800000> : vector<32xf32>
    %44 = vector.multi_reduction <maximumf>, %43, %cst_28 [1] : vector<32x32xf32> to vector<32xf32>
    %45 = vector.shape_cast %44 : vector<32xf32> to vector<32x1xf32>
    %46 = vector.broadcast %45 : vector<32x1xf32> to vector<32x32xf32>
    %47 = arith.subf %43, %46 : vector<32x32xf32>
    %48 = math.exp %47 : vector<32x32xf32>
    %cst_29 = arith.constant dense<0.000000e+00> : vector<32xf32>
    %49 = vector.multi_reduction <add>, %48, %cst_29 [1] : vector<32x32xf32> to vector<32xf32>
    %50 = vector.shape_cast %49 : vector<32xf32> to vector<32x1xf32>
    %51 = tpu.reciprocal %50 {approx = true} : vector<32x1xf32> -> vector<32x1xf32>
    %52 = vector.broadcast %51 : vector<32x1xf32> to vector<32x32xf32>
    %53 = arith.mulf %48, %52 : vector<32x32xf32>
    %54 = arith.truncf %53 : vector<32x32xf32> to vector<32x32xbf16>
    %cst_30 = arith.constant dense<0.000000e+00> : vector<32x64xf32>
    %55 = tpu.matmul %54, %35, %cst_30 {dimension_numbers = #tpu.dot_dimension_numbers<[1], [0], [0], [1], [0, 0, 1, 1], [], []>} : vector<32x32xbf16>, vector<32x64xbf16>, vector<32x64xf32> -> vector<32x64xf32>
    %56 = arith.truncf %55 : vector<32x64xf32> to vector<32x64xbf16>
    %c0_31 = arith.constant 0 : index
    %c0_32 = arith.constant 0 : index
    %c64_33 = arith.constant 64 : index
    %57 = vector.load %arg5[%c0_31, %c0_32, %c64_33] : memref<1x32x128xbf16, #tpu.memory_space<vmem>>, vector<1x32x64xbf16>
    %58 = vector.shape_cast %57 : vector<1x32x64xbf16> to vector<32x64xbf16>
    %59 = vector.shape_cast %56 : vector<32x64xbf16> to vector<1x32x64xbf16>
    tpu.vector_store %arg5[%c0_31, %c0_32, %c64_33], %59 {strides = array<i32>} : memref<1x32x128xbf16, #tpu.memory_space<vmem>>, vector<1x32x64xbf16>,
    return
  }
  func.func @transform_0(%arg0: i32, %arg1: i32) -> (i32, i32, i32) {
    %c0_i32 = arith.constant 0 : i32
    %c0_i32_0 = arith.constant 0 : i32
    return %arg0, %c0_i32, %arg1 : i32, i32, i32
  }
  func.func @transform_1(%arg0: i32, %arg1: i32) -> (i32, i32, i32) {
    %c1_i32 = arith.constant 1 : i32
    %0 = arith.addi %c1_i32, %arg1 : i32
    %c0_i32 = arith.constant 0 : i32
    %c0_i32_0 = arith.constant 0 : i32
    return %arg0, %c0_i32, %0 : i32, i32, i32
  }
  func.func @transform_2(%arg0: i32, %arg1: i32) -> (i32, i32, i32) {
    %c2_i32 = arith.constant 2 : i32
    %0 = arith.addi %c2_i32, %arg1 : i32
    %c0_i32 = arith.constant 0 : i32
    %c0_i32_0 = arith.constant 0 : i32
    return %arg0, %c0_i32, %0 : i32, i32, i32
  }
  func.func @transform_3(%arg0: i32, %arg1: i32) -> (i32, i32, i32) {
    %c0_i32 = arith.constant 0 : i32
    %c0_i32_0 = arith.constant 0 : i32
    return %arg0, %c0_i32, %arg1 : i32, i32, i32
  }
}

module attributes {stable_mosaic.version = 11 : i64} {
  func.func @_linear_kernel(%arg0: i32, %arg1: i32, %arg2: i32, %arg3: memref<32x128xbf16, #tpu.memory_space<vmem>>, %arg4: memref<128x128xbf16, #tpu.memory_space<vmem>>, %arg5: memref<1x128xbf16, #tpu.memory_space<vmem>>, %arg6: memref<32x128xbf16, #tpu.memory_space<vmem>>, %arg7: memref<32x128xbf16, #tpu.memory_space<vmem>>) attributes {dimension_semantics = [#tpu.dimension_semantics<parallel>, #tpu.dimension_semantics<parallel>, #tpu.dimension_semantics<arbitrary>], iteration_bounds = array<i64: 2, 1, 1>, scalar_prefetch = 0 : i64, scratch_operands = 0 : i64, tpu.core_type = #tpu.core_type<tc>, window_params = [{transform_indices = @transform_0, window_bounds = array<i64: 32, 128>}, {transform_indices = @transform_1, window_bounds = array<i64: 128, 128>}, {transform_indices = @transform_2, window_bounds = array<i64: 1, 128>}, {transform_indices = @transform_3, window_bounds = array<i64: 32, 128>}, {transform_indices = @transform_4, window_bounds = array<i64: 32, 128>}]} {
    %c0 = arith.constant 0 : index
    %c0_0 = arith.constant 0 : index
    %0 = vector.load %arg3[%c0, %c0_0] : memref<32x128xbf16, #tpu.memory_space<vmem>>, vector<32x128xbf16>
    %c0_1 = arith.constant 0 : index
    %c0_2 = arith.constant 0 : index
    %1 = vector.load %arg4[%c0_1, %c0_2] : memref<128x128xbf16, #tpu.memory_space<vmem>>, vector<128x128xbf16>
    %cst = arith.constant dense<0.000000e+00> : vector<32x128xf32>
    %2 = tpu.matmul %0, %1, %cst {dimension_numbers = #tpu.dot_dimension_numbers<[1], [0], [0], [1], [0, 0, 1, 1], [], []>} : vector<32x128xbf16>, vector<128x128xbf16>, vector<32x128xf32> -> vector<32x128xf32>
    %c0_3 = arith.constant 0 : index
    %c0_4 = arith.constant 0 : index
    %3 = vector.load %arg5[%c0_3, %c0_4] : memref<1x128xbf16, #tpu.memory_space<vmem>>, vector<1x128xbf16>
    %4 = arith.extf %3 : vector<1x128xbf16> to vector<1x128xf32>
    %5 = vector.broadcast %4 : vector<1x128xf32> to vector<32x128xf32>
    %6 = arith.addf %2, %5 : vector<32x128xf32>
    %c0_5 = arith.constant 0 : index
    %c0_6 = arith.constant 0 : index
    %7 = vector.load %arg6[%c0_5, %c0_6] : memref<32x128xbf16, #tpu.memory_space<vmem>>, vector<32x128xbf16>
    %8 = arith.extf %7 : vector<32x128xbf16> to vector<32x128xf32>
    %9 = arith.addf %6, %8 : vector<32x128xf32>
    %10 = arith.truncf %9 : vector<32x128xf32> to vector<32x128xbf16>
    %c0_7 = arith.constant 0 : index
    %c0_8 = arith.constant 0 : index
    %11 = vector.load %arg7[%c0_7, %c0_8] : memref<32x128xbf16, #tpu.memory_space<vmem>>, vector<32x128xbf16>
    tpu.vector_store %arg7[%c0_7, %c0_8], %10 {strides = array<i32>} : memref<32x128xbf16, #tpu.memory_space<vmem>>, vector<32x128xbf16>,
    return
  }
  func.func @transform_0(%arg0: i32, %arg1: i32, %arg2: i32) -> (i32, i32) {
    %c0_i32 = arith.constant 0 : i32
    return %arg0, %arg2 : i32, i32
  }
  func.func @transform_1(%arg0: i32, %arg1: i32, %arg2: i32) -> (i32, i32) {
    %c0_i32 = arith.constant 0 : i32
    return %arg2, %arg1 : i32, i32
  }
  func.func @transform_2(%arg0: i32, %arg1: i32, %arg2: i32) -> (i32, i32) {
    %c0_i32 = arith.constant 0 : i32
    %c0_i32_0 = arith.constant 0 : i32
    return %c0_i32, %arg1 : i32, i32
  }
  func.func @transform_3(%arg0: i32, %arg1: i32, %arg2: i32) -> (i32, i32) {
    %c0_i32 = arith.constant 0 : i32
    return %arg0, %arg1 : i32, i32
  }
  func.func @transform_4(%arg0: i32, %arg1: i32, %arg2: i32) -> (i32, i32) {
    %c0_i32 = arith.constant 0 : i32
    return %arg0, %arg1 : i32, i32
  }
}

module attributes {stable_mosaic.version = 11 : i64} {
  func.func @_linear_kernel(%arg0: i32, %arg1: i32, %arg2: i32, %arg3: memref<32x128xbf16, #tpu.memory_space<vmem>>, %arg4: memref<128x128xbf16, #tpu.memory_space<vmem>>, %arg5: memref<1x128xbf16, #tpu.memory_space<vmem>>, %arg6: memref<1x128xbf16, #tpu.memory_space<vmem>>, %arg7: memref<1x128xbf16, #tpu.memory_space<vmem>>, %arg8: memref<32x128xbf16, #tpu.memory_space<vmem>>) attributes {dimension_semantics = [#tpu.dimension_semantics<parallel>, #tpu.dimension_semantics<parallel>, #tpu.dimension_semantics<arbitrary>], iteration_bounds = array<i64: 2, 5, 1>, scalar_prefetch = 0 : i64, scratch_operands = 0 : i64, tpu.core_type = #tpu.core_type<tc>, window_params = [{transform_indices = @transform_0, window_bounds = array<i64: 32, 128>}, {transform_indices = @transform_1, window_bounds = array<i64: 128, 128>}, {transform_indices = @transform_2, window_bounds = array<i64: 1, 128>}, {pipeline_mode = #tpu.pipeline_mode<synchronous>, transform_indices = @transform_3, window_bounds = array<i64: 1, 128>}, {pipeline_mode = #tpu.pipeline_mode<synchronous>, transform_indices = @transform_4, window_bounds = array<i64: 1, 128>}, {transform_indices = @transform_5, window_bounds = array<i64: 32, 128>}]} {
    %c0 = arith.constant 0 : index
    %c0_0 = arith.constant 0 : index
    %0 = vector.load %arg3[%c0, %c0_0] : memref<32x128xbf16, #tpu.memory_space<vmem>>, vector<32x128xbf16>
    %1 = arith.extf %0 : vector<32x128xbf16> to vector<32x128xf32>
    %cst = arith.constant dense<0.000000e+00> : vector<32xf32>
    %2 = vector.multi_reduction <add>, %1, %cst [1] : vector<32x128xf32> to vector<32xf32>
    %3 = vector.shape_cast %2 : vector<32xf32> to vector<32x1xf32>
    %cst_1 = arith.constant 1.280000e+02 : f32
    %4 = vector.broadcast %cst_1 : f32 to vector<32x1xf32>
    %5 = arith.divf %3, %4 : vector<32x1xf32>
    %6 = vector.broadcast %5 : vector<32x1xf32> to vector<32x128xf32>
    %7 = arith.subf %1, %6 : vector<32x128xf32>
    %8 = arith.mulf %7, %7 : vector<32x128xf32>
    %cst_2 = arith.constant dense<0.000000e+00> : vector<32xf32>
    %9 = vector.multi_reduction <add>, %8, %cst_2 [1] : vector<32x128xf32> to vector<32xf32>
    %10 = vector.shape_cast %9 : vector<32xf32> to vector<32x1xf32>
    %cst_3 = arith.constant 1.280000e+02 : f32
    %11 = vector.broadcast %cst_3 : f32 to vector<32x1xf32>
    %12 = arith.divf %10, %11 : vector<32x1xf32>
    %13 = vector.broadcast %5 : vector<32x1xf32> to vector<32x128xf32>
    %14 = arith.subf %1, %13 : vector<32x128xf32>
    %cst_4 = arith.constant 9.99999997E-7 : f32
    %15 = vector.broadcast %cst_4 : f32 to vector<32x1xf32>
    %16 = arith.addf %12, %15 : vector<32x1xf32>
    %17 = math.rsqrt %16 : vector<32x1xf32>
    %18 = vector.broadcast %17 : vector<32x1xf32> to vector<32x128xf32>
    %19 = arith.mulf %14, %18 : vector<32x128xf32>
    %c0_5 = arith.constant 0 : index
    %c0_6 = arith.constant 0 : index
    %20 = vector.load %arg6[%c0_5, %c0_6] : memref<1x128xbf16, #tpu.memory_space<vmem>>, vector<1x128xbf16>
    %21 = arith.extf %20 : vector<1x128xbf16> to vector<1x128xf32>
    %22 = vector.broadcast %21 : vector<1x128xf32> to vector<32x128xf32>
    %23 = arith.mulf %19, %22 : vector<32x128xf32>
    %c0_7 = arith.constant 0 : index
    %c0_8 = arith.constant 0 : index
    %24 = vector.load %arg7[%c0_7, %c0_8] : memref<1x128xbf16, #tpu.memory_space<vmem>>, vector<1x128xbf16>
    %25 = arith.extf %24 : vector<1x128xbf16> to vector<1x128xf32>
    %26 = vector.broadcast %25 : vector<1x128xf32> to vector<32x128xf32>
    %27 = arith.addf %23, %26 : vector<32x128xf32>
    %28 = arith.truncf %27 : vector<32x128xf32> to vector<32x128xbf16>
    %c0_9 = arith.constant 0 : index
    %c0_10 = arith.constant 0 : index
    %29 = vector.load %arg4[%c0_9, %c0_10] : memref<128x128xbf16, #tpu.memory_space<vmem>>, vector<128x128xbf16>
    %cst_11 = arith.constant dense<0.000000e+00> : vector<32x128xf32>
    %30 = tpu.matmul %28, %29, %cst_11 {dimension_numbers = #tpu.dot_dimension_numbers<[1], [0], [0], [1], [0, 0, 1, 1], [], []>} : vector<32x128xbf16>, vector<128x128xbf16>, vector<32x128xf32> -> vector<32x128xf32>
    %c0_12 = arith.constant 0 : index
    %c0_13 = arith.constant 0 : index
    %31 = vector.load %arg5[%c0_12, %c0_13] : memref<1x128xbf16, #tpu.memory_space<vmem>>, vector<1x128xbf16>
    %32 = arith.extf %31 : vector<1x128xbf16> to vector<1x128xf32>
    %33 = vector.broadcast %32 : vector<1x128xf32> to vector<32x128xf32>
    %34 = arith.addf %30, %33 : vector<32x128xf32>
    %cst_14 = arith.constant 5.000000e-01 : f32
    %35 = vector.broadcast %cst_14 : f32 to vector<32x128xf32>
    %36 = arith.mulf %35, %34 : vector<32x128xf32>
    %cst_15 = arith.constant 4.471500e-02 : f32
    %37 = vector.broadcast %cst_15 : f32 to vector<32x128xf32>
    %38 = arith.mulf %37, %34 : vector<32x128xf32>
    %39 = arith.mulf %38, %34 : vector<32x128xf32>
    %40 = arith.mulf %39, %34 : vector<32x128xf32>
    %41 = arith.addf %34, %40 : vector<32x128xf32>
    %cst_16 = arith.constant 0.797884583 : f32
    %42 = vector.broadcast %cst_16 : f32 to vector<32x128xf32>
    %43 = arith.mulf %42, %41 : vector<32x128xf32>
    %44 = math.tanh %43 : vector<32x128xf32>
    %cst_17 = arith.constant 1.000000e+00 : f32
    %45 = vector.broadcast %cst_17 : f32 to vector<32x128xf32>
    %46 = arith.addf %45, %44 : vector<32x128xf32>
    %47 = arith.mulf %36, %46 : vector<32x128xf32>
    %48 = arith.truncf %47 : vector<32x128xf32> to vector<32x128xbf16>
    %c0_18 = arith.constant 0 : index
    %c0_19 = arith.constant 0 : index
    %49 = vector.load %arg8[%c0_18, %c0_19] : memref<32x128xbf16, #tpu.memory_space<vmem>>, vector<32x128xbf16>
    tpu.vector_store %arg8[%c0_18, %c0_19], %48 {strides = array<i32>} : memref<32x128xbf16, #tpu.memory_space<vmem>>, vector<32x128xbf16>,
    return
  }
  func.func @transform_0(%arg0: i32, %arg1: i32, %arg2: i32) -> (i32, i32) {
    %c0_i32 = arith.constant 0 : i32
    return %arg0, %arg2 : i32, i32
  }
  func.func @transform_1(%arg0: i32, %arg1: i32, %arg2: i32) -> (i32, i32) {
    %c0_i32 = arith.constant 0 : i32
    return %arg2, %arg1 : i32, i32
  }
  func.func @transform_2(%arg0: i32, %arg1: i32, %arg2: i32) -> (i32, i32) {
    %c0_i32 = arith.constant 0 : i32
    %c0_i32_0 = arith.constant 0 : i32
    return %c0_i32, %arg1 : i32, i32
  }
  func.func @transform_3(%arg0: i32, %arg1: i32, %arg2: i32) -> (i32, i32) {
    %c0_i32 = arith.constant 0 : i32
    %c0_i32_0 = arith.constant 0 : i32
    %c0_i32_1 = arith.constant 0 : i32
    return %c0_i32, %c0_i32_0 : i32, i32
  }
  func.func @transform_4(%arg0: i32, %arg1: i32, %arg2: i32) -> (i32, i32) {
    %c0_i32 = arith.constant 0 : i32
    %c0_i32_0 = arith.constant 0 : i32
    %c0_i32_1 = arith.constant 0 : i32
    return %c0_i32, %c0_i32_0 : i32, i32
  }
  func.func @transform_5(%arg0: i32, %arg1: i32, %arg2: i32) -> (i32, i32) {
    %c0_i32 = arith.constant 0 : i32
    return %arg0, %arg1 : i32, i32
  }
}

module attributes {stable_mosaic.version = 11 : i64} {
  func.func @_linear_kernel(%arg0: i32, %arg1: i32, %arg2: i32, %arg3: memref<32x128xbf16, #tpu.memory_space<vmem>>, %arg4: memref<128x128xbf16, #tpu.memory_space<vmem>>, %arg5: memref<1x128xbf16, #tpu.memory_space<vmem>>, %arg6: memref<32x128xbf16, #tpu.memory_space<vmem>>, %arg7: memref<32x128xbf16, #tpu.memory_space<vmem>>, %arg8: memref<32x128xf32, #tpu.memory_space<vmem>>) attributes {dimension_semantics = [#tpu.dimension_semantics<parallel>, #tpu.dimension_semantics<parallel>, #tpu.dimension_semantics<arbitrary>], iteration_bounds = array<i64: 2, 1, 5>, scalar_prefetch = 0 : i64, scratch_operands = 1 : i64, tpu.core_type = #tpu.core_type<tc>, window_params = [{transform_indices = @transform_0, window_bounds = array<i64: 32, 128>}, {transform_indices = @transform_1, window_bounds = array<i64: 128, 128>}, {transform_indices = @transform_2, window_bounds = array<i64: 1, 128>}, {transform_indices = @transform_3, window_bounds = array<i64: 32, 128>}, {transform_indices = @transform_4, window_bounds = array<i64: 32, 128>}]} {
    %c0 = arith.constant 0 : index
    %c0_0 = arith.constant 0 : index
    %0 = vector.load %arg3[%c0, %c0_0] : memref<32x128xbf16, #tpu.memory_space<vmem>>, vector<32x128xbf16>
    %c0_1 = arith.constant 0 : index
    %c0_2 = arith.constant 0 : index
    %1 = vector.load %arg4[%c0_1, %c0_2] : memref<128x128xbf16, #tpu.memory_space<vmem>>, vector<128x128xbf16>
    %cst = arith.constant dense<0.000000e+00> : vector<32x128xf32>
    %2 = tpu.matmul %0, %1, %cst {dimension_numbers = #tpu.dot_dimension_numbers<[1], [0], [0], [1], [0, 0, 1, 1], [], []>} : vector<32x128xbf16>, vector<128x128xbf16>, vector<32x128xf32> -> vector<32x128xf32>
    %c0_i32 = arith.constant 0 : i32
    %3 = arith.cmpi eq, %arg2, %c0_i32 : i32
    %4 = arith.extui %3 : i1 to i32
    %c0_i32_3 = arith.constant 0 : i32
    %5 = arith.cmpi ne, %4, %c0_i32_3 : i32
    scf.if %5 {
      %cst_9 = arith.constant 0.000000e+00 : f32
      %12 = vector.broadcast %cst_9 : f32 to vector<32x128xf32>
      %c0_10 = arith.constant 0 : index
      %c0_11 = arith.constant 0 : index
      %13 = vector.load %arg8[%c0_10, %c0_11] : memref<32x128xf32, #tpu.memory_space<vmem>>, vector<32x128xf32>
      tpu.vector_store %arg8[%c0_10, %c0_11], %12 {strides = array<i32>} : memref<32x128xf32, #tpu.memory_space<vmem>>, vector<32x128xf32>,
    } else {
    }
    %c0_4 = arith.constant 0 : index
    %c0_5 = arith.constant 0 : index
    %6 = vector.load %arg8[%c0_4, %c0_5] : memref<32x128xf32, #tpu.memory_space<vmem>>, vector<32x128xf32>
    %7 = arith.addf %6, %2 : vector<32x128xf32>
    %c0_6 = arith.constant 0 : index
    %c0_7 = arith.constant 0 : index
    %8 = vector.load %arg8[%c0_6, %c0_7] : memref<32x128xf32, #tpu.memory_space<vmem>>, vector<32x128xf32>
    tpu.vector_store %arg8[%c0_6, %c0_7], %7 {strides = array<i32>} : memref<32x128xf32, #tpu.memory_space<vmem>>, vector<32x128xf32>,
    %c4_i32 = arith.constant 4 : i32
    %9 = arith.cmpi eq, %arg2, %c4_i32 : i32
    %10 = arith.extui %9 : i1 to i32
    %c0_i32_8 = arith.constant 0 : i32
    %11 = arith.cmpi ne, %10, %c0_i32_8 : i32
    scf.if %11 {
      %c0_9 = arith.constant 0 : index
      %c0_10 = arith.constant 0 : index
      %12 = vector.load %arg8[%c0_9, %c0_10] : memref<32x128xf32, #tpu.memory_space<vmem>>, vector<32x128xf32>
      %c0_11 = arith.constant 0 : index
      %c0_12 = arith.constant 0 : index
      %13 = vector.load %arg5[%c0_11, %c0_12] : memref<1x128xbf16, #tpu.memory_space<vmem>>, vector<1x128xbf16>
      %14 = arith.extf %13 : vector<1x128xbf16> to vector<1x128xf32>
      %15 = vector.broadcast %14 : vector<1x128xf32> to vector<32x128xf32>
      %16 = arith.addf %12, %15 : vector<32x128xf32>
      %c0_13 = arith.constant 0 : index
      %c0_14 = arith.constant 0 : index
      %17 = vector.load %arg6[%c0_13, %c0_14] : memref<32x128xbf16, #tpu.memory_space<vmem>>, vector<32x128xbf16>
      %18 = arith.extf %17 : vector<32x128xbf16> to vector<32x128xf32>
      %19 = arith.addf %16, %18 : vector<32x128xf32>
      %20 = arith.truncf %19 : vector<32x128xf32> to vector<32x128xbf16>
      %c0_15 = arith.constant 0 : index
      %c0_16 = arith.constant 0 : index
      %21 = vector.load %arg7[%c0_15, %c0_16] : memref<32x128xbf16, #tpu.memory_space<vmem>>, vector<32x128xbf16>
      tpu.vector_store %arg7[%c0_15, %c0_16], %20 {strides = array<i32>} : memref<32x128xbf16, #tpu.memory_space<vmem>>, vector<32x128xbf16>,
    } else {
    }
    return
  }
  func.func @transform_0(%arg0: i32, %arg1: i32, %arg2: i32) -> (i32, i32) {
    %c0_i32 = arith.constant 0 : i32
    return %arg0, %arg2 : i32, i32
  }
  func.func @transform_1(%arg0: i32, %arg1: i32, %arg2: i32) -> (i32, i32) {
    %c0_i32 = arith.constant 0 : i32
    return %arg2, %arg1 : i32, i32
  }
  func.func @transform_2(%arg0: i32, %arg1: i32, %arg2: i32) -> (i32, i32) {
    %c0_i32 = arith.constant 0 : i32
    %c0_i32_0 = arith.constant 0 : i32
    return %c0_i32, %arg1 : i32, i32
  }
  func.func @transform_3(%arg0: i32, %arg1: i32, %arg2: i32) -> (i32, i32) {
    %c0_i32 = arith.constant 0 : i32
    return %arg0, %arg1 : i32, i32
  }
  func.func @transform_4(%arg0: i32, %arg1: i32, %arg2: i32) -> (i32, i32) {
    %c0_i32 = arith.constant 0 : i32
    return %arg0, %arg1 : i32, i32
  }
}

module attributes {stable_mosaic.version = 11 : i64} {
  func.func @_layernorm_kernel(%arg0: i32, %arg1: memref<32x128xbf16, #tpu.memory_space<vmem>>, %arg2: memref<1x128xbf16, #tpu.memory_space<vmem>>, %arg3: memref<1x128xbf16, #tpu.memory_space<vmem>>, %arg4: memref<32x128xf32, #tpu.memory_space<vmem>>) attributes {dimension_semantics = [#tpu.dimension_semantics<parallel>], iteration_bounds = array<i64: 2>, scalar_prefetch = 0 : i64, scratch_operands = 0 : i64, tpu.core_type = #tpu.core_type<tc>, window_params = [{transform_indices = @transform_0, window_bounds = array<i64: 32, 128>}, {pipeline_mode = #tpu.pipeline_mode<synchronous>, transform_indices = @transform_1, window_bounds = array<i64: 1, 128>}, {pipeline_mode = #tpu.pipeline_mode<synchronous>, transform_indices = @transform_2, window_bounds = array<i64: 1, 128>}, {transform_indices = @transform_3, window_bounds = array<i64: 32, 128>}]} {
    %c0 = arith.constant 0 : index
    %c0_0 = arith.constant 0 : index
    %0 = vector.load %arg1[%c0, %c0_0] : memref<32x128xbf16, #tpu.memory_space<vmem>>, vector<32x128xbf16>
    %1 = arith.extf %0 : vector<32x128xbf16> to vector<32x128xf32>
    %cst = arith.constant dense<0.000000e+00> : vector<32xf32>
    %2 = vector.multi_reduction <add>, %1, %cst [1] : vector<32x128xf32> to vector<32xf32>
    %3 = vector.shape_cast %2 : vector<32xf32> to vector<32x1xf32>
    %cst_1 = arith.constant 1.280000e+02 : f32
    %4 = vector.broadcast %cst_1 : f32 to vector<32x1xf32>
    %5 = arith.divf %3, %4 : vector<32x1xf32>
    %6 = vector.broadcast %5 : vector<32x1xf32> to vector<32x128xf32>
    %7 = arith.subf %1, %6 : vector<32x128xf32>
    %8 = arith.mulf %7, %7 : vector<32x128xf32>
    %cst_2 = arith.constant dense<0.000000e+00> : vector<32xf32>
    %9 = vector.multi_reduction <add>, %8, %cst_2 [1] : vector<32x128xf32> to vector<32xf32>
    %10 = vector.shape_cast %9 : vector<32xf32> to vector<32x1xf32>
    %cst_3 = arith.constant 1.280000e+02 : f32
    %11 = vector.broadcast %cst_3 : f32 to vector<32x1xf32>
    %12 = arith.divf %10, %11 : vector<32x1xf32>
    %13 = vector.broadcast %5 : vector<32x1xf32> to vector<32x128xf32>
    %14 = arith.subf %1, %13 : vector<32x128xf32>
    %cst_4 = arith.constant 9.99999997E-7 : f32
    %15 = vector.broadcast %cst_4 : f32 to vector<32x1xf32>
    %16 = arith.addf %12, %15 : vector<32x1xf32>
    %17 = math.rsqrt %16 : vector<32x1xf32>
    %18 = vector.broadcast %17 : vector<32x1xf32> to vector<32x128xf32>
    %19 = arith.mulf %14, %18 : vector<32x128xf32>
    %c0_5 = arith.constant 0 : index
    %c0_6 = arith.constant 0 : index
    %20 = vector.load %arg2[%c0_5, %c0_6] : memref<1x128xbf16, #tpu.memory_space<vmem>>, vector<1x128xbf16>
    %21 = arith.extf %20 : vector<1x128xbf16> to vector<1x128xf32>
    %22 = vector.broadcast %21 : vector<1x128xf32> to vector<32x128xf32>
    %23 = arith.mulf %19, %22 : vector<32x128xf32>
    %c0_7 = arith.constant 0 : index
    %c0_8 = arith.constant 0 : index
    %24 = vector.load %arg3[%c0_7, %c0_8] : memref<1x128xbf16, #tpu.memory_space<vmem>>, vector<1x128xbf16>
    %25 = arith.extf %24 : vector<1x128xbf16> to vector<1x128xf32>
    %26 = vector.broadcast %25 : vector<1x128xf32> to vector<32x128xf32>
    %27 = arith.addf %23, %26 : vector<32x128xf32>
    %c0_9 = arith.constant 0 : index
    %c0_10 = arith.constant 0 : index
    %28 = vector.load %arg4[%c0_9, %c0_10] : memref<32x128xf32, #tpu.memory_space<vmem>>, vector<32x128xf32>
    tpu.vector_store %arg4[%c0_9, %c0_10], %27 {strides = array<i32>} : memref<32x128xf32, #tpu.memory_space<vmem>>, vector<32x128xf32>,
    return
  }
  func.func @transform_0(%arg0: i32) -> (i32, i32) {
    %c0_i32 = arith.constant 0 : i32
    %c0_i32_0 = arith.constant 0 : i32
    return %arg0, %c0_i32 : i32, i32
  }
  func.func @transform_1(%arg0: i32) -> (i32, i32) {
    %c0_i32 = arith.constant 0 : i32
    %c0_i32_0 = arith.constant 0 : i32
    %c0_i32_1 = arith.constant 0 : i32
    return %c0_i32, %c0_i32_0 : i32, i32
  }
  func.func @transform_2(%arg0: i32) -> (i32, i32) {
    %c0_i32 = arith.constant 0 : i32
    %c0_i32_0 = arith.constant 0 : i32
    %c0_i32_1 = arith.constant 0 : i32
    return %c0_i32, %c0_i32_0 : i32, i32
  }
  func.func @transform_3(%arg0: i32) -> (i32, i32) {
    %c0_i32 = arith.constant 0 : i32
    %c0_i32_0 = arith.constant 0 : i32
    return %arg0, %c0_i32 : i32, i32
  }
}

</mosaic_0001>

<llo_original>
// kernel: siglip_vision_forward.12
$region0: #{siglip_vision_forward.12}
  #allocation0 [shape = 'u32[]', space=smem, size = 0x4, offset = 0x4, fixed_abs, tag = 'smem constant byte address 0x4 - core index']
  #allocation1 [shape = 'u32[72,128]{1,0:T(1,128)}', space=vmem, size = 0x9000, scoped, tag = 'internal scratch']
  %s0 = inlined_call_operand.vmem [shape: bf16[64,128], index: 0, kind: input, shape index: {}]
  %s1 = inlined_call_operand.vmem [shape: bf16[128,128], index: 1, kind: input, shape index: {}]
  %s2 = inlined_call_operand.vmem [shape: bf16[1,128], index: 2, kind: input, shape index: {}]
  %s3 = inlined_call_operand.vmem [shape: bf16[32,128], index: 3, kind: input, shape index: {}]
  %s4 = inlined_call_operand.vmem [shape: bf16[64,128], index: 4, kind: output, shape index: {}]
  %s5 = sld [smem:[#allocation0]]
  $region49: #{siglip_vision_forward.12} parent=0
    _
  %s7 = ssub.s32 1, %s5
  %s8 = scalar_select 0, %s7, %s5
  loop: start=0, step=1, limit=4
  $region2: #{siglip_vision_forward.12} parent=0 // loop_pre_header
    _
  $region3: #{siglip_vision_forward.12} parent=0 // loop_header
    %s10 = sphi 0, %s14
    %p11 = scmp.ge.s32.totalorder %s10, 4
    %s17 = sphi 0, %s36
    %s18 = sphi 0, %s32
    %s19 = sphi 0, %s28
    %s20 = sphi 0, %s17
    %s21 = sphi 0, %s18
    %s22 = sphi 0, %s19
    %s23 = sphi 0, %s20
    %s24 = sphi 0, %s21
    %s25 = sphi 0, %s22
    %s41 = sphi 0, %s43
    %s44 = sphi 0, %s41
    %s45 = sphi 0, %s44
    %s61 = sphi 0, %s45
    %s69 = sphi 0, %s71
    %s72 = sphi 0, %s69
    %s73 = sphi 0, %s72
    %s89 = sphi 0, %s73
    %s95 = sphi 0, %s97
    %s98 = sphi 0, %s95
    %s99 = sphi 0, %s98
    %s115 = sphi 0, %s99
    %s121 = sphi 0, %s123
    %s124 = sphi 0, %s121
    %s125 = sphi 0, %s124
    %s141 = sphi 0, %s125
    %s149 = sphi 0, %s151
    %s152 = sphi 0, %s149
    %s153 = sphi 0, %s152
    %s169 = sphi 0, %s153
  $region4: #{siglip_vision_forward.12} parent=0 // loop_header_branch
    %13 = sbr.rel (%p11) target = $region8
  $region5: #{siglip_vision_forward.12} parent=0 // loop_body
    %s15 = ssub.s32 %s10, 1
    %s16 = ssub.s32 %s10, 2
    %s26 = sadd.s32 1, %s19
    %p27 = scmp.ge.s32.totalorder %s26, 1
    %s28 = scalar_select %p27, 0, %s26
    %s29 = sadd.s32 1, %s18
    %s30 = scalar_select %p27, %s29, %s18
    %p31 = scmp.ge.s32.totalorder %s30, 1
    %s32 = scalar_select %p31, 0, %s30
    %s33 = sadd.s32 1, %s17
    %s34 = scalar_select %p31, %s33, %s17
    %p35 = scmp.ge.s32.totalorder %s34, 2
    %s36 = scalar_select %p35, 0, %s34
    %s37 = ssub.s32 %s17, %s36
    %s38 = ssub.s32 %s19, %s28
    %s39 = sor.u32 %s37, %s38
    %p40 = scmp.eq.s32.totalorder %s39, 0
    %s42 = sadd.s32 %s41, 1
    %s43 = scalar_select %p40, %s41, %s42
    %p46 = pneg %p40
    %p47 = scmp.eq.s32.totalorder %s10, 1
    %p48 = por %p46, %p47
    %p49 = scmp.ne.s32.totalorder %s41, %s44
    %p50 = scmp.eq.s32.totalorder %s10, 0
    %p51 = por %p49, %p50
    %p52 = scmp.ne.s32.totalorder %s41, %s44
    %p53 = scmp.eq.s32.totalorder %s15, 1
    %p54 = por %p52, %p53
    %p55 = scmp.ne.s32.totalorder %s44, %s45
    %p56 = scmp.eq.s32.totalorder %s15, 0
    %p57 = por %p55, %p56
    %p58 = scmp.ne.s32.totalorder %s44, %s45
    %p59 = scmp.eq.s32.totalorder %s16, 1
    %p60 = por %p58, %p59
    %p62 = scmp.ne.s32.totalorder %s45, %s61
    %p63 = scmp.eq.s32.totalorder %s16, 0
    %p64 = por %p62, %p63
    %s65 = ssub.s32 %s19, %s28
    %s66 = ssub.s32 %s18, %s32
    %s67 = sor.u32 %s65, %s66
    %p68 = scmp.eq.s32.totalorder %s67, 0
    %s70 = sadd.s32 %s69, 1
    %s71 = scalar_select %p68, %s69, %s70
    %p74 = pneg %p68
    %p75 = scmp.eq.s32.totalorder %s10, 1
    %p76 = por %p74, %p75
    %p77 = scmp.ne.s32.totalorder %s69, %s72
    %p78 = scmp.eq.s32.totalorder %s10, 0
    %p79 = por %p77, %p78
    %p80 = scmp.ne.s32.totalorder %s69, %s72
    %p81 = scmp.eq.s32.totalorder %s15, 1
    %p82 = por %p80, %p81
    %p83 = scmp.ne.s32.totalorder %s72, %s73
    %p84 = scmp.eq.s32.totalorder %s15, 0
    %p85 = por %p83, %p84
    %p86 = scmp.ne.s32.totalorder %s72, %s73
    %p87 = scmp.eq.s32.totalorder %s16, 1
    %p88 = por %p86, %p87
    %p90 = scmp.ne.s32.totalorder %s73, %s89
    %p91 = scmp.eq.s32.totalorder %s16, 0
    %p92 = por %p90, %p91
    %s93 = ssub.s32 %s18, %s32
    %p94 = scmp.eq.s32.totalorder %s93, 0
    %s96 = sadd.s32 %s95, 1
    %s97 = scalar_select %p94, %s95, %s96
    %p100 = pneg %p94
    %p101 = scmp.eq.s32.totalorder %s10, 1
    %p102 = por %p100, %p101
    %p103 = scmp.ne.s32.totalorder %s95, %s98
    %p104 = scmp.eq.s32.totalorder %s10, 0
    %p105 = por %p103, %p104
    %p106 = scmp.ne.s32.totalorder %s95, %s98
    %p107 = scmp.eq.s32.totalorder %s15, 1
    %p108 = por %p106, %p107
    %p109 = scmp.ne.s32.totalorder %s98, %s99
    %p110 = scmp.eq.s32.totalorder %s15, 0
    %p111 = por %p109, %p110
    %p112 = scmp.ne.s32.totalorder %s98, %s99
    %p113 = scmp.eq.s32.totalorder %s16, 1
    %p114 = por %p112, %p113
    %p116 = scmp.ne.s32.totalorder %s99, %s115
    %p117 = scmp.eq.s32.totalorder %s16, 0
    %p118 = por %p116, %p117
    %s119 = ssub.s32 %s18, %s32
    %p120 = scmp.eq.s32.totalorder %s119, 0
    %s122 = sadd.s32 %s121, 1
    %s123 = scalar_select %p120, %s121, %s122
    %p126 = pneg %p120
    %p127 = scmp.eq.s32.totalorder %s10, 1
    %p128 = por %p126, %p127
    %p129 = scmp.ne.s32.totalorder %s121, %s124
    %p130 = scmp.eq.s32.totalorder %s10, 0
    %p131 = por %p129, %p130
    %p132 = scmp.ne.s32.totalorder %s121, %s124
    %p133 = scmp.eq.s32.totalorder %s15, 1
    %p134 = por %p132, %p133
    %p135 = scmp.ne.s32.totalorder %s124, %s125
    %p136 = scmp.eq.s32.totalorder %s15, 0
    %p137 = por %p135, %p136
    %p138 = scmp.ne.s32.totalorder %s124, %s125
    %p139 = scmp.eq.s32.totalorder %s16, 1
    %p140 = por %p138, %p139
    %p142 = scmp.ne.s32.totalorder %s125, %s141
    %p143 = scmp.eq.s32.totalorder %s16, 0
    %p144 = por %p142, %p143
    %s145 = ssub.s32 %s17, %s36
    %s146 = ssub.s32 %s18, %s32
    %s147 = sor.u32 %s145, %s146
    %p148 = scmp.eq.s32.totalorder %s147, 0
    %s150 = sadd.s32 %s149, 1
    %s151 = scalar_select %p148, %s149, %s150
    %p154 = pneg %p148
    %p155 = scmp.eq.s32.totalorder %s10, 1
    %p156 = por %p154, %p155
    %p157 = scmp.ne.s32.totalorder %s149, %s152
    %p158 = scmp.eq.s32.totalorder %s10, 0
    %p159 = por %p157, %p158
    %p160 = scmp.ne.s32.totalorder %s149, %s152
    %p161 = scmp.eq.s32.totalorder %s15, 1
    %p162 = por %p160, %p161
    %p163 = scmp.ne.s32.totalorder %s152, %s153
    %p164 = scmp.eq.s32.totalorder %s15, 0
    %p165 = por %p163, %p164
    %p166 = scmp.ne.s32.totalorder %s152, %s153
    %p167 = scmp.eq.s32.totalorder %s16, 1
    %p168 = por %p166, %p167
    %p170 = scmp.ne.s32.totalorder %s153, %s169
    %p171 = scmp.eq.s32.totalorder %s16, 0
    %p172 = por %p170, %p171
    %p173 = scmp.le.s32.totalorder 1, %s10
    %p174 = scmp.lt.s32.totalorder %s10, 3
    %p175 = pnand %p173, %p174
    %p176 = pneg %p175
    // Predicated region
    $region9: #{siglip_vision_forward.12} parent=5 // pred_check
      _
    $region10: #{siglip_vision_forward.12} parent=5 // pred_check_branch
      %178 = sbr.rel (%p175) target = $region12
    $region11: #{siglip_vision_forward.12} parent=5 // pred_region
      %s179 = ssub.s32 %s10, 1
      // Predicated region
      $region13: #{siglip_vision_forward.12} parent=11 // pred_check
        %p180 = pneg %p85
      $region14: #{siglip_vision_forward.12} parent=11 // pred_check_branch
        %182 = sbr.rel (%p180) target = $region16
      $region15: #{siglip_vision_forward.12} parent=11 // pred_region
        %s183 = smul.u32 16, %s22
        %p184 = scmp.lt.s32.totalorder %s183, 15
        %s185 = scalar_select %p184, %s183, 15
        %p186 = scmp.lt.s32.totalorder %s21, 0
        %s187 = scalar_select %p186, %s21, 0
        %s188 = sadd.s32 %s187, %s185
        %s189 = smul.addr %s188, 4
        %s190 = scalar_lea.vmem %s1, %s189
        %s191 = smul.u32 16, %s22
      $region16: #{siglip_vision_forward.12} parent=11 // pred_fallthru
        _
      // Predicated region
      $region17: #{siglip_vision_forward.12} parent=11 // pred_check
        %p192 = pneg %p111
      $region18: #{siglip_vision_forward.12} parent=11 // pred_check_branch
        %194 = sbr.rel (%p192) target = $region20
      $region19: #{siglip_vision_forward.12} parent=11 // pred_region
        %p195 = scmp.lt.s32.totalorder %s21, 0
        %s196 = scalar_select %p195, %s21, 0
        %s197 = scalar_lea.vmem %s2, %s196
      $region20: #{siglip_vision_forward.12} parent=11 // pred_fallthru
        _
      // Predicated region
      $region21: #{siglip_vision_forward.12} parent=11 // pred_check
        %p198 = pneg %p137
      $region22: #{siglip_vision_forward.12} parent=11 // pred_check_branch
        %200 = sbr.rel (%p198) target = $region24
      $region23: #{siglip_vision_forward.12} parent=11 // pred_region
        %p201 = scmp.lt.s32.totalorder %s21, 0
        %s202 = scalar_select %p201, %s21, 0
        %s203 = smul.addr %s202, 4
        %s204 = scalar_lea.vmem %s3, %s203
      $region24: #{siglip_vision_forward.12} parent=11 // pred_fallthru
        _
    $region12: #{siglip_vision_forward.12} parent=5 // pred_fallthru
      _
    %p205 = scmp.lt.s32.totalorder %s10, 2
    // Predicated region
    $region25: #{siglip_vision_forward.12} parent=5 // pred_check
      %p206 = pneg %p205
    $region26: #{siglip_vision_forward.12} parent=5 // pred_check_branch
      %208 = sbr.rel (%p206) target = $region28
    $region27: #{siglip_vision_forward.12} parent=5 // pred_region
      // Predicated region
      $region29: #{siglip_vision_forward.12} parent=27 // pred_check
        %p209 = pneg %p51
      $region30: #{siglip_vision_forward.12} parent=27 // pred_check_branch
        %211 = sbr.rel (%p209) target = $region32
      $region31: #{siglip_vision_forward.12} parent=27 // pred_region
        %s212 = smul.u32 4, %s17
        %p213 = scmp.lt.s32.totalorder %s212, 7
        %s214 = scalar_select %p213, %s212, 7
        %p215 = scmp.lt.s32.totalorder %s19, 0
        %s216 = scalar_select %p215, %s19, 0
        %s217 = sadd.s32 %s216, %s214
        %s218 = smul.addr %s217, 4
        %s219 = scalar_lea.vmem %s0, %s218
        %s220 = smul.u32 4, %s17
      $region32: #{siglip_vision_forward.12} parent=27 // pred_fallthru
        _
    $region28: #{siglip_vision_forward.12} parent=5 // pred_fallthru
      _
    %p221 = scmp.le.s32.totalorder 1, %s10
    %p222 = scmp.lt.s32.totalorder %s10, 3
    %p223 = pnand %p221, %p222
    %p224 = pneg %p223
    // Predicated region
    $region33: #{siglip_vision_forward.12} parent=5 // pred_check
      _
    $region34: #{siglip_vision_forward.12} parent=5 // pred_check_branch
      %226 = sbr.rel (%p223) target = $region36
    $region35: #{siglip_vision_forward.12} parent=5 // pred_region
      %s227 = ssub.s32 %s10, 1
      %s228 = smul.u32 4, %s20
      %p229 = scmp.lt.s32.totalorder %s228, 7
      %s230 = scalar_select %p229, %s228, 7
      %p231 = scmp.lt.s32.totalorder %s22, 0
      %s232 = scalar_select %p231, %s22, 0
      %s233 = sadd.s32 %s232, %s230
      %s234 = smul.addr %s233, 4
      %s235 = scalar_lea.vmem %s0, %s234
      %p236 = pneg %p57
      %p237 = pneg %p54
      %s238 = smul.u32 16, %s22
      %p239 = scmp.lt.s32.totalorder %s238, 15
      %s240 = scalar_select %p239, %s238, 15
      %p241 = scmp.lt.s32.totalorder %s21, 0
      %s242 = scalar_select %p241, %s21, 0
      %s243 = sadd.s32 %s242, %s240
      %s244 = smul.addr %s243, 4
      %s245 = scalar_lea.vmem %s1, %s244
      %p246 = pneg %p85
      %p247 = pneg %p82
      %p248 = scmp.lt.s32.totalorder %s21, 0
      %s249 = scalar_select %p248, %s21, 0
      %s250 = scalar_lea.vmem %s2, %s249
      %p251 = pneg %p111
      %p252 = pneg %p108
      %p253 = scmp.lt.s32.totalorder %s21, 0
      %s254 = scalar_select %p253, %s21, 0
      %s255 = smul.addr %s254, 4
      %s256 = scalar_lea.vmem %s3, %s255
      %p257 = pneg %p137
      %p258 = pneg %p134
      %p259 = pneg %p165
      %p260 = pneg %p162
      %s261 = smul.u32 4, %s20
      %p262 = scmp.lt.s32.totalorder %s261, 7
      %s263 = scalar_select %p262, %s261, 7
      %p264 = scmp.lt.s32.totalorder %s21, 0
      %s265 = scalar_select %p264, %s21, 0
      %s266 = sadd.s32 %s265, %s263
      %s267 = smul.addr %s266, 4
      %s268 = scalar_lea.vmem %s4, %s267
      %s269 = smul.u32 4, %s20
      %p270 = scmp.lt.s32.totalorder %s269, 7
      %s271 = scalar_select %p270, %s269, 7
      %p272 = scmp.lt.s32.totalorder %s22, 0
      %s273 = scalar_select %p272, %s22, 0
      %s274 = sadd.s32 %s273, %s271
      %s275 = smul.addr %s274, 4
      %s276 = scalar_lea.vmem %s0, %s275
      %s277 = smul.u32 4, %s20
      %s278 = smul.u32 16, %s22
      %p279 = scmp.lt.s32.totalorder %s278, 15
      %s280 = scalar_select %p279, %s278, 15
      %p281 = scmp.lt.s32.totalorder %s21, 0
      %s282 = scalar_select %p281, %s21, 0
      %s283 = sadd.s32 %s282, %s280
      %s284 = smul.addr %s283, 4
      %s285 = scalar_lea.vmem %s1, %s284
      %s286 = smul.u32 16, %s22
      %p287 = scmp.lt.s32.totalorder %s21, 0
      %s288 = scalar_select %p287, %s21, 0
      %s289 = scalar_lea.vmem %s2, %s288
      %p290 = scmp.lt.s32.totalorder %s21, 0
      %s291 = scalar_select %p290, %s21, 0
      %s292 = smul.addr %s291, 4
      %s293 = scalar_lea.vmem %s3, %s292
      %s294 = smul.u32 4, %s20
      %p295 = scmp.lt.s32.totalorder %s294, 7
      %s296 = scalar_select %p295, %s294, 7
      %p297 = scmp.lt.s32.totalorder %s21, 0
      %s298 = scalar_select %p297, %s21, 0
      %s299 = sadd.s32 %s298, %s296
      %s300 = smul.addr %s299, 4
      %s301 = scalar_lea.vmem %s4, %s300
      %s302 = smul.u32 4, %s20
      %v303 = vld [vmem:[%s276] sm:$0xf]
      %v304 = vld [vmem:[%s276 + $0x4] sm:$0xf]
      %v305 = vld [vmem:[%s276 + $0x8] sm:$0xf]
      %v306 = vld [vmem:[%s276 + $0xc] sm:$0xf]
      %v307 = vld [vmem:[%s285] sm:$0xf]
      %v308 = vld [vmem:[%s285 + $0x4] sm:$0xf]
      %v309 = vld [vmem:[%s285 + $0x8] sm:$0xf]
      %v310 = vld [vmem:[%s285 + $0xc] sm:$0xf]
      %v311 = vld [vmem:[%s285 + $0x10] sm:$0xf]
      %v312 = vld [vmem:[%s285 + $0x14] sm:$0xf]
      %v313 = vld [vmem:[%s285 + $0x18] sm:$0xf]
      %v314 = vld [vmem:[%s285 + $0x1c] sm:$0xf]
      %v315 = vld [vmem:[%s285 + $0x20] sm:$0xf]
      %v316 = vld [vmem:[%s285 + $0x24] sm:$0xf]
      %v317 = vld [vmem:[%s285 + $0x28] sm:$0xf]
      %v318 = vld [vmem:[%s285 + $0x2c] sm:$0xf]
      %v319 = vld [vmem:[%s285 + $0x30] sm:$0xf]
      %v320 = vld [vmem:[%s285 + $0x34] sm:$0xf]
      %v321 = vld [vmem:[%s285 + $0x38] sm:$0xf]
      %v322 = vld [vmem:[%s285 + $0x3c] sm:$0xf]
      %v323 = vld [vmem:[%s289] sm:$0x1]
      %v324 = vunpack.c.l.bf16 %v323
      %v325 = vperm.slane %v324, 0
      %v330 = vunpack.c.l.b16 %v303
      %v331 = vunpack.c.l.b16 %v304
      %v332 = vunpack.c.l.b16 %v305
      %v333 = vunpack.c.l.b16 %v306
      %v334 = vpack.c.b16 %v331, %v330
      %v335 = vpack.c.b16 %v333, %v332
      %v354 = vunpack.c.l.b16 %v307
      %v355 = vunpack.c.l.b16 %v308
      %v356 = vunpack.c.l.b16 %v309
      %v357 = vunpack.c.l.b16 %v310
      %v358 = vunpack.c.l.b16 %v311
      %v359 = vunpack.c.l.b16 %v312
      %v360 = vunpack.c.l.b16 %v313
      %v361 = vunpack.c.l.b16 %v314
      %v362 = vunpack.c.l.b16 %v315
      %v363 = vunpack.c.l.b16 %v316
      %v364 = vunpack.c.l.b16 %v317
      %v365 = vunpack.c.l.b16 %v318
      %v366 = vunpack.c.l.b16 %v319
      %v367 = vunpack.c.l.b16 %v320
      %v368 = vunpack.c.l.b16 %v321
      %v369 = vunpack.c.l.b16 %v322
      %v370 = vpack.c.b16 %v355, %v354
      %v371 = vpack.c.b16 %v357, %v356
      %v372 = vpack.c.b16 %v359, %v358
      %v373 = vpack.c.b16 %v361, %v360
      %v374 = vpack.c.b16 %v363, %v362
      %v375 = vpack.c.b16 %v365, %v364
      %v376 = vpack.c.b16 %v367, %v366
      %v377 = vpack.c.b16 %v369, %v368
      %386 = vmatpush.bf16.msra.mxu0 %v377
      %387 = vmatpush.bf16.msra.mxu0 %v376
      %388 = vmatpush.bf16.msra.mxu0 %v375
      %389 = vmatpush.bf16.msra.mxu0 %v374
      %390 = vmatpush.bf16.msra.mxu0 %v373
      %391 = vmatpush.bf16.msra.mxu0 %v372
      %392 = vmatpush.bf16.msra.mxu0 %v371
      %393 = vmatpush.bf16.msra.mxu0 %v370
      %394 = vmatmul.bf16.gmra.mxu0 %v334
      %v395 = vpop.f32.mrf.mxu0
      %v396 = vadd.f32 %v325, %v395
      %v397 = vpop.f32.mrf.mxu0
      %v398 = vadd.f32 %v325, %v397
      %399 = vmatmul.bf16.gmra.mxu0 %v335
      %v400 = vpop.f32.mrf.mxu0
      %v401 = vadd.f32 %v325, %v400
      %v402 = vpop.f32.mrf.mxu0
      %v403 = vadd.f32 %v325, %v402
      %404 = vdwg.mxu0
      %v405 = vld [vmem:[%s293] sm:$0xf]
      %v406 = vld [vmem:[%s293 + $0x4] sm:$0xf]
      %v407 = vld [vmem:[%s293 + $0x8] sm:$0xf]
      %v408 = vld [vmem:[%s293 + $0xc] sm:$0xf]
      %v409 = vunpack.c.l.bf16 %v405
      %v410 = vunpack.c.l.bf16 %v406
      %v411 = vunpack.c.l.bf16 %v407
      %v412 = vunpack.c.l.bf16 %v408
      %v413 = vadd.f32 %v396, %v409
      %v414 = vadd.f32 %v398, %v410
      %v415 = vadd.f32 %v401, %v411
      %v416 = vadd.f32 %v403, %v412
      %v417 = vpack.c.bf16 %v413, %v413
      %v418 = vpack.c.bf16 %v414, %v414
      %v419 = vpack.c.bf16 %v415, %v415
      %v420 = vpack.c.bf16 %v416, %v416
      %421 = vst [vmem:[%s301] sm:$0xf] %v417
      %422 = vst [vmem:[%s301 + $0x4] sm:$0xf] %v418
      %423 = vst [vmem:[%s301 + $0x8] sm:$0xf] %v419
      %424 = vst [vmem:[%s301 + $0xc] sm:$0xf] %v420
      %s425 = smul.u32 4, %s20
      %p426 = scmp.lt.s32.totalorder %s425, 7
      %s427 = scalar_select %p426, %s425, 7
      %p428 = scmp.lt.s32.totalorder %s21, 0
      %s429 = scalar_select %p428, %s21, 0
      %s430 = sadd.s32 %s429, %s427
      %s431 = smul.addr %s430, 4
      %s432 = scalar_lea.vmem %s4, %s431
      // Predicated region
      $region37: #{siglip_vision_forward.12} parent=35 // pred_check
        %p433 = pneg %p162
      $region38: #{siglip_vision_forward.12} parent=35 // pred_check_branch
        %435 = sbr.rel (%p433) target = $region40
      $region39: #{siglip_vision_forward.12} parent=35 // pred_region
        %s436 = smul.u32 4, %s20
      $region40: #{siglip_vision_forward.12} parent=35 // pred_fallthru
        _
    $region36: #{siglip_vision_forward.12} parent=5 // pred_fallthru
      _
    %p437 = scmp.le.s32.totalorder 2, %s10
    // Predicated region
    $region41: #{siglip_vision_forward.12} parent=5 // pred_check
      %p438 = pneg %p437
    $region42: #{siglip_vision_forward.12} parent=5 // pred_check_branch
      %440 = sbr.rel (%p438) target = $region44
    $region43: #{siglip_vision_forward.12} parent=5 // pred_region
      %s441 = ssub.s32 %s10, 2
      // Predicated region
      $region45: #{siglip_vision_forward.12} parent=43 // pred_check
        %p442 = pneg %p168
      $region46: #{siglip_vision_forward.12} parent=43 // pred_check_branch
        %444 = sbr.rel (%p442) target = $region48
      $region47: #{siglip_vision_forward.12} parent=43 // pred_region
        %s445 = smul.u32 4, %s23
        %p446 = scmp.lt.s32.totalorder %s445, 7
        %s447 = scalar_select %p446, %s445, 7
        %p448 = scmp.lt.s32.totalorder %s24, 0
        %s449 = scalar_select %p448, %s24, 0
        %s450 = sadd.s32 %s449, %s447
        %s451 = smul.addr %s450, 4
        %s452 = scalar_lea.vmem %s4, %s451
      $region48: #{siglip_vision_forward.12} parent=43 // pred_fallthru
        _
    $region44: #{siglip_vision_forward.12} parent=5 // pred_fallthru
      _
  $region6: #{siglip_vision_forward.12} parent=0 // loop_footer
    %s14 = sadd.s32 1, %s10
  $region7: #{siglip_vision_forward.12} parent=0 // loop_footer_branch
    %9 = sbr.rel target = $region3
  $region8: #{siglip_vision_forward.12} parent=0 // loop_exit
    _

// kernel: siglip_vision_forward.13
$region0: #{siglip_vision_forward.13}
  #allocation0 [shape = 'u32[]', space=smem, size = 0x4, offset = 0x4, fixed_abs, tag = 'smem constant byte address 0x4 - core index']
  #allocation1 [shape = 'u32[72,128]{1,0:T(1,128)}', space=vmem, size = 0x9000, scoped, tag = 'internal scratch']
  %s0 = inlined_call_operand.vmem [shape: bf16[64,128], index: 0, kind: input, shape index: {}]
  %s1 = inlined_call_operand.vmem [shape: bf16[128,384], index: 1, kind: input, shape index: {}]
  %s2 = inlined_call_operand.vmem [shape: bf16[1,384], index: 2, kind: input, shape index: {}]
  %s3 = inlined_call_operand.vmem [shape: bf16[1,128], index: 3, kind: input, shape index: {}]
  %s4 = inlined_call_operand.vmem [shape: bf16[1,128], index: 4, kind: input, shape index: {}]
  %s5 = inlined_call_operand.vmem [shape: bf16[64,384], index: 5, kind: output, shape index: {}]
  %s6 = sld [smem:[#allocation0]]
  $region53: #{siglip_vision_forward.13} parent=0
    _
  %s8 = ssub.s32 1, %s6
  %s9 = scalar_select 0, %s8, %s6
  loop: start=0, step=1, limit=4
  $region2: #{siglip_vision_forward.13} parent=0 // loop_pre_header
    _
  $region3: #{siglip_vision_forward.13} parent=0 // loop_header
    %s11 = sphi 0, %s15
    %p12 = scmp.ge.s32.totalorder %s11, 4
    %s18 = sphi 0, %s37
    %s19 = sphi 0, %s33
    %s20 = sphi 0, %s29
    %s21 = sphi 0, %s18
    %s22 = sphi 0, %s19
    %s23 = sphi 0, %s20
    %s24 = sphi 0, %s21
    %s25 = sphi 0, %s22
    %s26 = sphi 0, %s23
    %s42 = sphi 0, %s44
    %s45 = sphi 0, %s42
    %s46 = sphi 0, %s45
    %s62 = sphi 0, %s46
    %s70 = sphi 0, %s72
    %s73 = sphi 0, %s70
    %s74 = sphi 0, %s73
    %s90 = sphi 0, %s74
    %s96 = sphi 0, %s98
    %s99 = sphi 0, %s96
    %s100 = sphi 0, %s99
    %s116 = sphi 0, %s100
    %s120 = sphi 0, %s120
    %s122 = sphi 0, %s120
    %s123 = sphi 0, %s122
    %s137 = sphi 0, %s123
    %s141 = sphi 0, %s141
    %s143 = sphi 0, %s141
    %s144 = sphi 0, %s143
    %s158 = sphi 0, %s144
    %s166 = sphi 0, %s168
    %s169 = sphi 0, %s166
    %s170 = sphi 0, %s169
    %s186 = sphi 0, %s170
  $region4: #{siglip_vision_forward.13} parent=0 // loop_header_branch
    %14 = sbr.rel (%p12) target = $region8
  $region5: #{siglip_vision_forward.13} parent=0 // loop_body
    %s16 = ssub.s32 %s11, 1
    %s17 = ssub.s32 %s11, 2
    %s27 = sadd.s32 1, %s20
    %p28 = scmp.ge.s32.totalorder %s27, 1
    %s29 = scalar_select %p28, 0, %s27
    %s30 = sadd.s32 1, %s19
    %s31 = scalar_select %p28, %s30, %s19
    %p32 = scmp.ge.s32.totalorder %s31, 1
    %s33 = scalar_select %p32, 0, %s31
    %s34 = sadd.s32 1, %s18
    %s35 = scalar_select %p32, %s34, %s18
    %p36 = scmp.ge.s32.totalorder %s35, 2
    %s37 = scalar_select %p36, 0, %s35
    %s38 = ssub.s32 %s18, %s37
    %s39 = ssub.s32 %s20, %s29
    %s40 = sor.u32 %s38, %s39
    %p41 = scmp.eq.s32.totalorder %s40, 0
    %s43 = sadd.s32 %s42, 1
    %s44 = scalar_select %p41, %s42, %s43
    %p47 = pneg %p41
    %p48 = scmp.eq.s32.totalorder %s11, 1
    %p49 = por %p47, %p48
    %p50 = scmp.ne.s32.totalorder %s42, %s45
    %p51 = scmp.eq.s32.totalorder %s11, 0
    %p52 = por %p50, %p51
    %p53 = scmp.ne.s32.totalorder %s42, %s45
    %p54 = scmp.eq.s32.totalorder %s16, 1
    %p55 = por %p53, %p54
    %p56 = scmp.ne.s32.totalorder %s45, %s46
    %p57 = scmp.eq.s32.totalorder %s16, 0
    %p58 = por %p56, %p57
    %p59 = scmp.ne.s32.totalorder %s45, %s46
    %p60 = scmp.eq.s32.totalorder %s17, 1
    %p61 = por %p59, %p60
    %p63 = scmp.ne.s32.totalorder %s46, %s62
    %p64 = scmp.eq.s32.totalorder %s17, 0
    %p65 = por %p63, %p64
    %s66 = ssub.s32 %s20, %s29
    %s67 = ssub.s32 %s19, %s33
    %s68 = sor.u32 %s66, %s67
    %p69 = scmp.eq.s32.totalorder %s68, 0
    %s71 = sadd.s32 %s70, 1
    %s72 = scalar_select %p69, %s70, %s71
    %p75 = pneg %p69
    %p76 = scmp.eq.s32.totalorder %s11, 1
    %p77 = por %p75, %p76
    %p78 = scmp.ne.s32.totalorder %s70, %s73
    %p79 = scmp.eq.s32.totalorder %s11, 0
    %p80 = por %p78, %p79
    %p81 = scmp.ne.s32.totalorder %s70, %s73
    %p82 = scmp.eq.s32.totalorder %s16, 1
    %p83 = por %p81, %p82
    %p84 = scmp.ne.s32.totalorder %s73, %s74
    %p85 = scmp.eq.s32.totalorder %s16, 0
    %p86 = por %p84, %p85
    %p87 = scmp.ne.s32.totalorder %s73, %s74
    %p88 = scmp.eq.s32.totalorder %s17, 1
    %p89 = por %p87, %p88
    %p91 = scmp.ne.s32.totalorder %s74, %s90
    %p92 = scmp.eq.s32.totalorder %s17, 0
    %p93 = por %p91, %p92
    %s94 = ssub.s32 %s19, %s33
    %p95 = scmp.eq.s32.totalorder %s94, 0
    %s97 = sadd.s32 %s96, 1
    %s98 = scalar_select %p95, %s96, %s97
    %p101 = pneg %p95
    %p102 = scmp.eq.s32.totalorder %s11, 1
    %p103 = por %p101, %p102
    %p104 = scmp.ne.s32.totalorder %s96, %s99
    %p105 = scmp.eq.s32.totalorder %s11, 0
    %p106 = por %p104, %p105
    %p107 = scmp.ne.s32.totalorder %s96, %s99
    %p108 = scmp.eq.s32.totalorder %s16, 1
    %p109 = por %p107, %p108
    %p110 = scmp.ne.s32.totalorder %s99, %s100
    %p111 = scmp.eq.s32.totalorder %s16, 0
    %p112 = por %p110, %p111
    %p113 = scmp.ne.s32.totalorder %s99, %s100
    %p114 = scmp.eq.s32.totalorder %s17, 1
    %p115 = por %p113, %p114
    %p117 = scmp.ne.s32.totalorder %s100, %s116
    %p118 = scmp.eq.s32.totalorder %s17, 0
    %p119 = por %p117, %p118
    %s121 = sadd.s32 %s120, 1
    %p124 = scmp.eq.s32.totalorder %s11, 1
    %p125 = scmp.ne.s32.totalorder %s120, %s122
    %p126 = scmp.eq.s32.totalorder %s11, 0
    %p127 = por %p125, %p126
    %p128 = scmp.ne.s32.totalorder %s120, %s122
    %p129 = scmp.eq.s32.totalorder %s16, 1
    %p130 = por %p128, %p129
    %p131 = scmp.ne.s32.totalorder %s122, %s123
    %p132 = scmp.eq.s32.totalorder %s16, 0
    %p133 = por %p131, %p132
    %p134 = scmp.ne.s32.totalorder %s122, %s123
    %p135 = scmp.eq.s32.totalorder %s17, 1
    %p136 = por %p134, %p135
    %p138 = scmp.ne.s32.totalorder %s123, %s137
    %p139 = scmp.eq.s32.totalorder %s17, 0
    %p140 = por %p138, %p139
    %s142 = sadd.s32 %s141, 1
    %p145 = scmp.eq.s32.totalorder %s11, 1
    %p146 = scmp.ne.s32.totalorder %s141, %s143
    %p147 = scmp.eq.s32.totalorder %s11, 0
    %p148 = por %p146, %p147
    %p149 = scmp.ne.s32.totalorder %s141, %s143
    %p150 = scmp.eq.s32.totalorder %s16, 1
    %p151 = por %p149, %p150
    %p152 = scmp.ne.s32.totalorder %s143, %s144
    %p153 = scmp.eq.s32.totalorder %s16, 0
    %p154 = por %p152, %p153
    %p155 = scmp.ne.s32.totalorder %s143, %s144
    %p156 = scmp.eq.s32.totalorder %s17, 1
    %p157 = por %p155, %p156
    %p159 = scmp.ne.s32.totalorder %s144, %s158
    %p160 = scmp.eq.s32.totalorder %s17, 0
    %p161 = por %p159, %p160
    %s162 = ssub.s32 %s18, %s37
    %s163 = ssub.s32 %s19, %s33
    %s164 = sor.u32 %s162, %s163
    %p165 = scmp.eq.s32.totalorder %s164, 0
    %s167 = sadd.s32 %s166, 1
    %s168 = scalar_select %p165, %s166, %s167
    %p171 = pneg %p165
    %p172 = scmp.eq.s32.totalorder %s11, 1
    %p173 = por %p171, %p172
    %p174 = scmp.ne.s32.totalorder %s166, %s169
    %p175 = scmp.eq.s32.totalorder %s11, 0
    %p176 = por %p174, %p175
    %p177 = scmp.ne.s32.totalorder %s166, %s169
    %p178 = scmp.eq.s32.totalorder %s16, 1
    %p179 = por %p177, %p178
    %p180 = scmp.ne.s32.totalorder %s169, %s170
    %p181 = scmp.eq.s32.totalorder %s16, 0
    %p182 = por %p180, %p181
    %p183 = scmp.ne.s32.totalorder %s169, %s170
    %p184 = scmp.eq.s32.totalorder %s17, 1
    %p185 = por %p183, %p184
    %p187 = scmp.ne.s32.totalorder %s170, %s186
    %p188 = scmp.eq.s32.totalorder %s17, 0
    %p189 = por %p187, %p188
    %p190 = scmp.le.s32.totalorder 1, %s11
    %p191 = scmp.lt.s32.totalorder %s11, 3
    %p192 = pnand %p190, %p191
    %p193 = pneg %p192
    // Predicated region
    $region9: #{siglip_vision_forward.13} parent=5 // pred_check
      _
    $region10: #{siglip_vision_forward.13} parent=5 // pred_check_branch
      %195 = sbr.rel (%p192) target = $region12
    $region11: #{siglip_vision_forward.13} parent=5 // pred_region
      %s196 = ssub.s32 %s11, 1
      // Predicated region
      $region13: #{siglip_vision_forward.13} parent=11 // pred_check
        %p197 = pneg %p86
      $region14: #{siglip_vision_forward.13} parent=11 // pred_check_branch
        %199 = sbr.rel (%p197) target = $region16
      $region15: #{siglip_vision_forward.13} parent=11 // pred_region
        %s200 = smul.u32 16, %s23
        %s201 = smul.u32 3, %s22
        %p202 = scmp.lt.s32.totalorder %s200, 15
        %s203 = scalar_select %p202, %s200, 15
        %p204 = scmp.lt.s32.totalorder %s201, 2
        %s205 = scalar_select %p204, %s201, 2
        %s206 = smul.addr %s203, 3
        %s207 = sadd.s32 %s205, %s206
        %s208 = smul.addr %s207, 4
        %s209 = scalar_lea.vmem %s1, %s208
        %s210 = smul.u32 16, %s23
        %s211 = smul.u32 3, %s22
      $region16: #{siglip_vision_forward.13} parent=11 // pred_fallthru
        _
      // Predicated region
      $region17: #{siglip_vision_forward.13} parent=11 // pred_check
        %p212 = pneg %p112
      $region18: #{siglip_vision_forward.13} parent=11 // pred_check_branch
        %214 = sbr.rel (%p212) target = $region20
      $region19: #{siglip_vision_forward.13} parent=11 // pred_region
        %s215 = smul.u32 3, %s22
        %p216 = scmp.lt.s32.totalorder %s215, 2
        %s217 = scalar_select %p216, %s215, 2
        %s218 = scalar_lea.vmem %s2, %s217
        %s219 = smul.u32 3, %s22
      $region20: #{siglip_vision_forward.13} parent=11 // pred_fallthru
        _
      // Predicated region
      $region21: #{siglip_vision_forward.13} parent=11 // pred_check
        %p220 = pneg %p133
      $region22: #{siglip_vision_forward.13} parent=11 // pred_check_branch
        %222 = sbr.rel (%p220) target = $region24
      $region23: #{siglip_vision_forward.13} parent=11 // pred_region
        _
      $region24: #{siglip_vision_forward.13} parent=11 // pred_fallthru
        _
      // Predicated region
      $region25: #{siglip_vision_forward.13} parent=11 // pred_check
        %p223 = pneg %p154
      $region26: #{siglip_vision_forward.13} parent=11 // pred_check_branch
        %225 = sbr.rel (%p223) target = $region28
      $region27: #{siglip_vision_forward.13} parent=11 // pred_region
        _
      $region28: #{siglip_vision_forward.13} parent=11 // pred_fallthru
        _
    $region12: #{siglip_vision_forward.13} parent=5 // pred_fallthru
      _
    %p226 = scmp.lt.s32.totalorder %s11, 2
    // Predicated region
    $region29: #{siglip_vision_forward.13} parent=5 // pred_check
      %p227 = pneg %p226
    $region30: #{siglip_vision_forward.13} parent=5 // pred_check_branch
      %229 = sbr.rel (%p227) target = $region32
    $region31: #{siglip_vision_forward.13} parent=5 // pred_region
      // Predicated region
      $region33: #{siglip_vision_forward.13} parent=31 // pred_check
        %p230 = pneg %p52
      $region34: #{siglip_vision_forward.13} parent=31 // pred_check_branch
        %232 = sbr.rel (%p230) target = $region36
      $region35: #{siglip_vision_forward.13} parent=31 // pred_region
        %s233 = smul.u32 4, %s18
        %p234 = scmp.lt.s32.totalorder %s233, 7
        %s235 = scalar_select %p234, %s233, 7
        %p236 = scmp.lt.s32.totalorder %s20, 0
        %s237 = scalar_select %p236, %s20, 0
        %s238 = sadd.s32 %s237, %s235
        %s239 = smul.addr %s238, 4
        %s240 = scalar_lea.vmem %s0, %s239
        %s241 = smul.u32 4, %s18
      $region36: #{siglip_vision_forward.13} parent=31 // pred_fallthru
        _
    $region32: #{siglip_vision_forward.13} parent=5 // pred_fallthru
      _
    %p242 = scmp.le.s32.totalorder 1, %s11
    %p243 = scmp.lt.s32.totalorder %s11, 3
    %p244 = pnand %p242, %p243
    %p245 = pneg %p244
    // Predicated region
    $region37: #{siglip_vision_forward.13} parent=5 // pred_check
      _
    $region38: #{siglip_vision_forward.13} parent=5 // pred_check_branch
      %247 = sbr.rel (%p244) target = $region40
    $region39: #{siglip_vision_forward.13} parent=5 // pred_region
      %s248 = ssub.s32 %s11, 1
      %s249 = smul.u32 4, %s21
      %p250 = scmp.lt.s32.totalorder %s249, 7
      %s251 = scalar_select %p250, %s249, 7
      %p252 = scmp.lt.s32.totalorder %s23, 0
      %s253 = scalar_select %p252, %s23, 0
      %s254 = sadd.s32 %s253, %s251
      %s255 = smul.addr %s254, 4
      %s256 = scalar_lea.vmem %s0, %s255
      %p257 = pneg %p58
      %p258 = pneg %p55
      %s259 = smul.u32 16, %s23
      %s260 = smul.u32 3, %s22
      %p261 = scmp.lt.s32.totalorder %s259, 15
      %s262 = scalar_select %p261, %s259, 15
      %p263 = scmp.lt.s32.totalorder %s260, 2
      %s264 = scalar_select %p263, %s260, 2
      %s265 = smul.addr %s262, 3
      %s266 = sadd.s32 %s264, %s265
      %s267 = smul.addr %s266, 4
      %s268 = scalar_lea.vmem %s1, %s267
      %p269 = pneg %p86
      %p270 = pneg %p83
      %s271 = smul.u32 3, %s22
      %p272 = scmp.lt.s32.totalorder %s271, 2
      %s273 = scalar_select %p272, %s271, 2
      %s274 = scalar_lea.vmem %s2, %s273
      %p275 = pneg %p112
      %p276 = pneg %p109
      %p277 = pneg %p133
      %p278 = pneg %p130
      %p279 = pneg %p154
      %p280 = pneg %p151
      %p281 = pneg %p182
      %p282 = pneg %p179
      %s283 = smul.u32 4, %s21
      %s284 = smul.u32 3, %s22
      %p285 = scmp.lt.s32.totalorder %s283, 7
      %s286 = scalar_select %p285, %s283, 7
      %p287 = scmp.lt.s32.totalorder %s284, 2
      %s288 = scalar_select %p287, %s284, 2
      %s289 = smul.addr %s286, 3
      %s290 = sadd.s32 %s288, %s289
      %s291 = smul.addr %s290, 4
      %s292 = scalar_lea.vmem %s5, %s291
      %s293 = smul.u32 4, %s21
      %p294 = scmp.lt.s32.totalorder %s293, 7
      %s295 = scalar_select %p294, %s293, 7
      %p296 = scmp.lt.s32.totalorder %s23, 0
      %s297 = scalar_select %p296, %s23, 0
      %s298 = sadd.s32 %s297, %s295
      %s299 = smul.addr %s298, 4
      %s300 = scalar_lea.vmem %s0, %s299
      %s301 = smul.u32 4, %s21
      %s302 = smul.u32 16, %s23
      %s303 = smul.u32 3, %s22
      %p304 = scmp.lt.s32.totalorder %s302, 15
      %s305 = scalar_select %p304, %s302, 15
      %p306 = scmp.lt.s32.totalorder %s303, 2
      %s307 = scalar_select %p306, %s303, 2
      %s308 = smul.addr %s305, 3
      %s309 = sadd.s32 %s307, %s308
      %s310 = smul.addr %s309, 4
      %s311 = scalar_lea.vmem %s1, %s310
      %s312 = smul.u32 16, %s23
      %s313 = smul.u32 3, %s22
      %s314 = smul.u32 3, %s22
      %p315 = scmp.lt.s32.totalorder %s314, 2
      %s316 = scalar_select %p315, %s314, 2
      %s317 = scalar_lea.vmem %s2, %s316
      %s318 = smul.u32 3, %s22
      %s319 = smul.u32 4, %s21
      %s320 = smul.u32 3, %s22
      %p321 = scmp.lt.s32.totalorder %s319, 7
      %s322 = scalar_select %p321, %s319, 7
      %p323 = scmp.lt.s32.totalorder %s320, 2
      %s324 = scalar_select %p323, %s320, 2
      %s325 = smul.addr %s322, 3
      %s326 = sadd.s32 %s324, %s325
      %s327 = smul.addr %s326, 4
      %s328 = scalar_lea.vmem %s5, %s327
      %s329 = smul.u32 4, %s21
      %s330 = smul.u32 3, %s22
      %v331 = vld [vmem:[%s300] sm:$0xf]
      %v332 = vld [vmem:[%s300 + $0x4] sm:$0xf]
      %v333 = vld [vmem:[%s300 + $0x8] sm:$0xf]
      %v334 = vld [vmem:[%s300 + $0xc] sm:$0xf]
      %v335 = vunpack.c.l.bf16 %v331
      %v336 = vunpack.c.l.bf16 %v332
      %v337 = vunpack.c.l.bf16 %v333
      %v338 = vunpack.c.l.bf16 %v334
      %339 = vadd.xlane.f32.xlu0 %v335
      %v340 = vpop.xlane.xlu0 %339
      %341 = vadd.xlane.f32.xlu0 %v336
      %v342 = vpop.xlane.xlu0 %341
      %343 = vadd.xlane.f32.xlu0 %v337
      %v344 = vpop.xlane.xlu0 %343
      %345 = vadd.xlane.f32.xlu0 %v338
      %v346 = vpop.xlane.xlu0 %345
      %v347 = vrcp.pop 128.0
      %v348 = vmul.f32 128.0, %v347
      %v349 = vsub.f32 1.0, %v348
      %v350 = vmul.f32 %v347, %v349
      %v351 = vadd.f32 %v347, %v350
      %vm352 = vweird.f32 %v347
      %v353 = vsel %vm352, %v347, %v351
      %v354 = vmul.f32 %v340, %v353
      %v355 = vmul.f32 %v342, %v353
      %v356 = vmul.f32 %v344, %v353
      %v357 = vmul.f32 %v346, %v353
      %v358 = vsub.f32 %v335, %v354
      %v359 = vsub.f32 %v336, %v355
      %v360 = vsub.f32 %v337, %v356
      %v361 = vsub.f32 %v338, %v357
      %v362 = vmul.f32 %v358, %v358
      %v363 = vmul.f32 %v359, %v359
      %v364 = vmul.f32 %v360, %v360
      %v365 = vmul.f32 %v361, %v361
      %366 = vadd.xlane.f32.xlu0 %v362
      %v367 = vpop.xlane.xlu0 %366
      %368 = vadd.xlane.f32.xlu0 %v363
      %v369 = vpop.xlane.xlu0 %368
      %370 = vadd.xlane.f32.xlu0 %v364
      %v371 = vpop.xlane.xlu0 %370
      %372 = vadd.xlane.f32.xlu0 %v365
      %v373 = vpop.xlane.xlu0 %372
      %v374 = vmul.f32 %v367, %v353
      %v375 = vmul.f32 %v369, %v353
      %v376 = vmul.f32 %v371, %v353
      %v377 = vmul.f32 %v373, %v353
      %v378 = vadd.f32 %v374, 1e-06
      %v379 = vadd.f32 %v375, 1e-06
      %v380 = vadd.f32 %v376, 1e-06
      %v381 = vadd.f32 %v377, 1e-06
      %v382 = vrsqrt.pop %v378
      %v383 = vmul.f32 %v382, %v378
      %v384 = vmul.f32 %v383, %v382
      %v385 = vmul.f32 0.5, %v384
      %v386 = vsub.f32 1.5, %v385
      %v387 = vmul.f32 %v382, %v386
      %vm388 = vweird.f32 %v378
      %vm389 = vweird.f32 %v382
      %vm390 = vmor %vm388, %vm389
      %v391 = vsel %vm390, %v382, %v387
      %v392 = vrsqrt.pop %v379
      %v393 = vmul.f32 %v392, %v379
      %v394 = vmul.f32 %v393, %v392
      %v395 = vmul.f32 0.5, %v394
      %v396 = vsub.f32 1.5, %v395
      %v397 = vmul.f32 %v392, %v396
      %vm398 = vweird.f32 %v379
      %vm399 = vweird.f32 %v392
      %vm400 = vmor %vm398, %vm399
      %v401 = vsel %vm400, %v392, %v397
      %v402 = vrsqrt.pop %v380
      %v403 = vmul.f32 %v402, %v380
      %v404 = vmul.f32 %v403, %v402
      %v405 = vmul.f32 0.5, %v404
      %v406 = vsub.f32 1.5, %v405
      %v407 = vmul.f32 %v402, %v406
      %vm408 = vweird.f32 %v380
      %vm409 = vweird.f32 %v402
      %vm410 = vmor %vm408, %vm409
      %v411 = vsel %vm410, %v402, %v407
      %v412 = vrsqrt.pop %v381
      %v413 = vmul.f32 %v412, %v381
      %v414 = vmul.f32 %v413, %v412
      %v415 = vmul.f32 0.5, %v414
      %v416 = vsub.f32 1.5, %v415
      %v417 = vmul.f32 %v412, %v416
      %vm418 = vweird.f32 %v381
      %vm419 = vweird.f32 %v412
      %vm420 = vmor %vm418, %vm419
      %v421 = vsel %vm420, %v412, %v417
      %v422 = vmul.f32 %v358, %v391
      %v423 = vmul.f32 %v359, %v401
      %v424 = vmul.f32 %v360, %v411
      %v425 = vmul.f32 %v361, %v421
      %v426 = vld [vmem:[%s3] sm:$0x1]
      %v427 = vunpack.c.l.bf16 %v426
      %v428 = vperm.slane %v427, 0
      %v429 = vmul.f32 %v422, %v428
      %v430 = vmul.f32 %v423, %v428
      %v431 = vmul.f32 %v424, %v428
      %v432 = vmul.f32 %v425, %v428
      %v433 = vld [vmem:[%s4] sm:$0x1]
      %v434 = vunpack.c.l.bf16 %v433
      %v435 = vperm.slane %v434, 0
      %v436 = vadd.f32 %v429, %v435
      %v437 = vadd.f32 %v430, %v435
      %v438 = vadd.f32 %v431, %v435
      %v439 = vadd.f32 %v432, %v435
      %v440 = vpack.c.bf16 %v437, %v436
      %v441 = vpack.c.bf16 %v439, %v438
      %v442 = vld [vmem:[%s311] sm:$0xff]
      %v443 = vld [vmem:[%s311 + $0x8] sm:$0xf]
      %v444 = vld [vmem:[%s311 + $0xc] sm:$0xff]
      %v445 = vld [vmem:[%s311 + $0x14] sm:$0xf]
      %v446 = vld [vmem:[%s311 + $0x18] sm:$0xff]
      %v447 = vld [vmem:[%s311 + $0x20] sm:$0xf]
      %v448 = vld [vmem:[%s311 + $0x24] sm:$0xff]
      %v449 = vld [vmem:[%s311 + $0x2c] sm:$0xf]
      %v450 = vld [vmem:[%s311 + $0x30] sm:$0xff]
      %v451 = vld [vmem:[%s311 + $0x38] sm:$0xf]
      %v452 = vld [vmem:[%s311 + $0x3c] sm:$0xff]
      %v453 = vld [vmem:[%s311 + $0x44] sm:$0xf]
      %v454 = vld [vmem:[%s311 + $0x48] sm:$0xff]
      %v455 = vld [vmem:[%s311 + $0x50] sm:$0xf]
      %v456 = vld [vmem:[%s311 + $0x54] sm:$0xff]
      %v457 = vld [vmem:[%s311 + $0x5c] sm:$0xf]
      %v458 = vld [vmem:[%s311 + $0x60] sm:$0xff]
      %v459 = vld [vmem:[%s311 + $0x68] sm:$0xf]
      %v460 = vld [vmem:[%s311 + $0x6c] sm:$0xff]
      %v461 = vld [vmem:[%s311 + $0x74] sm:$0xf]
      %v462 = vld [vmem:[%s311 + $0x78] sm:$0xff]
      %v463 = vld [vmem:[%s311 + $0x80] sm:$0xf]
      %v464 = vld [vmem:[%s311 + $0x84] sm:$0xff]
      %v465 = vld [vmem:[%s311 + $0x8c] sm:$0xf]
      %v466 = vld [vmem:[%s311 + $0x90] sm:$0xff]
      %v467 = vld [vmem:[%s311 + $0x98] sm:$0xf]
      %v468 = vld [vmem:[%s311 + $0x9c] sm:$0xff]
      %v469 = vld [vmem:[%s311 + $0xa4] sm:$0xf]
      %v470 = vld [vmem:[%s311 + $0xa8] sm:$0xff]
      %v471 = vld [vmem:[%s311 + $0xb0] sm:$0xf]
      %v472 = vld [vmem:[%s311 + $0xb4] sm:$0xff]
      %v473 = vld [vmem:[%s311 + $0xbc] sm:$0xf]
      %v474 = vld [vmem:[%s317] sm:$0x7]
      %v475 = vunpack.c.l.bf16 %v474
      %v477 = vperm.slane %v475, 0
      %v478 = vperm.slane %v475, 2
      %v479 = vperm.slane %v475, 4
      %v483 = vperm.slane %v477, 0
      %v484 = vperm.slane %v478, 0
      %v485 = vperm.slane %v479, 0
      %v518 = vunpack.c.l.b16 %v442
      %v519 = vunpack.c.h.b16 %v442
      %v520 = vunpack.c.l.b16 %v443
      %v521 = vunpack.c.l.b16 %v444
      %v522 = vunpack.c.h.b16 %v444
      %v523 = vunpack.c.l.b16 %v445
      %v524 = vunpack.c.l.b16 %v446
      %v525 = vunpack.c.h.b16 %v446
      %v526 = vunpack.c.l.b16 %v447
      %v527 = vunpack.c.l.b16 %v448
      %v528 = vunpack.c.h.b16 %v448
      %v529 = vunpack.c.l.b16 %v449
      %v530 = vunpack.c.l.b16 %v450
      %v531 = vunpack.c.h.b16 %v450
      %v532 = vunpack.c.l.b16 %v451
      %v533 = vunpack.c.l.b16 %v452
      %v534 = vunpack.c.h.b16 %v452
      %v535 = vunpack.c.l.b16 %v453
      %v536 = vunpack.c.l.b16 %v454
      %v537 = vunpack.c.h.b16 %v454
      %v538 = vunpack.c.l.b16 %v455
      %v539 = vunpack.c.l.b16 %v456
      %v540 = vunpack.c.h.b16 %v456
      %v541 = vunpack.c.l.b16 %v457
      %v542 = vunpack.c.l.b16 %v458
      %v543 = vunpack.c.h.b16 %v458
      %v544 = vunpack.c.l.b16 %v459
      %v545 = vunpack.c.l.b16 %v460
      %v546 = vunpack.c.h.b16 %v460
      %v547 = vunpack.c.l.b16 %v461
      %v548 = vunpack.c.l.b16 %v462
      %v549 = vunpack.c.h.b16 %v462
      %v550 = vunpack.c.l.b16 %v463
      %v551 = vunpack.c.l.b16 %v464
      %v552 = vunpack.c.h.b16 %v464
      %v553 = vunpack.c.l.b16 %v465
      %v554 = vunpack.c.l.b16 %v466
      %v555 = vunpack.c.h.b16 %v466
      %v556 = vunpack.c.l.b16 %v467
      %v557 = vunpack.c.l.b16 %v468
      %v558 = vunpack.c.h.b16 %v468
      %v559 = vunpack.c.l.b16 %v469
      %v560 = vunpack.c.l.b16 %v470
      %v561 = vunpack.c.h.b16 %v470
      %v562 = vunpack.c.l.b16 %v471
      %v563 = vunpack.c.l.b16 %v472
      %v564 = vunpack.c.h.b16 %v472
      %v565 = vunpack.c.l.b16 %v473
      %v566 = vpack.c.b16 %v521, %v518
      %v567 = vpack.c.b16 %v522, %v519
      %v568 = vpack.c.b16 %v523, %v520
      %v569 = vpack.c.b16 %v527, %v524
      %v570 = vpack.c.b16 %v528, %v525
      %v571 = vpack.c.b16 %v529, %v526
      %v572 = vpack.c.b16 %v533, %v530
      %v573 = vpack.c.b16 %v534, %v531
      %v574 = vpack.c.b16 %v535, %v532
      %v575 = vpack.c.b16 %v539, %v536
      %v576 = vpack.c.b16 %v540, %v537
      %v577 = vpack.c.b16 %v541, %v538
      %v578 = vpack.c.b16 %v545, %v542
      %v579 = vpack.c.b16 %v546, %v543
      %v580 = vpack.c.b16 %v547, %v544
      %v581 = vpack.c.b16 %v551, %v548
      %v582 = vpack.c.b16 %v552, %v549
      %v583 = vpack.c.b16 %v553, %v550
      %v584 = vpack.c.b16 %v557, %v554
      %v585 = vpack.c.b16 %v558, %v555
      %v586 = vpack.c.b16 %v559, %v556
      %v587 = vpack.c.b16 %v563, %v560
      %v588 = vpack.c.b16 %v564, %v561
      %v589 = vpack.c.b16 %v565, %v562
      %614 = vmatpush.bf16.msra.mxu0 %v587
      %615 = vmatpush.bf16.msra.mxu0 %v584
      %616 = vmatpush.bf16.msra.mxu0 %v581
      %617 = vmatpush.bf16.msra.mxu0 %v578
      %618 = vmatpush.bf16.msra.mxu0 %v575
      %619 = vmatpush.bf16.msra.mxu0 %v572
      %620 = vmatpush.bf16.msra.mxu0 %v569
      %621 = vmatpush.bf16.msra.mxu0 %v566
      %622 = vmatmul.bf16.gmra.mxu0 %v440
      %v623 = vpop.f32.mrf.mxu0
      %v624 = vadd.f32 %v483, %v623
      %v625 = vpop.f32.mrf.mxu0
      %v626 = vadd.f32 %v483, %v625
      %627 = vmatmul.bf16.gmra.mxu0 %v441
      %v628 = vpop.f32.mrf.mxu0
      %v629 = vadd.f32 %v483, %v628
      %v630 = vpop.f32.mrf.mxu0
      %v631 = vadd.f32 %v483, %v630
      %632 = vdwg.mxu0
      %633 = vmatpush.bf16.msra.mxu0 %v588
      %634 = vmatpush.bf16.msra.mxu0 %v585
      %635 = vmatpush.bf16.msra.mxu0 %v582
      %636 = vmatpush.bf16.msra.mxu0 %v579
      %637 = vmatpush.bf16.msra.mxu0 %v576
      %638 = vmatpush.bf16.msra.mxu0 %v573
      %639 = vmatpush.bf16.msra.mxu0 %v570
      %640 = vmatpush.bf16.msra.mxu0 %v567
      %641 = vmatmul.bf16.gmra.mxu0 %v440
      %v642 = vpop.f32.mrf.mxu0
      %v643 = vadd.f32 %v484, %v642
      %v644 = vpop.f32.mrf.mxu0
      %v645 = vadd.f32 %v484, %v644
      %646 = vmatmul.bf16.gmra.mxu0 %v441
      %v647 = vpop.f32.mrf.mxu0
      %v648 = vadd.f32 %v484, %v647
      %v649 = vpop.f32.mrf.mxu0
      %v650 = vadd.f32 %v484, %v649
      %651 = vdwg.mxu0
      %652 = vmatpush.bf16.msra.mxu0 %v589
      %653 = vmatpush.bf16.msra.mxu0 %v586
      %654 = vmatpush.bf16.msra.mxu0 %v583
      %655 = vmatpush.bf16.msra.mxu0 %v580
      %656 = vmatpush.bf16.msra.mxu0 %v577
      %657 = vmatpush.bf16.msra.mxu0 %v574
      %658 = vmatpush.bf16.msra.mxu0 %v571
      %659 = vmatpush.bf16.msra.mxu0 %v568
      %660 = vmatmul.bf16.gmra.mxu0 %v440
      %v661 = vpop.f32.mrf.mxu0
      %v662 = vadd.f32 %v485, %v661
      %v663 = vpop.f32.mrf.mxu0
      %v664 = vadd.f32 %v485, %v663
      %665 = vmatmul.bf16.gmra.mxu0 %v441
      %v666 = vpop.f32.mrf.mxu0
      %v667 = vadd.f32 %v485, %v666
      %v668 = vpop.f32.mrf.mxu0
      %v669 = vadd.f32 %v485, %v668
      %670 = vdwg.mxu0
      %v671 = vpack.c.bf16 %v643, %v624
      %v672 = vpack.c.bf16 %v662, %v662
      %v673 = vpack.c.bf16 %v645, %v626
      %v674 = vpack.c.bf16 %v664, %v664
      %v675 = vpack.c.bf16 %v648, %v629
      %v676 = vpack.c.bf16 %v667, %v667
      %v677 = vpack.c.bf16 %v650, %v631
      %v678 = vpack.c.bf16 %v669, %v669
      %679 = vst [vmem:[%s328] sm:$0xff] %v671
      %680 = vst [vmem:[%s328 + $0x8] sm:$0xf] %v672
      %681 = vst [vmem:[%s328 + $0xc] sm:$0xff] %v673
      %682 = vst [vmem:[%s328 + $0x14] sm:$0xf] %v674
      %683 = vst [vmem:[%s328 + $0x18] sm:$0xff] %v675
      %684 = vst [vmem:[%s328 + $0x20] sm:$0xf] %v676
      %685 = vst [vmem:[%s328 + $0x24] sm:$0xff] %v677
      %686 = vst [vmem:[%s328 + $0x2c] sm:$0xf] %v678
      %s687 = smul.u32 4, %s21
      %s688 = smul.u32 3, %s22
      %p689 = scmp.lt.s32.totalorder %s687, 7
      %s690 = scalar_select %p689, %s687, 7
      %p691 = scmp.lt.s32.totalorder %s688, 2
      %s692 = scalar_select %p691, %s688, 2
      %s693 = smul.addr %s690, 3
      %s694 = sadd.s32 %s692, %s693
      %s695 = smul.addr %s694, 4
      %s696 = scalar_lea.vmem %s5, %s695
      // Predicated region
      $region41: #{siglip_vision_forward.13} parent=39 // pred_check
        %p697 = pneg %p179
      $region42: #{siglip_vision_forward.13} parent=39 // pred_check_branch
        %699 = sbr.rel (%p697) target = $region44
      $region43: #{siglip_vision_forward.13} parent=39 // pred_region
        %s700 = smul.u32 4, %s21
        %s701 = smul.u32 3, %s22
      $region44: #{siglip_vision_forward.13} parent=39 // pred_fallthru
        _
    $region40: #{siglip_vision_forward.13} parent=5 // pred_fallthru
      _
    %p702 = scmp.le.s32.totalorder 2, %s11
    // Predicated region
    $region45: #{siglip_vision_forward.13} parent=5 // pred_check
      %p703 = pneg %p702
    $region46: #{siglip_vision_forward.13} parent=5 // pred_check_branch
      %705 = sbr.rel (%p703) target = $region48
    $region47: #{siglip_vision_forward.13} parent=5 // pred_region
      %s706 = ssub.s32 %s11, 2
      // Predicated region
      $region49: #{siglip_vision_forward.13} parent=47 // pred_check
        %p707 = pneg %p185
      $region50: #{siglip_vision_forward.13} parent=47 // pred_check_branch
        %709 = sbr.rel (%p707) target = $region52
      $region51: #{siglip_vision_forward.13} parent=47 // pred_region
        %s710 = smul.u32 4, %s24
        %s711 = smul.u32 3, %s25
        %p712 = scmp.lt.s32.totalorder %s710, 7
        %s713 = scalar_select %p712, %s710, 7
        %p714 = scmp.lt.s32.totalorder %s711, 2
        %s715 = scalar_select %p714, %s711, 2
        %s716 = smul.addr %s713, 3
        %s717 = sadd.s32 %s715, %s716
        %s718 = smul.addr %s717, 4
        %s719 = scalar_lea.vmem %s5, %s718
      $region52: #{siglip_vision_forward.13} parent=47 // pred_fallthru
        _
    $region48: #{siglip_vision_forward.13} parent=5 // pred_fallthru
      _
  $region6: #{siglip_vision_forward.13} parent=0 // loop_footer
    %s15 = sadd.s32 1, %s11
  $region7: #{siglip_vision_forward.13} parent=0 // loop_footer_branch
    %10 = sbr.rel target = $region3
  $region8: #{siglip_vision_forward.13} parent=0 // loop_exit
    _

// kernel: siglip_vision_forward.15
$region0: #{siglip_vision_forward.15}
  #allocation0 [shape = 'u32[]', space=smem, size = 0x4, offset = 0x4, fixed_abs, tag = 'smem constant byte address 0x4 - core index']
  #allocation1 [shape = 'u32[72,128]{1,0:T(1,128)}', space=vmem, size = 0x9000, scoped, tag = 'internal scratch']
  %s0 = inlined_call_operand.vmem [shape: bf16[64,128], index: 0, kind: input, shape index: {}]
  %s1 = inlined_call_operand.vmem [shape: bf16[128,128], index: 1, kind: input, shape index: {}]
  %s2 = inlined_call_operand.vmem [shape: bf16[1,128], index: 2, kind: input, shape index: {}]
  %s3 = inlined_call_operand.vmem [shape: bf16[64,128], index: 3, kind: input, shape index: {}]
  %s4 = inlined_call_operand.vmem [shape: bf16[64,128], index: 4, kind: output, shape index: {}]
  %s5 = sld [smem:[#allocation0]]
  $region49: #{siglip_vision_forward.15} parent=0
    _
  %s7 = ssub.s32 1, %s5
  %s8 = scalar_select 0, %s7, %s5
  loop: start=0, step=1, limit=4
  $region2: #{siglip_vision_forward.15} parent=0 // loop_pre_header
    _
  $region3: #{siglip_vision_forward.15} parent=0 // loop_header
    %s10 = sphi 0, %s14
    %p11 = scmp.ge.s32.totalorder %s10, 4
    %s17 = sphi 0, %s36
    %s18 = sphi 0, %s32
    %s19 = sphi 0, %s28
    %s20 = sphi 0, %s17
    %s21 = sphi 0, %s18
    %s22 = sphi 0, %s19
    %s23 = sphi 0, %s20
    %s24 = sphi 0, %s21
    %s25 = sphi 0, %s22
    %s41 = sphi 0, %s43
    %s44 = sphi 0, %s41
    %s45 = sphi 0, %s44
    %s61 = sphi 0, %s45
    %s69 = sphi 0, %s71
    %s72 = sphi 0, %s69
    %s73 = sphi 0, %s72
    %s89 = sphi 0, %s73
    %s95 = sphi 0, %s97
    %s98 = sphi 0, %s95
    %s99 = sphi 0, %s98
    %s115 = sphi 0, %s99
    %s123 = sphi 0, %s125
    %s126 = sphi 0, %s123
    %s127 = sphi 0, %s126
    %s143 = sphi 0, %s127
    %s151 = sphi 0, %s153
    %s154 = sphi 0, %s151
    %s155 = sphi 0, %s154
    %s171 = sphi 0, %s155
  $region4: #{siglip_vision_forward.15} parent=0 // loop_header_branch
    %13 = sbr.rel (%p11) target = $region8
  $region5: #{siglip_vision_forward.15} parent=0 // loop_body
    %s15 = ssub.s32 %s10, 1
    %s16 = ssub.s32 %s10, 2
    %s26 = sadd.s32 1, %s19
    %p27 = scmp.ge.s32.totalorder %s26, 1
    %s28 = scalar_select %p27, 0, %s26
    %s29 = sadd.s32 1, %s18
    %s30 = scalar_select %p27, %s29, %s18
    %p31 = scmp.ge.s32.totalorder %s30, 1
    %s32 = scalar_select %p31, 0, %s30
    %s33 = sadd.s32 1, %s17
    %s34 = scalar_select %p31, %s33, %s17
    %p35 = scmp.ge.s32.totalorder %s34, 2
    %s36 = scalar_select %p35, 0, %s34
    %s37 = ssub.s32 %s17, %s36
    %s38 = ssub.s32 %s19, %s28
    %s39 = sor.u32 %s37, %s38
    %p40 = scmp.eq.s32.totalorder %s39, 0
    %s42 = sadd.s32 %s41, 1
    %s43 = scalar_select %p40, %s41, %s42
    %p46 = pneg %p40
    %p47 = scmp.eq.s32.totalorder %s10, 1
    %p48 = por %p46, %p47
    %p49 = scmp.ne.s32.totalorder %s41, %s44
    %p50 = scmp.eq.s32.totalorder %s10, 0
    %p51 = por %p49, %p50
    %p52 = scmp.ne.s32.totalorder %s41, %s44
    %p53 = scmp.eq.s32.totalorder %s15, 1
    %p54 = por %p52, %p53
    %p55 = scmp.ne.s32.totalorder %s44, %s45
    %p56 = scmp.eq.s32.totalorder %s15, 0
    %p57 = por %p55, %p56
    %p58 = scmp.ne.s32.totalorder %s44, %s45
    %p59 = scmp.eq.s32.totalorder %s16, 1
    %p60 = por %p58, %p59
    %p62 = scmp.ne.s32.totalorder %s45, %s61
    %p63 = scmp.eq.s32.totalorder %s16, 0
    %p64 = por %p62, %p63
    %s65 = ssub.s32 %s19, %s28
    %s66 = ssub.s32 %s18, %s32
    %s67 = sor.u32 %s65, %s66
    %p68 = scmp.eq.s32.totalorder %s67, 0
    %s70 = sadd.s32 %s69, 1
    %s71 = scalar_select %p68, %s69, %s70
    %p74 = pneg %p68
    %p75 = scmp.eq.s32.totalorder %s10, 1
    %p76 = por %p74, %p75
    %p77 = scmp.ne.s32.totalorder %s69, %s72
    %p78 = scmp.eq.s32.totalorder %s10, 0
    %p79 = por %p77, %p78
    %p80 = scmp.ne.s32.totalorder %s69, %s72
    %p81 = scmp.eq.s32.totalorder %s15, 1
    %p82 = por %p80, %p81
    %p83 = scmp.ne.s32.totalorder %s72, %s73
    %p84 = scmp.eq.s32.totalorder %s15, 0
    %p85 = por %p83, %p84
    %p86 = scmp.ne.s32.totalorder %s72, %s73
    %p87 = scmp.eq.s32.totalorder %s16, 1
    %p88 = por %p86, %p87
    %p90 = scmp.ne.s32.totalorder %s73, %s89
    %p91 = scmp.eq.s32.totalorder %s16, 0
    %p92 = por %p90, %p91
    %s93 = ssub.s32 %s18, %s32
    %p94 = scmp.eq.s32.totalorder %s93, 0
    %s96 = sadd.s32 %s95, 1
    %s97 = scalar_select %p94, %s95, %s96
    %p100 = pneg %p94
    %p101 = scmp.eq.s32.totalorder %s10, 1
    %p102 = por %p100, %p101
    %p103 = scmp.ne.s32.totalorder %s95, %s98
    %p104 = scmp.eq.s32.totalorder %s10, 0
    %p105 = por %p103, %p104
    %p106 = scmp.ne.s32.totalorder %s95, %s98
    %p107 = scmp.eq.s32.totalorder %s15, 1
    %p108 = por %p106, %p107
    %p109 = scmp.ne.s32.totalorder %s98, %s99
    %p110 = scmp.eq.s32.totalorder %s15, 0
    %p111 = por %p109, %p110
    %p112 = scmp.ne.s32.totalorder %s98, %s99
    %p113 = scmp.eq.s32.totalorder %s16, 1
    %p114 = por %p112, %p113
    %p116 = scmp.ne.s32.totalorder %s99, %s115
    %p117 = scmp.eq.s32.totalorder %s16, 0
    %p118 = por %p116, %p117
    %s119 = ssub.s32 %s17, %s36
    %s120 = ssub.s32 %s18, %s32
    %s121 = sor.u32 %s119, %s120
    %p122 = scmp.eq.s32.totalorder %s121, 0
    %s124 = sadd.s32 %s123, 1
    %s125 = scalar_select %p122, %s123, %s124
    %p128 = pneg %p122
    %p129 = scmp.eq.s32.totalorder %s10, 1
    %p130 = por %p128, %p129
    %p131 = scmp.ne.s32.totalorder %s123, %s126
    %p132 = scmp.eq.s32.totalorder %s10, 0
    %p133 = por %p131, %p132
    %p134 = scmp.ne.s32.totalorder %s123, %s126
    %p135 = scmp.eq.s32.totalorder %s15, 1
    %p136 = por %p134, %p135
    %p137 = scmp.ne.s32.totalorder %s126, %s127
    %p138 = scmp.eq.s32.totalorder %s15, 0
    %p139 = por %p137, %p138
    %p140 = scmp.ne.s32.totalorder %s126, %s127
    %p141 = scmp.eq.s32.totalorder %s16, 1
    %p142 = por %p140, %p141
    %p144 = scmp.ne.s32.totalorder %s127, %s143
    %p145 = scmp.eq.s32.totalorder %s16, 0
    %p146 = por %p144, %p145
    %s147 = ssub.s32 %s17, %s36
    %s148 = ssub.s32 %s18, %s32
    %s149 = sor.u32 %s147, %s148
    %p150 = scmp.eq.s32.totalorder %s149, 0
    %s152 = sadd.s32 %s151, 1
    %s153 = scalar_select %p150, %s151, %s152
    %p156 = pneg %p150
    %p157 = scmp.eq.s32.totalorder %s10, 1
    %p158 = por %p156, %p157
    %p159 = scmp.ne.s32.totalorder %s151, %s154
    %p160 = scmp.eq.s32.totalorder %s10, 0
    %p161 = por %p159, %p160
    %p162 = scmp.ne.s32.totalorder %s151, %s154
    %p163 = scmp.eq.s32.totalorder %s15, 1
    %p164 = por %p162, %p163
    %p165 = scmp.ne.s32.totalorder %s154, %s155
    %p166 = scmp.eq.s32.totalorder %s15, 0
    %p167 = por %p165, %p166
    %p168 = scmp.ne.s32.totalorder %s154, %s155
    %p169 = scmp.eq.s32.totalorder %s16, 1
    %p170 = por %p168, %p169
    %p172 = scmp.ne.s32.totalorder %s155, %s171
    %p173 = scmp.eq.s32.totalorder %s16, 0
    %p174 = por %p172, %p173
    %p175 = scmp.le.s32.totalorder 1, %s10
    %p176 = scmp.lt.s32.totalorder %s10, 3
    %p177 = pnand %p175, %p176
    %p178 = pneg %p177
    // Predicated region
    $region9: #{siglip_vision_forward.15} parent=5 // pred_check
      _
    $region10: #{siglip_vision_forward.15} parent=5 // pred_check_branch
      %180 = sbr.rel (%p177) target = $region12
    $region11: #{siglip_vision_forward.15} parent=5 // pred_region
      %s181 = ssub.s32 %s10, 1
      // Predicated region
      $region13: #{siglip_vision_forward.15} parent=11 // pred_check
        %p182 = pneg %p85
      $region14: #{siglip_vision_forward.15} parent=11 // pred_check_branch
        %184 = sbr.rel (%p182) target = $region16
      $region15: #{siglip_vision_forward.15} parent=11 // pred_region
        %s185 = smul.u32 16, %s22
        %p186 = scmp.lt.s32.totalorder %s185, 15
        %s187 = scalar_select %p186, %s185, 15
        %p188 = scmp.lt.s32.totalorder %s21, 0
        %s189 = scalar_select %p188, %s21, 0
        %s190 = sadd.s32 %s189, %s187
        %s191 = smul.addr %s190, 4
        %s192 = scalar_lea.vmem %s1, %s191
        %s193 = smul.u32 16, %s22
      $region16: #{siglip_vision_forward.15} parent=11 // pred_fallthru
        _
      // Predicated region
      $region17: #{siglip_vision_forward.15} parent=11 // pred_check
        %p194 = pneg %p111
      $region18: #{siglip_vision_forward.15} parent=11 // pred_check_branch
        %196 = sbr.rel (%p194) target = $region20
      $region19: #{siglip_vision_forward.15} parent=11 // pred_region
        %p197 = scmp.lt.s32.totalorder %s21, 0
        %s198 = scalar_select %p197, %s21, 0
        %s199 = scalar_lea.vmem %s2, %s198
      $region20: #{siglip_vision_forward.15} parent=11 // pred_fallthru
        _
    $region12: #{siglip_vision_forward.15} parent=5 // pred_fallthru
      _
    %p200 = scmp.lt.s32.totalorder %s10, 2
    // Predicated region
    $region21: #{siglip_vision_forward.15} parent=5 // pred_check
      %p201 = pneg %p200
    $region22: #{siglip_vision_forward.15} parent=5 // pred_check_branch
      %203 = sbr.rel (%p201) target = $region24
    $region23: #{siglip_vision_forward.15} parent=5 // pred_region
      // Predicated region
      $region25: #{siglip_vision_forward.15} parent=23 // pred_check
        %p204 = pneg %p51
      $region26: #{siglip_vision_forward.15} parent=23 // pred_check_branch
        %206 = sbr.rel (%p204) target = $region28
      $region27: #{siglip_vision_forward.15} parent=23 // pred_region
        %s207 = smul.u32 4, %s17
        %p208 = scmp.lt.s32.totalorder %s207, 7
        %s209 = scalar_select %p208, %s207, 7
        %p210 = scmp.lt.s32.totalorder %s19, 0
        %s211 = scalar_select %p210, %s19, 0
        %s212 = sadd.s32 %s211, %s209
        %s213 = smul.addr %s212, 4
        %s214 = scalar_lea.vmem %s0, %s213
        %s215 = smul.u32 4, %s17
      $region28: #{siglip_vision_forward.15} parent=23 // pred_fallthru
        _
      // Predicated region
      $region29: #{siglip_vision_forward.15} parent=23 // pred_check
        %p216 = pneg %p133
      $region30: #{siglip_vision_forward.15} parent=23 // pred_check_branch
        %218 = sbr.rel (%p216) target = $region32
      $region31: #{siglip_vision_forward.15} parent=23 // pred_region
        %s219 = smul.u32 4, %s17
        %p220 = scmp.lt.s32.totalorder %s219, 7
        %s221 = scalar_select %p220, %s219, 7
        %p222 = scmp.lt.s32.totalorder %s18, 0
        %s223 = scalar_select %p222, %s18, 0
        %s224 = sadd.s32 %s223, %s221
        %s225 = smul.addr %s224, 4
        %s226 = scalar_lea.vmem %s3, %s225
        %s227 = smul.u32 4, %s17
      $region32: #{siglip_vision_forward.15} parent=23 // pred_fallthru
        _
    $region24: #{siglip_vision_forward.15} parent=5 // pred_fallthru
      _
    %p228 = scmp.le.s32.totalorder 1, %s10
    %p229 = scmp.lt.s32.totalorder %s10, 3
    %p230 = pnand %p228, %p229
    %p231 = pneg %p230
    // Predicated region
    $region33: #{siglip_vision_forward.15} parent=5 // pred_check
      _
    $region34: #{siglip_vision_forward.15} parent=5 // pred_check_branch
      %233 = sbr.rel (%p230) target = $region36
    $region35: #{siglip_vision_forward.15} parent=5 // pred_region
      %s234 = ssub.s32 %s10, 1
      %s235 = smul.u32 4, %s20
      %p236 = scmp.lt.s32.totalorder %s235, 7
      %s237 = scalar_select %p236, %s235, 7
      %p238 = scmp.lt.s32.totalorder %s22, 0
      %s239 = scalar_select %p238, %s22, 0
      %s240 = sadd.s32 %s239, %s237
      %s241 = smul.addr %s240, 4
      %s242 = scalar_lea.vmem %s0, %s241
      %p243 = pneg %p57
      %p244 = pneg %p54
      %s245 = smul.u32 16, %s22
      %p246 = scmp.lt.s32.totalorder %s245, 15
      %s247 = scalar_select %p246, %s245, 15
      %p248 = scmp.lt.s32.totalorder %s21, 0
      %s249 = scalar_select %p248, %s21, 0
      %s250 = sadd.s32 %s249, %s247
      %s251 = smul.addr %s250, 4
      %s252 = scalar_lea.vmem %s1, %s251
      %p253 = pneg %p85
      %p254 = pneg %p82
      %p255 = scmp.lt.s32.totalorder %s21, 0
      %s256 = scalar_select %p255, %s21, 0
      %s257 = scalar_lea.vmem %s2, %s256
      %p258 = pneg %p111
      %p259 = pneg %p108
      %s260 = smul.u32 4, %s20
      %p261 = scmp.lt.s32.totalorder %s260, 7
      %s262 = scalar_select %p261, %s260, 7
      %p263 = scmp.lt.s32.totalorder %s21, 0
      %s264 = scalar_select %p263, %s21, 0
      %s265 = sadd.s32 %s264, %s262
      %s266 = smul.addr %s265, 4
      %s267 = scalar_lea.vmem %s3, %s266
      %p268 = pneg %p139
      %p269 = pneg %p136
      %p270 = pneg %p167
      %p271 = pneg %p164
      %s272 = smul.u32 4, %s20
      %p273 = scmp.lt.s32.totalorder %s272, 7
      %s274 = scalar_select %p273, %s272, 7
      %p275 = scmp.lt.s32.totalorder %s21, 0
      %s276 = scalar_select %p275, %s21, 0
      %s277 = sadd.s32 %s276, %s274
      %s278 = smul.addr %s277, 4
      %s279 = scalar_lea.vmem %s4, %s278
      %s280 = smul.u32 4, %s20
      %p281 = scmp.lt.s32.totalorder %s280, 7
      %s282 = scalar_select %p281, %s280, 7
      %p283 = scmp.lt.s32.totalorder %s22, 0
      %s284 = scalar_select %p283, %s22, 0
      %s285 = sadd.s32 %s284, %s282
      %s286 = smul.addr %s285, 4
      %s287 = scalar_lea.vmem %s0, %s286
      %s288 = smul.u32 4, %s20
      %s289 = smul.u32 16, %s22
      %p290 = scmp.lt.s32.totalorder %s289, 15
      %s291 = scalar_select %p290, %s289, 15
      %p292 = scmp.lt.s32.totalorder %s21, 0
      %s293 = scalar_select %p292, %s21, 0
      %s294 = sadd.s32 %s293, %s291
      %s295 = smul.addr %s294, 4
      %s296 = scalar_lea.vmem %s1, %s295
      %s297 = smul.u32 16, %s22
      %p298 = scmp.lt.s32.totalorder %s21, 0
      %s299 = scalar_select %p298, %s21, 0
      %s300 = scalar_lea.vmem %s2, %s299
      %s301 = smul.u32 4, %s20
      %p302 = scmp.lt.s32.totalorder %s301, 7
      %s303 = scalar_select %p302, %s301, 7
      %p304 = scmp.lt.s32.totalorder %s21, 0
      %s305 = scalar_select %p304, %s21, 0
      %s306 = sadd.s32 %s305, %s303
      %s307 = smul.addr %s306, 4
      %s308 = scalar_lea.vmem %s3, %s307
      %s309 = smul.u32 4, %s20
      %s310 = smul.u32 4, %s20
      %p311 = scmp.lt.s32.totalorder %s310, 7
      %s312 = scalar_select %p311, %s310, 7
      %p313 = scmp.lt.s32.totalorder %s21, 0
      %s314 = scalar_select %p313, %s21, 0
      %s315 = sadd.s32 %s314, %s312
      %s316 = smul.addr %s315, 4
      %s317 = scalar_lea.vmem %s4, %s316
      %s318 = smul.u32 4, %s20
      %v319 = vld [vmem:[%s287] sm:$0xf]
      %v320 = vld [vmem:[%s287 + $0x4] sm:$0xf]
      %v321 = vld [vmem:[%s287 + $0x8] sm:$0xf]
      %v322 = vld [vmem:[%s287 + $0xc] sm:$0xf]
      %v323 = vld [vmem:[%s296] sm:$0xf]
      %v324 = vld [vmem:[%s296 + $0x4] sm:$0xf]
      %v325 = vld [vmem:[%s296 + $0x8] sm:$0xf]
      %v326 = vld [vmem:[%s296 + $0xc] sm:$0xf]
      %v327 = vld [vmem:[%s296 + $0x10] sm:$0xf]
      %v328 = vld [vmem:[%s296 + $0x14] sm:$0xf]
      %v329 = vld [vmem:[%s296 + $0x18] sm:$0xf]
      %v330 = vld [vmem:[%s296 + $0x1c] sm:$0xf]
      %v331 = vld [vmem:[%s296 + $0x20] sm:$0xf]
      %v332 = vld [vmem:[%s296 + $0x24] sm:$0xf]
      %v333 = vld [vmem:[%s296 + $0x28] sm:$0xf]
      %v334 = vld [vmem:[%s296 + $0x2c] sm:$0xf]
      %v335 = vld [vmem:[%s296 + $0x30] sm:$0xf]
      %v336 = vld [vmem:[%s296 + $0x34] sm:$0xf]
      %v337 = vld [vmem:[%s296 + $0x38] sm:$0xf]
      %v338 = vld [vmem:[%s296 + $0x3c] sm:$0xf]
      %v339 = vld [vmem:[%s300] sm:$0x1]
      %v340 = vunpack.c.l.bf16 %v339
      %v341 = vperm.slane %v340, 0
      %v346 = vunpack.c.l.b16 %v319
      %v347 = vunpack.c.l.b16 %v320
      %v348 = vunpack.c.l.b16 %v321
      %v349 = vunpack.c.l.b16 %v322
      %v350 = vpack.c.b16 %v347, %v346
      %v351 = vpack.c.b16 %v349, %v348
      %v370 = vunpack.c.l.b16 %v323
      %v371 = vunpack.c.l.b16 %v324
      %v372 = vunpack.c.l.b16 %v325
      %v373 = vunpack.c.l.b16 %v326
      %v374 = vunpack.c.l.b16 %v327
      %v375 = vunpack.c.l.b16 %v328
      %v376 = vunpack.c.l.b16 %v329
      %v377 = vunpack.c.l.b16 %v330
      %v378 = vunpack.c.l.b16 %v331
      %v379 = vunpack.c.l.b16 %v332
      %v380 = vunpack.c.l.b16 %v333
      %v381 = vunpack.c.l.b16 %v334
      %v382 = vunpack.c.l.b16 %v335
      %v383 = vunpack.c.l.b16 %v336
      %v384 = vunpack.c.l.b16 %v337
      %v385 = vunpack.c.l.b16 %v338
      %v386 = vpack.c.b16 %v371, %v370
      %v387 = vpack.c.b16 %v373, %v372
      %v388 = vpack.c.b16 %v375, %v374
      %v389 = vpack.c.b16 %v377, %v376
      %v390 = vpack.c.b16 %v379, %v378
      %v391 = vpack.c.b16 %v381, %v380
      %v392 = vpack.c.b16 %v383, %v382
      %v393 = vpack.c.b16 %v385, %v384
      %402 = vmatpush.bf16.msra.mxu0 %v393
      %403 = vmatpush.bf16.msra.mxu0 %v392
      %404 = vmatpush.bf16.msra.mxu0 %v391
      %405 = vmatpush.bf16.msra.mxu0 %v390
      %406 = vmatpush.bf16.msra.mxu0 %v389
      %407 = vmatpush.bf16.msra.mxu0 %v388
      %408 = vmatpush.bf16.msra.mxu0 %v387
      %409 = vmatpush.bf16.msra.mxu0 %v386
      %410 = vmatmul.bf16.gmra.mxu0 %v350
      %v411 = vpop.f32.mrf.mxu0
      %v412 = vadd.f32 %v341, %v411
      %v413 = vpop.f32.mrf.mxu0
      %v414 = vadd.f32 %v341, %v413
      %415 = vmatmul.bf16.gmra.mxu0 %v351
      %v416 = vpop.f32.mrf.mxu0
      %v417 = vadd.f32 %v341, %v416
      %v418 = vpop.f32.mrf.mxu0
      %v419 = vadd.f32 %v341, %v418
      %420 = vdwg.mxu0
      %v421 = vld [vmem:[%s308] sm:$0xf]
      %v422 = vld [vmem:[%s308 + $0x4] sm:$0xf]
      %v423 = vld [vmem:[%s308 + $0x8] sm:$0xf]
      %v424 = vld [vmem:[%s308 + $0xc] sm:$0xf]
      %v425 = vunpack.c.l.bf16 %v421
      %v426 = vunpack.c.l.bf16 %v422
      %v427 = vunpack.c.l.bf16 %v423
      %v428 = vunpack.c.l.bf16 %v424
      %v429 = vadd.f32 %v412, %v425
      %v430 = vadd.f32 %v414, %v426
      %v431 = vadd.f32 %v417, %v427
      %v432 = vadd.f32 %v419, %v428
      %v433 = vpack.c.bf16 %v429, %v429
      %v434 = vpack.c.bf16 %v430, %v430
      %v435 = vpack.c.bf16 %v431, %v431
      %v436 = vpack.c.bf16 %v432, %v432
      %437 = vst [vmem:[%s317] sm:$0xf] %v433
      %438 = vst [vmem:[%s317 + $0x4] sm:$0xf] %v434
      %439 = vst [vmem:[%s317 + $0x8] sm:$0xf] %v435
      %440 = vst [vmem:[%s317 + $0xc] sm:$0xf] %v436
      %s441 = smul.u32 4, %s20
      %p442 = scmp.lt.s32.totalorder %s441, 7
      %s443 = scalar_select %p442, %s441, 7
      %p444 = scmp.lt.s32.totalorder %s21, 0
      %s445 = scalar_select %p444, %s21, 0
      %s446 = sadd.s32 %s445, %s443
      %s447 = smul.addr %s446, 4
      %s448 = scalar_lea.vmem %s4, %s447
      // Predicated region
      $region37: #{siglip_vision_forward.15} parent=35 // pred_check
        %p449 = pneg %p164
      $region38: #{siglip_vision_forward.15} parent=35 // pred_check_branch
        %451 = sbr.rel (%p449) target = $region40
      $region39: #{siglip_vision_forward.15} parent=35 // pred_region
        %s452 = smul.u32 4, %s20
      $region40: #{siglip_vision_forward.15} parent=35 // pred_fallthru
        _
    $region36: #{siglip_vision_forward.15} parent=5 // pred_fallthru
      _
    %p453 = scmp.le.s32.totalorder 2, %s10
    // Predicated region
    $region41: #{siglip_vision_forward.15} parent=5 // pred_check
      %p454 = pneg %p453
    $region42: #{siglip_vision_forward.15} parent=5 // pred_check_branch
      %456 = sbr.rel (%p454) target = $region44
    $region43: #{siglip_vision_forward.15} parent=5 // pred_region
      %s457 = ssub.s32 %s10, 2
      // Predicated region
      $region45: #{siglip_vision_forward.15} parent=43 // pred_check
        %p458 = pneg %p170
      $region46: #{siglip_vision_forward.15} parent=43 // pred_check_branch
        %460 = sbr.rel (%p458) target = $region48
      $region47: #{siglip_vision_forward.15} parent=43 // pred_region
        %s461 = smul.u32 4, %s23
        %p462 = scmp.lt.s32.totalorder %s461, 7
        %s463 = scalar_select %p462, %s461, 7
        %p464 = scmp.lt.s32.totalorder %s24, 0
        %s465 = scalar_select %p464, %s24, 0
        %s466 = sadd.s32 %s465, %s463
        %s467 = smul.addr %s466, 4
        %s468 = scalar_lea.vmem %s4, %s467
      $region48: #{siglip_vision_forward.15} parent=43 // pred_fallthru
        _
    $region44: #{siglip_vision_forward.15} parent=5 // pred_fallthru
      _
  $region6: #{siglip_vision_forward.15} parent=0 // loop_footer
    %s14 = sadd.s32 1, %s10
  $region7: #{siglip_vision_forward.15} parent=0 // loop_footer_branch
    %9 = sbr.rel target = $region3
  $region8: #{siglip_vision_forward.15} parent=0 // loop_exit
    _

// kernel: siglip_vision_forward.14
$region0: #{siglip_vision_forward.14}
  #allocation0 [shape = 'u32[]', space=smem, size = 0x4, offset = 0x4, fixed_abs, tag = 'smem constant byte address 0x4 - core index']
  #allocation1 [shape = 'u32[72,128]{1,0:T(1,128)}', space=vmem, size = 0x9000, scoped, tag = 'internal scratch']
  %s0 = inlined_call_operand.vmem [shape: bf16[2,32,384], index: 0, kind: input, shape index: {}, may-alias: {0,1,2}]
  %s1 = inlined_call_operand.vmem [shape: bf16[2,32,384], index: 1, kind: input, shape index: {}, may-alias: {0,1,2}]
  %s2 = inlined_call_operand.vmem [shape: bf16[2,32,384], index: 2, kind: input, shape index: {}, may-alias: {0,1,2}]
  %s3 = inlined_call_operand.vmem [shape: bf16[2,32,128], index: 3, kind: output, shape index: {}]
  %s4 = sld [smem:[#allocation0]]
  $region168: #{siglip_vision_forward.14} parent=0
    _
  %s6 = ssub.s32 1, %s4
  %s7 = scalar_select 0, %s6, %s4
  $region1: #{siglip_vision_forward.14} parent=0
    #allocation2 [shape = 'u8[16384]{0}', space=vmem, size = 0x4000, scoped, tag = 'input window, operand 0']
    #allocation3 [shape = 'u8[16384]{0}', space=vmem, size = 0x4000, scoped, tag = 'input window, operand 1']
    #allocation4 [shape = 'u8[16384]{0}', space=vmem, size = 0x4000, scoped, tag = 'input window, operand 2']
    loop: start=0, step=1, limit=4
    $region2: #{siglip_vision_forward.14} parent=1 // loop_pre_header
      _
    $region3: #{siglip_vision_forward.14} parent=1 // loop_header
      %s9 = sphi 0, %s13
      %p10 = scmp.ge.s32.totalorder %s9, 4
      %s16 = sphi 0, %s28
      %s17 = sphi 0, %s24
      %s18 = sphi 0, %s16
      %s19 = sphi 0, %s17
      %s20 = sphi 0, %s18
      %s21 = sphi 0, %s19
      %s33 = sphi 0, %s35
      %s36 = sphi 0, %s33
      %s37 = sphi 0, %s36
      %s53 = sphi 0, %s37
      %s63 = sphi 0, %s65
      %s66 = sphi 0, %s63
      %s67 = sphi 0, %s66
      %s83 = sphi 0, %s67
      %s93 = sphi 0, %s95
      %s96 = sphi 0, %s93
      %s97 = sphi 0, %s96
      %s113 = sphi 0, %s97
      %s121 = sphi 0, %s123
      %s124 = sphi 0, %s121
      %s125 = sphi 0, %s124
      %s141 = sphi 0, %s125
    $region4: #{siglip_vision_forward.14} parent=1 // loop_header_branch
      %12 = sbr.rel (%p10) target = $region8
    $region5: #{siglip_vision_forward.14} parent=1 // loop_body
      %s14 = ssub.s32 %s9, 1
      %s15 = ssub.s32 %s9, 2
      %s22 = sadd.s32 1, %s17
      %p23 = scmp.ge.s32.totalorder %s22, 1
      %s24 = scalar_select %p23, 0, %s22
      %s25 = sadd.s32 1, %s16
      %s26 = scalar_select %p23, %s25, %s16
      %p27 = scmp.ge.s32.totalorder %s26, 2
      %s28 = scalar_select %p27, 0, %s26
      %s29 = ssub.s32 %s16, %s28
      %s30 = ssub.s32 %s17, %s24
      %s31 = sor.u32 %s29, %s30
      %p32 = scmp.eq.s32.totalorder %s31, 0
      %s34 = sadd.s32 %s33, 1
      %s35 = scalar_select %p32, %s33, %s34
      %p38 = pneg %p32
      %p39 = scmp.eq.s32.totalorder %s9, 1
      %p40 = por %p38, %p39
      %p41 = scmp.ne.s32.totalorder %s33, %s36
      %p42 = scmp.eq.s32.totalorder %s9, 0
      %p43 = por %p41, %p42
      %p44 = scmp.ne.s32.totalorder %s33, %s36
      %p45 = scmp.eq.s32.totalorder %s14, 1
      %p46 = por %p44, %p45
      %p47 = scmp.ne.s32.totalorder %s36, %s37
      %p48 = scmp.eq.s32.totalorder %s14, 0
      %p49 = por %p47, %p48
      %p50 = scmp.ne.s32.totalorder %s36, %s37
      %p51 = scmp.eq.s32.totalorder %s15, 1
      %p52 = por %p50, %p51
      %p54 = scmp.ne.s32.totalorder %s37, %s53
      %p55 = scmp.eq.s32.totalorder %s15, 0
      %p56 = por %p54, %p55
      %s57 = sadd.s32 %s17, 1
      %s58 = sadd.s32 %s24, 1
      %s59 = ssub.s32 %s16, %s28
      %s60 = ssub.s32 %s57, %s58
      %s61 = sor.u32 %s59, %s60
      %p62 = scmp.eq.s32.totalorder %s61, 0
      %s64 = sadd.s32 %s63, 1
      %s65 = scalar_select %p62, %s63, %s64
      %p68 = pneg %p62
      %p69 = scmp.eq.s32.totalorder %s9, 1
      %p70 = por %p68, %p69
      %p71 = scmp.ne.s32.totalorder %s63, %s66
      %p72 = scmp.eq.s32.totalorder %s9, 0
      %p73 = por %p71, %p72
      %p74 = scmp.ne.s32.totalorder %s63, %s66
      %p75 = scmp.eq.s32.totalorder %s14, 1
      %p76 = por %p74, %p75
      %p77 = scmp.ne.s32.totalorder %s66, %s67
      %p78 = scmp.eq.s32.totalorder %s14, 0
      %p79 = por %p77, %p78
      %p80 = scmp.ne.s32.totalorder %s66, %s67
      %p81 = scmp.eq.s32.totalorder %s15, 1
      %p82 = por %p80, %p81
      %p84 = scmp.ne.s32.totalorder %s67, %s83
      %p85 = scmp.eq.s32.totalorder %s15, 0
      %p86 = por %p84, %p85
      %s87 = sadd.s32 %s17, 2
      %s88 = sadd.s32 %s24, 2
      %s89 = ssub.s32 %s16, %s28
      %s90 = ssub.s32 %s87, %s88
      %s91 = sor.u32 %s89, %s90
      %p92 = scmp.eq.s32.totalorder %s91, 0
      %s94 = sadd.s32 %s93, 1
      %s95 = scalar_select %p92, %s93, %s94
      %p98 = pneg %p92
      %p99 = scmp.eq.s32.totalorder %s9, 1
      %p100 = por %p98, %p99
      %p101 = scmp.ne.s32.totalorder %s93, %s96
      %p102 = scmp.eq.s32.totalorder %s9, 0
      %p103 = por %p101, %p102
      %p104 = scmp.ne.s32.totalorder %s93, %s96
      %p105 = scmp.eq.s32.totalorder %s14, 1
      %p106 = por %p104, %p105
      %p107 = scmp.ne.s32.totalorder %s96, %s97
      %p108 = scmp.eq.s32.totalorder %s14, 0
      %p109 = por %p107, %p108
      %p110 = scmp.ne.s32.totalorder %s96, %s97
      %p111 = scmp.eq.s32.totalorder %s15, 1
      %p112 = por %p110, %p111
      %p114 = scmp.ne.s32.totalorder %s97, %s113
      %p115 = scmp.eq.s32.totalorder %s15, 0
      %p116 = por %p114, %p115
      %s117 = ssub.s32 %s16, %s28
      %s118 = ssub.s32 %s17, %s24
      %s119 = sor.u32 %s117, %s118
      %p120 = scmp.eq.s32.totalorder %s119, 0
      %s122 = sadd.s32 %s121, 1
      %s123 = scalar_select %p120, %s121, %s122
      %p126 = pneg %p120
      %p127 = scmp.eq.s32.totalorder %s9, 1
      %p128 = por %p126, %p127
      %p129 = scmp.ne.s32.totalorder %s121, %s124
      %p130 = scmp.eq.s32.totalorder %s9, 0
      %p131 = por %p129, %p130
      %p132 = scmp.ne.s32.totalorder %s121, %s124
      %p133 = scmp.eq.s32.totalorder %s14, 1
      %p134 = por %p132, %p133
      %p135 = scmp.ne.s32.totalorder %s124, %s125
      %p136 = scmp.eq.s32.totalorder %s14, 0
      %p137 = por %p135, %p136
      %p138 = scmp.ne.s32.totalorder %s124, %s125
      %p139 = scmp.eq.s32.totalorder %s15, 1
      %p140 = por %p138, %p139
      %p142 = scmp.ne.s32.totalorder %s125, %s141
      %p143 = scmp.eq.s32.totalorder %s15, 0
      %p144 = por %p142, %p143
      %p145 = scmp.le.s32.totalorder 1, %s9
      %p146 = scmp.lt.s32.totalorder %s9, 3
      %p147 = pnand %p145, %p146
      %p148 = pneg %p147
      // Predicated region
      $region9: #{siglip_vision_forward.14} parent=5 // pred_check
        _
      $region10: #{siglip_vision_forward.14} parent=5 // pred_check_branch
        %150 = sbr.rel (%p147) target = $region12
      $region11: #{siglip_vision_forward.14} parent=5 // pred_region
        %s151 = ssub.s32 %s9, 1
      $region12: #{siglip_vision_forward.14} parent=5 // pred_fallthru
        _
      %p152 = scmp.lt.s32.totalorder %s9, 2
      // Predicated region
      $region13: #{siglip_vision_forward.14} parent=5 // pred_check
        %p153 = pneg %p152
      $region14: #{siglip_vision_forward.14} parent=5 // pred_check_branch
        %155 = sbr.rel (%p153) target = $region16
      $region15: #{siglip_vision_forward.14} parent=5 // pred_region
        // Predicated region
        $region17: #{siglip_vision_forward.14} parent=15 // pred_check
          %p156 = pneg %p43
        $region18: #{siglip_vision_forward.14} parent=15 // pred_check_branch
          %158 = sbr.rel (%p156) target = $region20
        $region19: #{siglip_vision_forward.14} parent=15 // pred_region
          %s159 = sand.u32 %s33, 1
          %s160 = sand.u32 %s33, 1
          %s161 = smul.addr %s160, 16
          %s162 = scalar_lea.vmem [#allocation2], %s161
          %s163 = smul.addr %s16, 12
          %s164 = sadd.s32 %s17, %s163
          %s165 = smul.addr %s164, 4
          %s166 = scalar_lea.vmem %s0, %s165
          // Predicated region
          $region21: #{siglip_vision_forward.14} parent=19 // pred_check
            _
          $region22: #{siglip_vision_forward.14} parent=19 // pred_check_branch
            %168 = sbr.rel (0) target = $region24
          $region23: #{siglip_vision_forward.14} parent=19 // pred_region
            // Predicated region
            $region25: #{siglip_vision_forward.14} parent=23 // pred_check
              _
            $region26: #{siglip_vision_forward.14} parent=23 // pred_check_branch
              %170 = sbr.rel target = $region28
            $region27: #{siglip_vision_forward.14} parent=23 // pred_region
              // Predicated region
              $region40: #{siglip_vision_forward.14} parent=27 // pred_check
                _
              $region41: #{siglip_vision_forward.14} parent=27 // pred_check_branch
                %192 = sbr.rel (0) target = $region43
              $region42: #{siglip_vision_forward.14} parent=27 // pred_region
                loop: start=0, step=1, limit=1
                $region44: #{siglip_vision_forward.14} parent=42 // loop_pre_header
                  _
                $region45: #{siglip_vision_forward.14} parent=42 // loop_header
                  %s194 = sphi 0, %s198
                  %p195 = scmp.ge.s32.totalorder %s194, 1
                  %s199 = sphi %s166, %s166
                  %s200 = sphi %s162, %s162
                $region46: #{siglip_vision_forward.14} parent=42 // loop_header_branch
                  %197 = sbr.rel (%p195) target = $region50
                $region47: #{siglip_vision_forward.14} parent=42 // loop_body
                  _
                $region48: #{siglip_vision_forward.14} parent=42 // loop_footer
                  %s198 = sadd.s32 1, %s194
                $region49: #{siglip_vision_forward.14} parent=42 // loop_footer_branch
                  %193 = sbr.rel target = $region45
                $region50: #{siglip_vision_forward.14} parent=42 // loop_exit
                  _
                %s202 = ssub.s32 16, 1
                loop: start=0, step=1, limit=1
                $region51: #{siglip_vision_forward.14} parent=42 // loop_pre_header
                  _
                $region52: #{siglip_vision_forward.14} parent=42 // loop_header
                  %s204 = sphi 0, %s208
                  %p205 = scmp.ge.s32.totalorder %s204, 1
                  %s209 = sphi %s166, %s166
                  %s210 = sphi %s162, %s162
                $region53: #{siglip_vision_forward.14} parent=42 // loop_header_branch
                  %207 = sbr.rel (%p205) target = $region57
                $region54: #{siglip_vision_forward.14} parent=42 // loop_body
                  %v211 = vld [vmem:[%s209] sm:%s202]
                  %212 = vst [vmem:[%s210] sm:%s202] %v211
                  %v213 = vld [vmem:[%s209 + $0xc] sm:%s202]
                  %214 = vst [vmem:[%s210 + $0x4] sm:%s202] %v213
                  %v215 = vld [vmem:[%s209 + $0x18] sm:%s202]
                  %216 = vst [vmem:[%s210 + $0x8] sm:%s202] %v215
                  %v217 = vld [vmem:[%s209 + $0x24] sm:%s202]
                  %218 = vst [vmem:[%s210 + $0xc] sm:%s202] %v217
                $region55: #{siglip_vision_forward.14} parent=42 // loop_footer
                  %s208 = sadd.s32 1, %s204
                $region56: #{siglip_vision_forward.14} parent=42 // loop_footer_branch
                  %203 = sbr.rel target = $region52
                $region57: #{siglip_vision_forward.14} parent=42 // loop_exit
                  _
              $region43: #{siglip_vision_forward.14} parent=27 // pred_fallthru
                _
            $region28: #{siglip_vision_forward.14} parent=23 // pred_fallthru
              _
            // Predicated region
            $region29: #{siglip_vision_forward.14} parent=23 // pred_check
              _
            $region30: #{siglip_vision_forward.14} parent=23 // pred_check_branch
              %172 = sbr.rel (0) target = $region32
            $region31: #{siglip_vision_forward.14} parent=23 // pred_region
              %s174 = ssub.s32 16, 1
              loop: start=0, step=1, limit=1
              $region33: #{siglip_vision_forward.14} parent=31 // loop_pre_header
                _
              $region34: #{siglip_vision_forward.14} parent=31 // loop_header
                %s176 = sphi 0, %s180
                %p177 = scmp.ge.s32.totalorder %s176, 1
                %s181 = sphi %s166, %s166
                %s182 = sphi %s162, %s162
              $region35: #{siglip_vision_forward.14} parent=31 // loop_header_branch
                %179 = sbr.rel (%p177) target = $region39
              $region36: #{siglip_vision_forward.14} parent=31 // loop_body
                %v183 = vld [vmem:[%s181] sm:%s174]
                %184 = vst [vmem:[%s182] sm:%s174] %v183
                %v185 = vld [vmem:[%s181 + $0xc] sm:%s174]
                %186 = vst [vmem:[%s182 + $0x4] sm:%s174] %v185
                %v187 = vld [vmem:[%s181 + $0x18] sm:%s174]
                %188 = vst [vmem:[%s182 + $0x8] sm:%s174] %v187
                %v189 = vld [vmem:[%s181 + $0x24] sm:%s174]
                %190 = vst [vmem:[%s182 + $0xc] sm:%s174] %v189
              $region37: #{siglip_vision_forward.14} parent=31 // loop_footer
                %s180 = sadd.s32 1, %s176
              $region38: #{siglip_vision_forward.14} parent=31 // loop_footer_branch
                %175 = sbr.rel target = $region34
              $region39: #{siglip_vision_forward.14} parent=31 // loop_exit
                _
            $region32: #{siglip_vision_forward.14} parent=23 // pred_fallthru
              _
          $region24: #{siglip_vision_forward.14} parent=19 // pred_fallthru
            _
          %219 = vnop
        $region20: #{siglip_vision_forward.14} parent=15 // pred_fallthru
          _
        // Predicated region
        $region58: #{siglip_vision_forward.14} parent=15 // pred_check
          %p220 = pneg %p73
        $region59: #{siglip_vision_forward.14} parent=15 // pred_check_branch
          %222 = sbr.rel (%p220) target = $region61
        $region60: #{siglip_vision_forward.14} parent=15 // pred_region
          %s223 = sand.u32 %s63, 1
          %s224 = sand.u32 %s63, 1
          %s225 = smul.addr %s224, 16
          %s226 = scalar_lea.vmem [#allocation3], %s225
          %s227 = sadd.s32 %s17, 1
          %s228 = smul.addr %s16, 12
          %s229 = sadd.s32 %s227, %s228
          %s230 = smul.addr %s229, 4
          %s231 = scalar_lea.vmem %s1, %s230
          // Predicated region
          $region62: #{siglip_vision_forward.14} parent=60 // pred_check
            _
          $region63: #{siglip_vision_forward.14} parent=60 // pred_check_branch
            %233 = sbr.rel (0) target = $region65
          $region64: #{siglip_vision_forward.14} parent=60 // pred_region
            // Predicated region
            $region66: #{siglip_vision_forward.14} parent=64 // pred_check
              _
            $region67: #{siglip_vision_forward.14} parent=64 // pred_check_branch
              %235 = sbr.rel target = $region69
            $region68: #{siglip_vision_forward.14} parent=64 // pred_region
              // Predicated region
              $region81: #{siglip_vision_forward.14} parent=68 // pred_check
                _
              $region82: #{siglip_vision_forward.14} parent=68 // pred_check_branch
                %257 = sbr.rel (0) target = $region84
              $region83: #{siglip_vision_forward.14} parent=68 // pred_region
                loop: start=0, step=1, limit=1
                $region85: #{siglip_vision_forward.14} parent=83 // loop_pre_header
                  _
                $region86: #{siglip_vision_forward.14} parent=83 // loop_header
                  %s259 = sphi 0, %s263
                  %p260 = scmp.ge.s32.totalorder %s259, 1
                  %s264 = sphi %s231, %s231
                  %s265 = sphi %s226, %s226
                $region87: #{siglip_vision_forward.14} parent=83 // loop_header_branch
                  %262 = sbr.rel (%p260) target = $region91
                $region88: #{siglip_vision_forward.14} parent=83 // loop_body
                  _
                $region89: #{siglip_vision_forward.14} parent=83 // loop_footer
                  %s263 = sadd.s32 1, %s259
                $region90: #{siglip_vision_forward.14} parent=83 // loop_footer_branch
                  %258 = sbr.rel target = $region86
                $region91: #{siglip_vision_forward.14} parent=83 // loop_exit
                  _
                %s267 = ssub.s32 16, 1
                loop: start=0, step=1, limit=1
                $region92: #{siglip_vision_forward.14} parent=83 // loop_pre_header
                  _
                $region93: #{siglip_vision_forward.14} parent=83 // loop_header
                  %s269 = sphi 0, %s273
                  %p270 = scmp.ge.s32.totalorder %s269, 1
                  %s274 = sphi %s231, %s231
                  %s275 = sphi %s226, %s226
                $region94: #{siglip_vision_forward.14} parent=83 // loop_header_branch
                  %272 = sbr.rel (%p270) target = $region98
                $region95: #{siglip_vision_forward.14} parent=83 // loop_body
                  %v276 = vld [vmem:[%s274] sm:%s267]
                  %277 = vst [vmem:[%s275] sm:%s267] %v276
                  %v278 = vld [vmem:[%s274 + $0xc] sm:%s267]
                  %279 = vst [vmem:[%s275 + $0x4] sm:%s267] %v278
                  %v280 = vld [vmem:[%s274 + $0x18] sm:%s267]
                  %281 = vst [vmem:[%s275 + $0x8] sm:%s267] %v280
                  %v282 = vld [vmem:[%s274 + $0x24] sm:%s267]
                  %283 = vst [vmem:[%s275 + $0xc] sm:%s267] %v282
                $region96: #{siglip_vision_forward.14} parent=83 // loop_footer
                  %s273 = sadd.s32 1, %s269
                $region97: #{siglip_vision_forward.14} parent=83 // loop_footer_branch
                  %268 = sbr.rel target = $region93
                $region98: #{siglip_vision_forward.14} parent=83 // loop_exit
                  _
              $region84: #{siglip_vision_forward.14} parent=68 // pred_fallthru
                _
            $region69: #{siglip_vision_forward.14} parent=64 // pred_fallthru
              _
            // Predicated region
            $region70: #{siglip_vision_forward.14} parent=64 // pred_check
              _
            $region71: #{siglip_vision_forward.14} parent=64 // pred_check_branch
              %237 = sbr.rel (0) target = $region73
            $region72: #{siglip_vision_forward.14} parent=64 // pred_region
              %s239 = ssub.s32 16, 1
              loop: start=0, step=1, limit=1
              $region74: #{siglip_vision_forward.14} parent=72 // loop_pre_header
                _
              $region75: #{siglip_vision_forward.14} parent=72 // loop_header
                %s241 = sphi 0, %s245
                %p242 = scmp.ge.s32.totalorder %s241, 1
                %s246 = sphi %s231, %s231
                %s247 = sphi %s226, %s226
              $region76: #{siglip_vision_forward.14} parent=72 // loop_header_branch
                %244 = sbr.rel (%p242) target = $region80
              $region77: #{siglip_vision_forward.14} parent=72 // loop_body
                %v248 = vld [vmem:[%s246] sm:%s239]
                %249 = vst [vmem:[%s247] sm:%s239] %v248
                %v250 = vld [vmem:[%s246 + $0xc] sm:%s239]
                %251 = vst [vmem:[%s247 + $0x4] sm:%s239] %v250
                %v252 = vld [vmem:[%s246 + $0x18] sm:%s239]
                %253 = vst [vmem:[%s247 + $0x8] sm:%s239] %v252
                %v254 = vld [vmem:[%s246 + $0x24] sm:%s239]
                %255 = vst [vmem:[%s247 + $0xc] sm:%s239] %v254
              $region78: #{siglip_vision_forward.14} parent=72 // loop_footer
                %s245 = sadd.s32 1, %s241
              $region79: #{siglip_vision_forward.14} parent=72 // loop_footer_branch
                %240 = sbr.rel target = $region75
              $region80: #{siglip_vision_forward.14} parent=72 // loop_exit
                _
            $region73: #{siglip_vision_forward.14} parent=64 // pred_fallthru
              _
          $region65: #{siglip_vision_forward.14} parent=60 // pred_fallthru
            _
          %284 = vnop
        $region61: #{siglip_vision_forward.14} parent=15 // pred_fallthru
          _
        // Predicated region
        $region99: #{siglip_vision_forward.14} parent=15 // pred_check
          %p285 = pneg %p103
        $region100: #{siglip_vision_forward.14} parent=15 // pred_check_branch
          %287 = sbr.rel (%p285) target = $region102
        $region101: #{siglip_vision_forward.14} parent=15 // pred_region
          %s288 = sand.u32 %s93, 1
          %s289 = sand.u32 %s93, 1
          %s290 = smul.addr %s289, 16
          %s291 = scalar_lea.vmem [#allocation4], %s290
          %s292 = sadd.s32 %s17, 2
          %s293 = smul.addr %s16, 12
          %s294 = sadd.s32 %s292, %s293
          %s295 = smul.addr %s294, 4
          %s296 = scalar_lea.vmem %s2, %s295
          // Predicated region
          $region103: #{siglip_vision_forward.14} parent=101 // pred_check
            _
          $region104: #{siglip_vision_forward.14} parent=101 // pred_check_branch
            %298 = sbr.rel (0) target = $region106
          $region105: #{siglip_vision_forward.14} parent=101 // pred_region
            // Predicated region
            $region107: #{siglip_vision_forward.14} parent=105 // pred_check
              _
            $region108: #{siglip_vision_forward.14} parent=105 // pred_check_branch
              %300 = sbr.rel target = $region110
            $region109: #{siglip_vision_forward.14} parent=105 // pred_region
              // Predicated region
              $region122: #{siglip_vision_forward.14} parent=109 // pred_check
                _
              $region123: #{siglip_vision_forward.14} parent=109 // pred_check_branch
                %322 = sbr.rel (0) target = $region125
              $region124: #{siglip_vision_forward.14} parent=109 // pred_region
                loop: start=0, step=1, limit=1
                $region126: #{siglip_vision_forward.14} parent=124 // loop_pre_header
                  _
                $region127: #{siglip_vision_forward.14} parent=124 // loop_header
                  %s324 = sphi 0, %s328
                  %p325 = scmp.ge.s32.totalorder %s324, 1
                  %s329 = sphi %s296, %s296
                  %s330 = sphi %s291, %s291
                $region128: #{siglip_vision_forward.14} parent=124 // loop_header_branch
                  %327 = sbr.rel (%p325) target = $region132
                $region129: #{siglip_vision_forward.14} parent=124 // loop_body
                  _
                $region130: #{siglip_vision_forward.14} parent=124 // loop_footer
                  %s328 = sadd.s32 1, %s324
                $region131: #{siglip_vision_forward.14} parent=124 // loop_footer_branch
                  %323 = sbr.rel target = $region127
                $region132: #{siglip_vision_forward.14} parent=124 // loop_exit
                  _
                %s332 = ssub.s32 16, 1
                loop: start=0, step=1, limit=1
                $region133: #{siglip_vision_forward.14} parent=124 // loop_pre_header
                  _
                $region134: #{siglip_vision_forward.14} parent=124 // loop_header
                  %s334 = sphi 0, %s338
                  %p335 = scmp.ge.s32.totalorder %s334, 1
                  %s339 = sphi %s296, %s296
                  %s340 = sphi %s291, %s291
                $region135: #{siglip_vision_forward.14} parent=124 // loop_header_branch
                  %337 = sbr.rel (%p335) target = $region139
                $region136: #{siglip_vision_forward.14} parent=124 // loop_body
                  %v341 = vld [vmem:[%s339] sm:%s332]
                  %342 = vst [vmem:[%s340] sm:%s332] %v341
                  %v343 = vld [vmem:[%s339 + $0xc] sm:%s332]
                  %344 = vst [vmem:[%s340 + $0x4] sm:%s332] %v343
                  %v345 = vld [vmem:[%s339 + $0x18] sm:%s332]
                  %346 = vst [vmem:[%s340 + $0x8] sm:%s332] %v345
                  %v347 = vld [vmem:[%s339 + $0x24] sm:%s332]
                  %348 = vst [vmem:[%s340 + $0xc] sm:%s332] %v347
                $region137: #{siglip_vision_forward.14} parent=124 // loop_footer
                  %s338 = sadd.s32 1, %s334
                $region138: #{siglip_vision_forward.14} parent=124 // loop_footer_branch
                  %333 = sbr.rel target = $region134
                $region139: #{siglip_vision_forward.14} parent=124 // loop_exit
                  _
              $region125: #{siglip_vision_forward.14} parent=109 // pred_fallthru
                _
            $region110: #{siglip_vision_forward.14} parent=105 // pred_fallthru
              _
            // Predicated region
            $region111: #{siglip_vision_forward.14} parent=105 // pred_check
              _
            $region112: #{siglip_vision_forward.14} parent=105 // pred_check_branch
              %302 = sbr.rel (0) target = $region114
            $region113: #{siglip_vision_forward.14} parent=105 // pred_region
              %s304 = ssub.s32 16, 1
              loop: start=0, step=1, limit=1
              $region115: #{siglip_vision_forward.14} parent=113 // loop_pre_header
                _
              $region116: #{siglip_vision_forward.14} parent=113 // loop_header
                %s306 = sphi 0, %s310
                %p307 = scmp.ge.s32.totalorder %s306, 1
                %s311 = sphi %s296, %s296
                %s312 = sphi %s291, %s291
              $region117: #{siglip_vision_forward.14} parent=113 // loop_header_branch
                %309 = sbr.rel (%p307) target = $region121
              $region118: #{siglip_vision_forward.14} parent=113 // loop_body
                %v313 = vld [vmem:[%s311] sm:%s304]
                %314 = vst [vmem:[%s312] sm:%s304] %v313
                %v315 = vld [vmem:[%s311 + $0xc] sm:%s304]
                %316 = vst [vmem:[%s312 + $0x4] sm:%s304] %v315
                %v317 = vld [vmem:[%s311 + $0x18] sm:%s304]
                %318 = vst [vmem:[%s312 + $0x8] sm:%s304] %v317
                %v319 = vld [vmem:[%s311 + $0x24] sm:%s304]
                %320 = vst [vmem:[%s312 + $0xc] sm:%s304] %v319
              $region119: #{siglip_vision_forward.14} parent=113 // loop_footer
                %s310 = sadd.s32 1, %s306
              $region120: #{siglip_vision_forward.14} parent=113 // loop_footer_branch
                %305 = sbr.rel target = $region116
              $region121: #{siglip_vision_forward.14} parent=113 // loop_exit
                _
            $region114: #{siglip_vision_forward.14} parent=105 // pred_fallthru
              _
          $region106: #{siglip_vision_forward.14} parent=101 // pred_fallthru
            _
          %349 = vnop
        $region102: #{siglip_vision_forward.14} parent=15 // pred_fallthru
          _
      $region16: #{siglip_vision_forward.14} parent=5 // pred_fallthru
        _
      %p350 = scmp.le.s32.totalorder 1, %s9
      %p351 = scmp.lt.s32.totalorder %s9, 3
      %p352 = pnand %p350, %p351
      %p353 = pneg %p352
      // Predicated region
      $region140: #{siglip_vision_forward.14} parent=5 // pred_check
        _
      $region141: #{siglip_vision_forward.14} parent=5 // pred_check_branch
        %355 = sbr.rel (%p352) target = $region143
      $region142: #{siglip_vision_forward.14} parent=5 // pred_region
        %s356 = ssub.s32 %s9, 1
        %s357 = sand.u32 %s36, 1
        %s358 = sand.u32 %s36, 1
        %s359 = smul.addr %s358, 16
        %s360 = scalar_lea.vmem [#allocation2], %s359
        // Predicated region
        $region144: #{siglip_vision_forward.14} parent=142 // pred_check
          %p361 = pneg %p49
        $region145: #{siglip_vision_forward.14} parent=142 // pred_check_branch
          %363 = sbr.rel (%p361) target = $region147
        $region146: #{siglip_vision_forward.14} parent=142 // pred_region
          _
        $region147: #{siglip_vision_forward.14} parent=142 // pred_fallthru
          _
        %s364 = sand.u32 %s66, 1
        %s365 = sand.u32 %s66, 1
        %s366 = smul.addr %s365, 16
        %s367 = scalar_lea.vmem [#allocation3], %s366
        // Predicated region
        $region148: #{siglip_vision_forward.14} parent=142 // pred_check
          %p368 = pneg %p79
        $region149: #{siglip_vision_forward.14} parent=142 // pred_check_branch
          %370 = sbr.rel (%p368) target = $region151
        $region150: #{siglip_vision_forward.14} parent=142 // pred_region
          _
        $region151: #{siglip_vision_forward.14} parent=142 // pred_fallthru
          _
        %s371 = sand.u32 %s96, 1
        %s372 = sand.u32 %s96, 1
        %s373 = smul.addr %s372, 16
        %s374 = scalar_lea.vmem [#allocation4], %s373
        // Predicated region
        $region152: #{siglip_vision_forward.14} parent=142 // pred_check
          %p375 = pneg %p109
        $region153: #{siglip_vision_forward.14} parent=142 // pred_check_branch
          %377 = sbr.rel (%p375) target = $region155
        $region154: #{siglip_vision_forward.14} parent=142 // pred_region
          _
        $region155: #{siglip_vision_forward.14} parent=142 // pred_fallthru
          _
        %s378 = sand.u32 %s36, 1
        %s379 = sand.u32 %s36, 1
        %s380 = smul.addr %s379, 16
        %s381 = scalar_lea.vmem [#allocation2], %s380
        %p382 = pneg %p49
        %p383 = pneg %p46
        %s384 = sand.u32 %s66, 1
        %s385 = sand.u32 %s66, 1
        %s386 = smul.addr %s385, 16
        %s387 = scalar_lea.vmem [#allocation3], %s386
        %p388 = pneg %p79
        %p389 = pneg %p76
        %s390 = sand.u32 %s96, 1
        %s391 = sand.u32 %s96, 1
        %s392 = smul.addr %s391, 16
        %s393 = scalar_lea.vmem [#allocation4], %s392
        %p394 = pneg %p109
        %p395 = pneg %p106
        %p396 = pneg %p137
        %p397 = pneg %p134
        %p398 = scmp.lt.s32.totalorder %s18, 1
        %s399 = scalar_select %p398, %s18, 1
        %p400 = scmp.lt.s32.totalorder %s19, 0
        %s401 = scalar_select %p400, %s19, 0
        %s402 = smul.addr %s399, 4
        %s403 = sadd.s32 %s401, %s402
        %s404 = smul.addr %s403, 4
        %s405 = scalar_lea.vmem %s3, %s404
        %s406 = sadd.s32 %s19, 1
        %s407 = sadd.s32 %s19, 2
        %p408 = scmp.lt.s32.totalorder %s18, 1
        %s409 = scalar_select %p408, %s18, 1
        %p410 = scmp.lt.s32.totalorder %s19, 0
        %s411 = scalar_select %p410, %s19, 0
        %s412 = smul.addr %s409, 4
        %s413 = sadd.s32 %s411, %s412
        %s414 = smul.addr %s413, 4
        %s415 = scalar_lea.vmem %s3, %s414
        %v417 = vld [vmem:[%s360] sm:$0xf]
        %v418 = vld [vmem:[%s360 + $0x4] sm:$0xf]
        %v419 = vld [vmem:[%s360 + $0x8] sm:$0xf]
        %v420 = vld [vmem:[%s360 + $0xc] sm:$0xf]
        %v421 = vld [vmem:[%s367] sm:$0xf]
        %v422 = vld [vmem:[%s367 + $0x4] sm:$0xf]
        %v423 = vld [vmem:[%s367 + $0x8] sm:$0xf]
        %v424 = vld [vmem:[%s367 + $0xc] sm:$0xf]
        %v425 = vld [vmem:[%s374] sm:$0xf]
        %v426 = vld [vmem:[%s374 + $0x4] sm:$0xf]
        %v427 = vld [vmem:[%s374 + $0x8] sm:$0xf]
        %v428 = vld [vmem:[%s374 + $0xc] sm:$0xf]
        %v433 = vunpack.c.l.b16 %v417
        %v434 = vunpack.c.l.b16 %v418
        %v435 = vunpack.c.l.b16 %v419
        %v436 = vunpack.c.l.b16 %v420
        %v437 = vpack.c.b16 %v434, %v433
        %v438 = vpack.c.b16 %v436, %v435
        %v443 = vunpack.c.l.b16 %v421
        %v444 = vunpack.c.l.b16 %v422
        %v445 = vunpack.c.l.b16 %v423
        %v446 = vunpack.c.l.b16 %v424
        %v447 = vpack.c.b16 %v444, %v443
        %v448 = vpack.c.b16 %v446, %v445
        %vm449 = vcmask 523264
        %v451 = vsel %vm449, %v437, 0
        %v454 = vsel %vm449, %v438, 0
        %v457 = vsel %vm449, %v447, 0
        %v460 = vsel %vm449, %v448, 0
        %462 = vmatpush.bf16.xpose.msra.mxu0 0
        %463 = vmatpush.bf16.xpose.msra.mxu0 0
        %464 = vmatpush.bf16.xpose.msra.mxu0 0
        %465 = vmatpush.bf16.xpose.msra.mxu0 0
        %466 = vmatpush.bf16.xpose.msra.mxu0 0
        %467 = vmatpush.bf16.xpose.msra.mxu0 0
        %468 = vmatpush.bf16.xpose.msra.mxu0 %v460
        %469 = vmatpush.bf16.xpose.msra.mxu0 %v457
        %470 = vmatmul.bf16.gmra.mxu0 %v451
        %v471 = vpop.f32.mrf.mxu0
        %v472 = vadd.f32 0.0, %v471
        %v473 = vpop.f32.mrf.mxu0
        %v474 = vadd.f32 0.0, %v473
        %475 = vmatmul.bf16.gmra.mxu0 %v454
        %v476 = vpop.f32.mrf.mxu0
        %v477 = vadd.f32 0.0, %v476
        %v478 = vpop.f32.mrf.mxu0
        %v479 = vadd.f32 0.0, %v478
        %480 = vdwg.mxu0
        %v481 = vmul.f32 %v472, 0.125
        %v482 = vmul.f32 %v474, 0.125
        %v483 = vmul.f32 %v477, 0.125
        %v484 = vmul.f32 %v479, 0.125
        %v485 = vlaneseq
        %v486 = vand.u32 %v485, 127
        %vm487 = vcmp.lt.s32.totalorder %v486, 25
        %v488 = vsel %vm487, %v481, -1e+30
        %v489 = vsel %vm487, %v482, -1e+30
        %v490 = vsel %vm487, %v483, -1e+30
        %v491 = vsel %vm487, %v484, -1e+30
        %vm492 = vcmask 261120
        %v493 = vsel %vm492, %v488, -inf
        %494 = vmax.xlane.f32.xlu0 %v493
        %v495 = vpop.xlane.xlu0 %494
        %v496 = vsel %vm492, %v489, -inf
        %497 = vmax.xlane.f32.xlu0 %v496
        %v498 = vpop.xlane.xlu0 %497
        %v499 = vsel %vm492, %v490, -inf
        %500 = vmax.xlane.f32.xlu0 %v499
        %v501 = vpop.xlane.xlu0 %500
        %v502 = vsel %vm492, %v491, -inf
        %503 = vmax.xlane.f32.xlu0 %v502
        %v504 = vpop.xlane.xlu0 %503
        %v505 = vsub.f32 %v488, %v495
        %v506 = vsub.f32 %v489, %v498
        %v507 = vsub.f32 %v490, %v501
        %v508 = vsub.f32 %v491, %v504
        %v509 = vmul.f32 %v505, 1.442695
        %v510 = vpow.pop %v509
        %v511 = vmul.f32 %v506, 1.442695
        %v512 = vpow.pop %v511
        %v513 = vmul.f32 %v507, 1.442695
        %v514 = vpow.pop %v513
        %v515 = vmul.f32 %v508, 1.442695
        %v516 = vpow.pop %v515
        %v517 = vsel %vm492, %v510, 0.0
        %518 = vadd.xlane.f32.xlu0 %v517
        %v519 = vpop.xlane.xlu0 %518
        %v520 = vsel %vm492, %v512, 0.0
        %521 = vadd.xlane.f32.xlu0 %v520
        %v522 = vpop.xlane.xlu0 %521
        %v523 = vsel %vm492, %v514, 0.0
        %524 = vadd.xlane.f32.xlu0 %v523
        %v525 = vpop.xlane.xlu0 %524
        %v526 = vsel %vm492, %v516, 0.0
        %527 = vadd.xlane.f32.xlu0 %v526
        %v528 = vpop.xlane.xlu0 %527
        %v529 = vrcp.pop %v519
        %v530 = vrcp.pop %v522
        %v531 = vrcp.pop %v525
        %v532 = vrcp.pop %v528
        %v533 = vmul.f32 %v510, %v529
        %v534 = vmul.f32 %v512, %v530
        %v535 = vmul.f32 %v514, %v531
        %v536 = vmul.f32 %v516, %v532
        %v537 = vpack.c.bf16 %v534, %v533
        %v538 = vpack.c.bf16 %v536, %v535
        %v543 = vunpack.c.l.b16 %v425
        %v544 = vunpack.c.l.b16 %v426
        %v545 = vunpack.c.l.b16 %v427
        %v546 = vunpack.c.l.b16 %v428
        %v547 = vpack.c.b16 %v544, %v543
        %v548 = vpack.c.b16 %v546, %v545
        %v552 = vsel %vm492, %v537, 0
        %v555 = vsel %vm492, %v538, 0
        %557 = vmatpush.bf16.msra.mxu0 0
        %558 = vmatpush.bf16.msra.mxu0 0
        %559 = vmatpush.bf16.msra.mxu0 0
        %560 = vmatpush.bf16.msra.mxu0 0
        %561 = vmatpush.bf16.msra.mxu0 0
        %562 = vmatpush.bf16.msra.mxu0 0
        %563 = vmatpush.bf16.msra.mxu0 %v548
        %564 = vmatpush.bf16.msra.mxu0 %v547
        %565 = vmatmul.bf16.gmra.mxu0 %v552
        %v566 = vpop.f32.mrf.mxu0
        %v567 = vadd.f32 0.0, %v566
        %v568 = vpop.f32.mrf.mxu0
        %v569 = vadd.f32 0.0, %v568
        %570 = vmatmul.bf16.gmra.mxu0 %v555
        %v571 = vpop.f32.mrf.mxu0
        %v572 = vadd.f32 0.0, %v571
        %v573 = vpop.f32.mrf.mxu0
        %v574 = vadd.f32 0.0, %v573
        %575 = vdwg.mxu0
        %v576 = vpack.c.bf16 %v567, %v567
        %v577 = vpack.c.bf16 %v569, %v569
        %v578 = vpack.c.bf16 %v572, %v572
        %v579 = vpack.c.bf16 %v574, %v574
        %vm580 = vcmask 519168
        %581 = vst.msk [vmem:[%s415] sm:$0xf] %vm580, %v576
        %582 = vst.msk [vmem:[%s415 + $0x4] sm:$0xf] %vm580, %v577
        %583 = vst.msk [vmem:[%s415 + $0x8] sm:$0xf] %vm580, %v578
        %584 = vst.msk [vmem:[%s415 + $0xc] sm:$0xf] %vm580, %v579
        %v585 = vld [vmem:[%s360] sm:$0xf]
        %v586 = vld [vmem:[%s360 + $0x4] sm:$0xf]
        %v587 = vld [vmem:[%s360 + $0x8] sm:$0xf]
        %v588 = vld [vmem:[%s360 + $0xc] sm:$0xf]
        %v589 = vld [vmem:[%s367] sm:$0xf]
        %v590 = vld [vmem:[%s367 + $0x4] sm:$0xf]
        %v591 = vld [vmem:[%s367 + $0x8] sm:$0xf]
        %v592 = vld [vmem:[%s367 + $0xc] sm:$0xf]
        %v593 = vld [vmem:[%s374] sm:$0xf]
        %v594 = vld [vmem:[%s374 + $0x4] sm:$0xf]
        %v595 = vld [vmem:[%s374 + $0x8] sm:$0xf]
        %v596 = vld [vmem:[%s374 + $0xc] sm:$0xf]
        %v601 = vunpack.c.l.b16 %v585
        %v602 = vunpack.c.l.b16 %v586
        %v603 = vunpack.c.l.b16 %v587
        %v604 = vunpack.c.l.b16 %v588
        %v605 = vpack.c.b16 %v602, %v601
        %v606 = vpack.c.b16 %v604, %v603
        %607 = vrot.lane.b32.xlu0 %v605, 64
        %v608 = vpop.permute.xlu0 %607
        %609 = vrot.lane.b32.xlu0 %v606, 64
        %v610 = vpop.permute.xlu0 %609
        %v615 = vunpack.c.l.b16 %v589
        %v616 = vunpack.c.l.b16 %v590
        %v617 = vunpack.c.l.b16 %v591
        %v618 = vunpack.c.l.b16 %v592
        %v619 = vpack.c.b16 %v616, %v615
        %v620 = vpack.c.b16 %v618, %v617
        %621 = vrot.lane.b32.xlu0 %v619, 64
        %v622 = vpop.permute.xlu0 %621
        %623 = vrot.lane.b32.xlu0 %v620, 64
        %v624 = vpop.permute.xlu0 %623
        %v626 = vsel %vm449, %v608, 0
        %v629 = vsel %vm449, %v610, 0
        %v632 = vsel %vm449, %v622, 0
        %v635 = vsel %vm449, %v624, 0
        %637 = vmatpush.bf16.xpose.msra.mxu0 0
        %638 = vmatpush.bf16.xpose.msra.mxu0 0
        %639 = vmatpush.bf16.xpose.msra.mxu0 0
        %640 = vmatpush.bf16.xpose.msra.mxu0 0
        %641 = vmatpush.bf16.xpose.msra.mxu0 0
        %642 = vmatpush.bf16.xpose.msra.mxu0 0
        %643 = vmatpush.bf16.xpose.msra.mxu0 %v635
        %644 = vmatpush.bf16.xpose.msra.mxu0 %v632
        %645 = vmatmul.bf16.gmra.mxu0 %v626
        %v646 = vpop.f32.mrf.mxu0
        %v647 = vadd.f32 0.0, %v646
        %v648 = vpop.f32.mrf.mxu0
        %v649 = vadd.f32 0.0, %v648
        %650 = vmatmul.bf16.gmra.mxu0 %v629
        %v651 = vpop.f32.mrf.mxu0
        %v652 = vadd.f32 0.0, %v651
        %v653 = vpop.f32.mrf.mxu0
        %v654 = vadd.f32 0.0, %v653
        %655 = vdwg.mxu0
        %v656 = vmul.f32 %v647, 0.125
        %v657 = vmul.f32 %v649, 0.125
        %v658 = vmul.f32 %v652, 0.125
        %v659 = vmul.f32 %v654, 0.125
        %v660 = vsel %vm487, %v656, -1e+30
        %v661 = vsel %vm487, %v657, -1e+30
        %v662 = vsel %vm487, %v658, -1e+30
        %v663 = vsel %vm487, %v659, -1e+30
        %v664 = vsel %vm492, %v660, -inf
        %665 = vmax.xlane.f32.xlu0 %v664
        %v666 = vpop.xlane.xlu0 %665
        %v667 = vsel %vm492, %v661, -inf
        %668 = vmax.xlane.f32.xlu0 %v667
        %v669 = vpop.xlane.xlu0 %668
        %v670 = vsel %vm492, %v662, -inf
        %671 = vmax.xlane.f32.xlu0 %v670
        %v672 = vpop.xlane.xlu0 %671
        %v673 = vsel %vm492, %v663, -inf
        %674 = vmax.xlane.f32.xlu0 %v673
        %v675 = vpop.xlane.xlu0 %674
        %v676 = vsub.f32 %v660, %v666
        %v677 = vsub.f32 %v661, %v669
        %v678 = vsub.f32 %v662, %v672
        %v679 = vsub.f32 %v663, %v675
        %v680 = vmul.f32 %v676, 1.442695
        %v681 = vpow.pop %v680
        %v682 = vmul.f32 %v677, 1.442695
        %v683 = vpow.pop %v682
        %v684 = vmul.f32 %v678, 1.442695
        %v685 = vpow.pop %v684
        %v686 = vmul.f32 %v679, 1.442695
        %v687 = vpow.pop %v686
        %v688 = vsel %vm492, %v681, 0.0
        %689 = vadd.xlane.f32.xlu0 %v688
        %v690 = vpop.xlane.xlu0 %689
        %v691 = vsel %vm492, %v683, 0.0
        %692 = vadd.xlane.f32.xlu0 %v691
        %v693 = vpop.xlane.xlu0 %692
        %v694 = vsel %vm492, %v685, 0.0
        %695 = vadd.xlane.f32.xlu0 %v694
        %v696 = vpop.xlane.xlu0 %695
        %v697 = vsel %vm492, %v687, 0.0
        %698 = vadd.xlane.f32.xlu0 %v697
        %v699 = vpop.xlane.xlu0 %698
        %v700 = vrcp.pop %v690
        %v701 = vrcp.pop %v693
        %v702 = vrcp.pop %v696
        %v703 = vrcp.pop %v699
        %v704 = vmul.f32 %v681, %v700
        %v705 = vmul.f32 %v683, %v701
        %v706 = vmul.f32 %v685, %v702
        %v707 = vmul.f32 %v687, %v703
        %v708 = vpack.c.bf16 %v705, %v704
        %v709 = vpack.c.bf16 %v707, %v706
        %v714 = vunpack.c.l.b16 %v593
        %v715 = vunpack.c.l.b16 %v594
        %v716 = vunpack.c.l.b16 %v595
        %v717 = vunpack.c.l.b16 %v596
        %v718 = vpack.c.b16 %v715, %v714
        %v719 = vpack.c.b16 %v717, %v716
        %720 = vrot.lane.b32.xlu0 %v718, 64
        %v721 = vpop.permute.xlu0 %720
        %722 = vrot.lane.b32.xlu0 %v719, 64
        %v723 = vpop.permute.xlu0 %722
        %v727 = vsel %vm492, %v708, 0
        %v730 = vsel %vm492, %v709, 0
        %732 = vmatpush.bf16.msra.mxu0 0
        %733 = vmatpush.bf16.msra.mxu0 0
        %734 = vmatpush.bf16.msra.mxu0 0
        %735 = vmatpush.bf16.msra.mxu0 0
        %736 = vmatpush.bf16.msra.mxu0 0
        %737 = vmatpush.bf16.msra.mxu0 0
        %738 = vmatpush.bf16.msra.mxu0 %v723
        %739 = vmatpush.bf16.msra.mxu0 %v721
        %740 = vmatmul.bf16.gmra.mxu0 %v727
        %v741 = vpop.f32.mrf.mxu0
        %v742 = vadd.f32 0.0, %v741
        %v743 = vpop.f32.mrf.mxu0
        %v744 = vadd.f32 0.0, %v743
        %745 = vmatmul.bf16.gmra.mxu0 %v730
        %v746 = vpop.f32.mrf.mxu0
        %v747 = vadd.f32 0.0, %v746
        %v748 = vpop.f32.mrf.mxu0
        %v749 = vadd.f32 0.0, %v748
        %750 = vdwg.mxu0
        %v751 = vpack.c.bf16 %v742, %v742
        %v752 = vpack.c.bf16 %v744, %v744
        %v753 = vpack.c.bf16 %v747, %v747
        %v754 = vpack.c.bf16 %v749, %v749
        %759 = vrot.lane.b32.xlu0 %v751, 64
        %v760 = vpop.permute.xlu0 %759
        %761 = vrot.lane.b32.xlu0 %v752, 64
        %v762 = vpop.permute.xlu0 %761
        %763 = vrot.lane.b32.xlu0 %v753, 64
        %v764 = vpop.permute.xlu0 %763
        %765 = vrot.lane.b32.xlu0 %v754, 64
        %v766 = vpop.permute.xlu0 %765
        %vm771 = vcmask 1043968
        %772 = vst.msk [vmem:[%s415] sm:$0xf] %vm771, %v760
        %773 = vst.msk [vmem:[%s415 + $0x4] sm:$0xf] %vm771, %v762
        %774 = vst.msk [vmem:[%s415 + $0x8] sm:$0xf] %vm771, %v764
        %775 = vst.msk [vmem:[%s415 + $0xc] sm:$0xf] %vm771, %v766
        %p776 = scmp.lt.s32.totalorder %s18, 1
        %s777 = scalar_select %p776, %s18, 1
        %p778 = scmp.lt.s32.totalorder %s19, 0
        %s779 = scalar_select %p778, %s19, 0
        %s780 = smul.addr %s777, 4
        %s781 = sadd.s32 %s779, %s780
        %s782 = smul.addr %s781, 4
        %s783 = scalar_lea.vmem %s3, %s782
        // Predicated region
        $region156: #{siglip_vision_forward.14} parent=142 // pred_check
          %p784 = pneg %p134
        $region157: #{siglip_vision_forward.14} parent=142 // pred_check_branch
          %786 = sbr.rel (%p784) target = $region159
        $region158: #{siglip_vision_forward.14} parent=142 // pred_region
          _
        $region159: #{siglip_vision_forward.14} parent=142 // pred_fallthru
          _
      $region143: #{siglip_vision_forward.14} parent=5 // pred_fallthru
        _
      %p787 = scmp.le.s32.totalorder 2, %s9
      // Predicated region
      $region160: #{siglip_vision_forward.14} parent=5 // pred_check
        %p788 = pneg %p787
      $region161: #{siglip_vision_forward.14} parent=5 // pred_check_branch
        %790 = sbr.rel (%p788) target = $region163
      $region162: #{siglip_vision_forward.14} parent=5 // pred_region
        %s791 = ssub.s32 %s9, 2
        // Predicated region
        $region164: #{siglip_vision_forward.14} parent=162 // pred_check
          %p792 = pneg %p140
        $region165: #{siglip_vision_forward.14} parent=162 // pred_check_branch
          %794 = sbr.rel (%p792) target = $region167
        $region166: #{siglip_vision_forward.14} parent=162 // pred_region
          %p795 = scmp.lt.s32.totalorder %s20, 1
          %s796 = scalar_select %p795, %s20, 1
          %p797 = scmp.lt.s32.totalorder %s21, 0
          %s798 = scalar_select %p797, %s21, 0
          %s799 = smul.addr %s796, 4
          %s800 = sadd.s32 %s798, %s799
          %s801 = smul.addr %s800, 4
          %s802 = scalar_lea.vmem %s3, %s801
        $region167: #{siglip_vision_forward.14} parent=162 // pred_fallthru
          _
      $region163: #{siglip_vision_forward.14} parent=5 // pred_fallthru
        _
    $region6: #{siglip_vision_forward.14} parent=1 // loop_footer
      %s13 = sadd.s32 1, %s9
    $region7: #{siglip_vision_forward.14} parent=1 // loop_footer_branch
      %8 = sbr.rel target = $region3
    $region8: #{siglip_vision_forward.14} parent=1 // loop_exit
      _

// kernel: siglip_vision_forward.23
$region0: #{siglip_vision_forward.23}
  #allocation0 [shape = 'u32[]', space=smem, size = 0x4, offset = 0x4, fixed_abs, tag = 'smem constant byte address 0x4 - core index']
  #allocation1 [shape = 'u32[72,128]{1,0:T(1,128)}', space=vmem, size = 0x9000, scoped, tag = 'internal scratch']
  %s0 = inlined_call_operand.vmem [shape: bf16[64,128], index: 0, kind: input, shape index: {}]
  %s1 = inlined_call_operand.vmem [shape: bf16[1,128], index: 1, kind: input, shape index: {}]
  %s2 = inlined_call_operand.vmem [shape: bf16[1,128], index: 2, kind: input, shape index: {}]
  %s3 = inlined_call_operand.vmem [shape: f32[64,128], index: 3, kind: output, shape index: {}]
  %s4 = sld [smem:[#allocation0]]
  $region45: #{siglip_vision_forward.23} parent=0
    _
  %s6 = ssub.s32 1, %s4
  %s7 = scalar_select 0, %s6, %s4
  loop: start=0, step=1, limit=4
  $region2: #{siglip_vision_forward.23} parent=0 // loop_pre_header
    _
  $region3: #{siglip_vision_forward.23} parent=0 // loop_header
    %s9 = sphi 0, %s13
    %p10 = scmp.ge.s32.totalorder %s9, 4
    %s19 = sphi 0, %s21
    %s22 = sphi 0, %s19
    %s23 = sphi 0, %s22
    %s39 = sphi 0, %s23
    %s43 = sphi 0, %s43
    %s45 = sphi 0, %s43
    %s46 = sphi 0, %s45
    %s60 = sphi 0, %s46
    %s64 = sphi 0, %s64
    %s66 = sphi 0, %s64
    %s67 = sphi 0, %s66
    %s81 = sphi 0, %s67
    %s87 = sphi 0, %s89
    %s90 = sphi 0, %s87
    %s91 = sphi 0, %s90
    %s107 = sphi 0, %s91
  $region4: #{siglip_vision_forward.23} parent=0 // loop_header_branch
    %12 = sbr.rel (%p10) target = $region8
  $region5: #{siglip_vision_forward.23} parent=0 // loop_body
    %s14 = ssub.s32 %s9, 1
    %s15 = ssub.s32 %s9, 2
    %s16 = sadd.s32 %s9, 1
    %s17 = ssub.s32 %s9, %s16
    %p18 = scmp.eq.s32.totalorder %s17, 0
    %s20 = sadd.s32 %s19, 1
    %s21 = scalar_select %p18, %s19, %s20
    %p24 = pneg %p18
    %p25 = scmp.eq.s32.totalorder %s9, 1
    %p26 = por %p24, %p25
    %p27 = scmp.ne.s32.totalorder %s19, %s22
    %p28 = scmp.eq.s32.totalorder %s9, 0
    %p29 = por %p27, %p28
    %p30 = scmp.ne.s32.totalorder %s19, %s22
    %p31 = scmp.eq.s32.totalorder %s14, 1
    %p32 = por %p30, %p31
    %p33 = scmp.ne.s32.totalorder %s22, %s23
    %p34 = scmp.eq.s32.totalorder %s14, 0
    %p35 = por %p33, %p34
    %p36 = scmp.ne.s32.totalorder %s22, %s23
    %p37 = scmp.eq.s32.totalorder %s15, 1
    %p38 = por %p36, %p37
    %p40 = scmp.ne.s32.totalorder %s23, %s39
    %p41 = scmp.eq.s32.totalorder %s15, 0
    %p42 = por %p40, %p41
    %s44 = sadd.s32 %s43, 1
    %p47 = scmp.eq.s32.totalorder %s9, 1
    %p48 = scmp.ne.s32.totalorder %s43, %s45
    %p49 = scmp.eq.s32.totalorder %s9, 0
    %p50 = por %p48, %p49
    %p51 = scmp.ne.s32.totalorder %s43, %s45
    %p52 = scmp.eq.s32.totalorder %s14, 1
    %p53 = por %p51, %p52
    %p54 = scmp.ne.s32.totalorder %s45, %s46
    %p55 = scmp.eq.s32.totalorder %s14, 0
    %p56 = por %p54, %p55
    %p57 = scmp.ne.s32.totalorder %s45, %s46
    %p58 = scmp.eq.s32.totalorder %s15, 1
    %p59 = por %p57, %p58
    %p61 = scmp.ne.s32.totalorder %s46, %s60
    %p62 = scmp.eq.s32.totalorder %s15, 0
    %p63 = por %p61, %p62
    %s65 = sadd.s32 %s64, 1
    %p68 = scmp.eq.s32.totalorder %s9, 1
    %p69 = scmp.ne.s32.totalorder %s64, %s66
    %p70 = scmp.eq.s32.totalorder %s9, 0
    %p71 = por %p69, %p70
    %p72 = scmp.ne.s32.totalorder %s64, %s66
    %p73 = scmp.eq.s32.totalorder %s14, 1
    %p74 = por %p72, %p73
    %p75 = scmp.ne.s32.totalorder %s66, %s67
    %p76 = scmp.eq.s32.totalorder %s14, 0
    %p77 = por %p75, %p76
    %p78 = scmp.ne.s32.totalorder %s66, %s67
    %p79 = scmp.eq.s32.totalorder %s15, 1
    %p80 = por %p78, %p79
    %p82 = scmp.ne.s32.totalorder %s67, %s81
    %p83 = scmp.eq.s32.totalorder %s15, 0
    %p84 = por %p82, %p83
    %s85 = ssub.s32 %s9, %s16
    %p86 = scmp.eq.s32.totalorder %s85, 0
    %s88 = sadd.s32 %s87, 1
    %s89 = scalar_select %p86, %s87, %s88
    %p92 = pneg %p86
    %p93 = scmp.eq.s32.totalorder %s9, 1
    %p94 = por %p92, %p93
    %p95 = scmp.ne.s32.totalorder %s87, %s90
    %p96 = scmp.eq.s32.totalorder %s9, 0
    %p97 = por %p95, %p96
    %p98 = scmp.ne.s32.totalorder %s87, %s90
    %p99 = scmp.eq.s32.totalorder %s14, 1
    %p100 = por %p98, %p99
    %p101 = scmp.ne.s32.totalorder %s90, %s91
    %p102 = scmp.eq.s32.totalorder %s14, 0
    %p103 = por %p101, %p102
    %p104 = scmp.ne.s32.totalorder %s90, %s91
    %p105 = scmp.eq.s32.totalorder %s15, 1
    %p106 = por %p104, %p105
    %p108 = scmp.ne.s32.totalorder %s91, %s107
    %p109 = scmp.eq.s32.totalorder %s15, 0
    %p110 = por %p108, %p109
    %p111 = scmp.le.s32.totalorder 1, %s9
    %p112 = scmp.lt.s32.totalorder %s9, 3
    %p113 = pnand %p111, %p112
    %p114 = pneg %p113
    // Predicated region
    $region9: #{siglip_vision_forward.23} parent=5 // pred_check
      _
    $region10: #{siglip_vision_forward.23} parent=5 // pred_check_branch
      %116 = sbr.rel (%p113) target = $region12
    $region11: #{siglip_vision_forward.23} parent=5 // pred_region
      %s117 = ssub.s32 %s9, 1
      // Predicated region
      $region13: #{siglip_vision_forward.23} parent=11 // pred_check
        %p118 = pneg %p56
      $region14: #{siglip_vision_forward.23} parent=11 // pred_check_branch
        %120 = sbr.rel (%p118) target = $region16
      $region15: #{siglip_vision_forward.23} parent=11 // pred_region
        _
      $region16: #{siglip_vision_forward.23} parent=11 // pred_fallthru
        _
      // Predicated region
      $region17: #{siglip_vision_forward.23} parent=11 // pred_check
        %p121 = pneg %p77
      $region18: #{siglip_vision_forward.23} parent=11 // pred_check_branch
        %123 = sbr.rel (%p121) target = $region20
      $region19: #{siglip_vision_forward.23} parent=11 // pred_region
        _
      $region20: #{siglip_vision_forward.23} parent=11 // pred_fallthru
        _
    $region12: #{siglip_vision_forward.23} parent=5 // pred_fallthru
      _
    %p124 = scmp.lt.s32.totalorder %s9, 2
    // Predicated region
    $region21: #{siglip_vision_forward.23} parent=5 // pred_check
      %p125 = pneg %p124
    $region22: #{siglip_vision_forward.23} parent=5 // pred_check_branch
      %127 = sbr.rel (%p125) target = $region24
    $region23: #{siglip_vision_forward.23} parent=5 // pred_region
      // Predicated region
      $region25: #{siglip_vision_forward.23} parent=23 // pred_check
        %p128 = pneg %p29
      $region26: #{siglip_vision_forward.23} parent=23 // pred_check_branch
        %130 = sbr.rel (%p128) target = $region28
      $region27: #{siglip_vision_forward.23} parent=23 // pred_region
        %s131 = smul.u32 4, %s9
        %p132 = scmp.lt.s32.totalorder %s131, 7
        %s133 = scalar_select %p132, %s131, 7
        %s134 = smul.addr %s133, 4
        %s135 = scalar_lea.vmem %s0, %s134
        %s136 = smul.u32 4, %s9
      $region28: #{siglip_vision_forward.23} parent=23 // pred_fallthru
        _
    $region24: #{siglip_vision_forward.23} parent=5 // pred_fallthru
      _
    %p137 = scmp.le.s32.totalorder 1, %s9
    %p138 = scmp.lt.s32.totalorder %s9, 3
    %p139 = pnand %p137, %p138
    %p140 = pneg %p139
    // Predicated region
    $region29: #{siglip_vision_forward.23} parent=5 // pred_check
      _
    $region30: #{siglip_vision_forward.23} parent=5 // pred_check_branch
      %142 = sbr.rel (%p139) target = $region32
    $region31: #{siglip_vision_forward.23} parent=5 // pred_region
      %s143 = ssub.s32 %s9, 1
      %s144 = smul.u32 4, %s14
      %p145 = scmp.lt.s32.totalorder %s144, 7
      %s146 = scalar_select %p145, %s144, 7
      %s147 = smul.addr %s146, 4
      %s148 = scalar_lea.vmem %s0, %s147
      %p149 = pneg %p35
      %p150 = pneg %p32
      %p151 = pneg %p56
      %p152 = pneg %p53
      %p153 = pneg %p77
      %p154 = pneg %p74
      %p155 = pneg %p103
      %p156 = pneg %p100
      %s157 = smul.u32 4, %s14
      %p158 = scmp.lt.s32.totalorder %s157, 7
      %s159 = scalar_select %p158, %s157, 7
      %s160 = smul.addr %s159, 8
      %s161 = scalar_lea.vmem %s3, %s160
      %s162 = smul.u32 4, %s14
      %p163 = scmp.lt.s32.totalorder %s162, 7
      %s164 = scalar_select %p163, %s162, 7
      %s165 = smul.addr %s164, 4
      %s166 = scalar_lea.vmem %s0, %s165
      %s167 = smul.u32 4, %s14
      %s168 = smul.u32 4, %s14
      %p169 = scmp.lt.s32.totalorder %s168, 7
      %s170 = scalar_select %p169, %s168, 7
      %s171 = smul.addr %s170, 8
      %s172 = scalar_lea.vmem %s3, %s171
      %s173 = smul.u32 4, %s14
      %v174 = vld [vmem:[%s166] sm:$0xf]
      %v175 = vld [vmem:[%s166 + $0x4] sm:$0xf]
      %v176 = vld [vmem:[%s166 + $0x8] sm:$0xf]
      %v177 = vld [vmem:[%s166 + $0xc] sm:$0xf]
      %v178 = vunpack.c.l.bf16 %v174
      %v179 = vunpack.c.l.bf16 %v175
      %v180 = vunpack.c.l.bf16 %v176
      %v181 = vunpack.c.l.bf16 %v177
      %182 = vadd.xlane.f32.xlu0 %v178
      %v183 = vpop.xlane.xlu0 %182
      %184 = vadd.xlane.f32.xlu0 %v179
      %v185 = vpop.xlane.xlu0 %184
      %186 = vadd.xlane.f32.xlu0 %v180
      %v187 = vpop.xlane.xlu0 %186
      %188 = vadd.xlane.f32.xlu0 %v181
      %v189 = vpop.xlane.xlu0 %188
      %v190 = vrcp.pop 128.0
      %v191 = vmul.f32 128.0, %v190
      %v192 = vsub.f32 1.0, %v191
      %v193 = vmul.f32 %v190, %v192
      %v194 = vadd.f32 %v190, %v193
      %vm195 = vweird.f32 %v190
      %v196 = vsel %vm195, %v190, %v194
      %v197 = vmul.f32 %v183, %v196
      %v198 = vmul.f32 %v185, %v196
      %v199 = vmul.f32 %v187, %v196
      %v200 = vmul.f32 %v189, %v196
      %v201 = vsub.f32 %v178, %v197
      %v202 = vsub.f32 %v179, %v198
      %v203 = vsub.f32 %v180, %v199
      %v204 = vsub.f32 %v181, %v200
      %v205 = vmul.f32 %v201, %v201
      %v206 = vmul.f32 %v202, %v202
      %v207 = vmul.f32 %v203, %v203
      %v208 = vmul.f32 %v204, %v204
      %209 = vadd.xlane.f32.xlu0 %v205
      %v210 = vpop.xlane.xlu0 %209
      %211 = vadd.xlane.f32.xlu0 %v206
      %v212 = vpop.xlane.xlu0 %211
      %213 = vadd.xlane.f32.xlu0 %v207
      %v214 = vpop.xlane.xlu0 %213
      %215 = vadd.xlane.f32.xlu0 %v208
      %v216 = vpop.xlane.xlu0 %215
      %v217 = vmul.f32 %v210, %v196
      %v218 = vmul.f32 %v212, %v196
      %v219 = vmul.f32 %v214, %v196
      %v220 = vmul.f32 %v216, %v196
      %v221 = vadd.f32 %v217, 1e-06
      %v222 = vadd.f32 %v218, 1e-06
      %v223 = vadd.f32 %v219, 1e-06
      %v224 = vadd.f32 %v220, 1e-06
      %v225 = vrsqrt.pop %v221
      %v226 = vmul.f32 %v225, %v221
      %v227 = vmul.f32 %v226, %v225
      %v228 = vmul.f32 0.5, %v227
      %v229 = vsub.f32 1.5, %v228
      %v230 = vmul.f32 %v225, %v229
      %vm231 = vweird.f32 %v221
      %vm232 = vweird.f32 %v225
      %vm233 = vmor %vm231, %vm232
      %v234 = vsel %vm233, %v225, %v230
      %v235 = vrsqrt.pop %v222
      %v236 = vmul.f32 %v235, %v222
      %v237 = vmul.f32 %v236, %v235
      %v238 = vmul.f32 0.5, %v237
      %v239 = vsub.f32 1.5, %v238
      %v240 = vmul.f32 %v235, %v239
      %vm241 = vweird.f32 %v222
      %vm242 = vweird.f32 %v235
      %vm243 = vmor %vm241, %vm242
      %v244 = vsel %vm243, %v235, %v240
      %v245 = vrsqrt.pop %v223
      %v246 = vmul.f32 %v245, %v223
      %v247 = vmul.f32 %v246, %v245
      %v248 = vmul.f32 0.5, %v247
      %v249 = vsub.f32 1.5, %v248
      %v250 = vmul.f32 %v245, %v249
      %vm251 = vweird.f32 %v223
      %vm252 = vweird.f32 %v245
      %vm253 = vmor %vm251, %vm252
      %v254 = vsel %vm253, %v245, %v250
      %v255 = vrsqrt.pop %v224
      %v256 = vmul.f32 %v255, %v224
      %v257 = vmul.f32 %v256, %v255
      %v258 = vmul.f32 0.5, %v257
      %v259 = vsub.f32 1.5, %v258
      %v260 = vmul.f32 %v255, %v259
      %vm261 = vweird.f32 %v224
      %vm262 = vweird.f32 %v255
      %vm263 = vmor %vm261, %vm262
      %v264 = vsel %vm263, %v255, %v260
      %v265 = vmul.f32 %v201, %v234
      %v266 = vmul.f32 %v202, %v244
      %v267 = vmul.f32 %v203, %v254
      %v268 = vmul.f32 %v204, %v264
      %v269 = vld [vmem:[%s1] sm:$0x1]
      %v270 = vunpack.c.l.bf16 %v269
      %v271 = vperm.slane %v270, 0
      %v272 = vmul.f32 %v265, %v271
      %v273 = vmul.f32 %v266, %v271
      %v274 = vmul.f32 %v267, %v271
      %v275 = vmul.f32 %v268, %v271
      %v276 = vld [vmem:[%s2] sm:$0x1]
      %v277 = vunpack.c.l.bf16 %v276
      %v278 = vperm.slane %v277, 0
      %v279 = vadd.f32 %v272, %v278
      %v280 = vadd.f32 %v273, %v278
      %v281 = vadd.f32 %v274, %v278
      %v282 = vadd.f32 %v275, %v278
      %283 = vst [vmem:[%s172] sm:$0xff] %v279
      %284 = vst [vmem:[%s172 + $0x8] sm:$0xff] %v280
      %285 = vst [vmem:[%s172 + $0x10] sm:$0xff] %v281
      %286 = vst [vmem:[%s172 + $0x18] sm:$0xff] %v282
      %s287 = smul.u32 4, %s14
      %p288 = scmp.lt.s32.totalorder %s287, 7
      %s289 = scalar_select %p288, %s287, 7
      %s290 = smul.addr %s289, 8
      %s291 = scalar_lea.vmem %s3, %s290
      // Predicated region
      $region33: #{siglip_vision_forward.23} parent=31 // pred_check
        %p292 = pneg %p100
      $region34: #{siglip_vision_forward.23} parent=31 // pred_check_branch
        %294 = sbr.rel (%p292) target = $region36
      $region35: #{siglip_vision_forward.23} parent=31 // pred_region
        %s295 = smul.u32 4, %s14
      $region36: #{siglip_vision_forward.23} parent=31 // pred_fallthru
        _
    $region32: #{siglip_vision_forward.23} parent=5 // pred_fallthru
      _
    %p296 = scmp.le.s32.totalorder 2, %s9
    // Predicated region
    $region37: #{siglip_vision_forward.23} parent=5 // pred_check
      %p297 = pneg %p296
    $region38: #{siglip_vision_forward.23} parent=5 // pred_check_branch
      %299 = sbr.rel (%p297) target = $region40
    $region39: #{siglip_vision_forward.23} parent=5 // pred_region
      %s300 = ssub.s32 %s9, 2
      // Predicated region
      $region41: #{siglip_vision_forward.23} parent=39 // pred_check
        %p301 = pneg %p106
      $region42: #{siglip_vision_forward.23} parent=39 // pred_check_branch
        %303 = sbr.rel (%p301) target = $region44
      $region43: #{siglip_vision_forward.23} parent=39 // pred_region
        %s304 = smul.u32 4, %s15
        %p305 = scmp.lt.s32.totalorder %s304, 7
        %s306 = scalar_select %p305, %s304, 7
        %s307 = smul.addr %s306, 8
        %s308 = scalar_lea.vmem %s3, %s307
      $region44: #{siglip_vision_forward.23} parent=39 // pred_fallthru
        _
    $region40: #{siglip_vision_forward.23} parent=5 // pred_fallthru
      _
  $region6: #{siglip_vision_forward.23} parent=0 // loop_footer
    %s13 = sadd.s32 1, %s9
  $region7: #{siglip_vision_forward.23} parent=0 // loop_footer_branch
    %8 = sbr.rel target = $region3
  $region8: #{siglip_vision_forward.23} parent=0 // loop_exit
    _

// kernel: siglip_vision_forward.17
$region0: #{siglip_vision_forward.17}
  #allocation0 [shape = 'u32[]', space=smem, size = 0x4, offset = 0x4, fixed_abs, tag = 'smem constant byte address 0x4 - core index']
  #allocation1 [shape = 'u32[72,128]{1,0:T(1,128)}', space=vmem, size = 0x9000, scoped, tag = 'internal scratch']
  #allocation2 [shape = 'f32[32,128]{1,0:T(8,128)}', space=vmem, size = 0x4000, scoped, tag = 'scratch operand']
  %s0 = inlined_call_operand.vmem [shape: bf16[64,640], index: 0, kind: input, shape index: {}]
  %s1 = inlined_call_operand.vmem [shape: bf16[640,128], index: 1, kind: input, shape index: {}]
  %s2 = inlined_call_operand.vmem [shape: bf16[1,128], index: 2, kind: input, shape index: {}]
  %s3 = inlined_call_operand.vmem [shape: bf16[64,128], index: 3, kind: input, shape index: {}]
  %s4 = inlined_call_operand.vmem [shape: bf16[64,128], index: 4, kind: output, shape index: {}]
  %s5 = sld [smem:[#allocation0]]
  $region98: #{siglip_vision_forward.17} parent=0
    _
  %s7 = ssub.s32 1, %s5
  %s8 = scalar_select 0, %s7, %s5
  $region1: #{siglip_vision_forward.17} parent=0
    #allocation3 [shape = 'u8[16384]{0}', space=vmem, size = 0x4000, scoped, tag = 'input window, operand 0']
    loop: start=0, step=1, limit=12
    $region2: #{siglip_vision_forward.17} parent=1 // loop_pre_header
      _
    $region3: #{siglip_vision_forward.17} parent=1 // loop_header
      %s10 = sphi 0, %s14
      %p11 = scmp.ge.s32.totalorder %s10, 12
      %s17 = sphi 0, %s36
      %s18 = sphi 0, %s32
      %s19 = sphi 0, %s28
      %s20 = sphi 0, %s17
      %s21 = sphi 0, %s18
      %s22 = sphi 0, %s19
      %s23 = sphi 0, %s20
      %s24 = sphi 0, %s21
      %s25 = sphi 0, %s22
      %s41 = sphi 0, %s43
      %s44 = sphi 0, %s41
      %s45 = sphi 0, %s44
      %s61 = sphi 0, %s45
      %s69 = sphi 0, %s71
      %s72 = sphi 0, %s69
      %s73 = sphi 0, %s72
      %s89 = sphi 0, %s73
      %s95 = sphi 0, %s97
      %s98 = sphi 0, %s95
      %s99 = sphi 0, %s98
      %s115 = sphi 0, %s99
      %s123 = sphi 0, %s125
      %s126 = sphi 0, %s123
      %s127 = sphi 0, %s126
      %s143 = sphi 0, %s127
      %s151 = sphi 0, %s153
      %s154 = sphi 0, %s151
      %s155 = sphi 0, %s154
      %s171 = sphi 0, %s155
    $region4: #{siglip_vision_forward.17} parent=1 // loop_header_branch
      %13 = sbr.rel (%p11) target = $region8
    $region5: #{siglip_vision_forward.17} parent=1 // loop_body
      %s15 = ssub.s32 %s10, 1
      %s16 = ssub.s32 %s10, 2
      %s26 = sadd.s32 1, %s19
      %p27 = scmp.ge.s32.totalorder %s26, 5
      %s28 = scalar_select %p27, 0, %s26
      %s29 = sadd.s32 1, %s18
      %s30 = scalar_select %p27, %s29, %s18
      %p31 = scmp.ge.s32.totalorder %s30, 1
      %s32 = scalar_select %p31, 0, %s30
      %s33 = sadd.s32 1, %s17
      %s34 = scalar_select %p31, %s33, %s17
      %p35 = scmp.ge.s32.totalorder %s34, 2
      %s36 = scalar_select %p35, 0, %s34
      %s37 = ssub.s32 %s17, %s36
      %s38 = ssub.s32 %s19, %s28
      %s39 = sor.u32 %s37, %s38
      %p40 = scmp.eq.s32.totalorder %s39, 0
      %s42 = sadd.s32 %s41, 1
      %s43 = scalar_select %p40, %s41, %s42
      %p46 = pneg %p40
      %p47 = scmp.eq.s32.totalorder %s10, 9
      %p48 = por %p46, %p47
      %p49 = scmp.ne.s32.totalorder %s41, %s44
      %p50 = scmp.eq.s32.totalorder %s10, 0
      %p51 = por %p49, %p50
      %p52 = scmp.ne.s32.totalorder %s41, %s44
      %p53 = scmp.eq.s32.totalorder %s15, 9
      %p54 = por %p52, %p53
      %p55 = scmp.ne.s32.totalorder %s44, %s45
      %p56 = scmp.eq.s32.totalorder %s15, 0
      %p57 = por %p55, %p56
      %p58 = scmp.ne.s32.totalorder %s44, %s45
      %p59 = scmp.eq.s32.totalorder %s16, 9
      %p60 = por %p58, %p59
      %p62 = scmp.ne.s32.totalorder %s45, %s61
      %p63 = scmp.eq.s32.totalorder %s16, 0
      %p64 = por %p62, %p63
      %s65 = ssub.s32 %s19, %s28
      %s66 = ssub.s32 %s18, %s32
      %s67 = sor.u32 %s65, %s66
      %p68 = scmp.eq.s32.totalorder %s67, 0
      %s70 = sadd.s32 %s69, 1
      %s71 = scalar_select %p68, %s69, %s70
      %p74 = pneg %p68
      %p75 = scmp.eq.s32.totalorder %s10, 9
      %p76 = por %p74, %p75
      %p77 = scmp.ne.s32.totalorder %s69, %s72
      %p78 = scmp.eq.s32.totalorder %s10, 0
      %p79 = por %p77, %p78
      %p80 = scmp.ne.s32.totalorder %s69, %s72
      %p81 = scmp.eq.s32.totalorder %s15, 9
      %p82 = por %p80, %p81
      %p83 = scmp.ne.s32.totalorder %s72, %s73
      %p84 = scmp.eq.s32.totalorder %s15, 0
      %p85 = por %p83, %p84
      %p86 = scmp.ne.s32.totalorder %s72, %s73
      %p87 = scmp.eq.s32.totalorder %s16, 9
      %p88 = por %p86, %p87
      %p90 = scmp.ne.s32.totalorder %s73, %s89
      %p91 = scmp.eq.s32.totalorder %s16, 0
      %p92 = por %p90, %p91
      %s93 = ssub.s32 %s18, %s32
      %p94 = scmp.eq.s32.totalorder %s93, 0
      %s96 = sadd.s32 %s95, 1
      %s97 = scalar_select %p94, %s95, %s96
      %p100 = pneg %p94
      %p101 = scmp.eq.s32.totalorder %s10, 9
      %p102 = por %p100, %p101
      %p103 = scmp.ne.s32.totalorder %s95, %s98
      %p104 = scmp.eq.s32.totalorder %s10, 0
      %p105 = por %p103, %p104
      %p106 = scmp.ne.s32.totalorder %s95, %s98
      %p107 = scmp.eq.s32.totalorder %s15, 9
      %p108 = por %p106, %p107
      %p109 = scmp.ne.s32.totalorder %s98, %s99
      %p110 = scmp.eq.s32.totalorder %s15, 0
      %p111 = por %p109, %p110
      %p112 = scmp.ne.s32.totalorder %s98, %s99
      %p113 = scmp.eq.s32.totalorder %s16, 9
      %p114 = por %p112, %p113
      %p116 = scmp.ne.s32.totalorder %s99, %s115
      %p117 = scmp.eq.s32.totalorder %s16, 0
      %p118 = por %p116, %p117
      %s119 = ssub.s32 %s17, %s36
      %s120 = ssub.s32 %s18, %s32
      %s121 = sor.u32 %s119, %s120
      %p122 = scmp.eq.s32.totalorder %s121, 0
      %s124 = sadd.s32 %s123, 1
      %s125 = scalar_select %p122, %s123, %s124
      %p128 = pneg %p122
      %p129 = scmp.eq.s32.totalorder %s10, 9
      %p130 = por %p128, %p129
      %p131 = scmp.ne.s32.totalorder %s123, %s126
      %p132 = scmp.eq.s32.totalorder %s10, 0
      %p133 = por %p131, %p132
      %p134 = scmp.ne.s32.totalorder %s123, %s126
      %p135 = scmp.eq.s32.totalorder %s15, 9
      %p136 = por %p134, %p135
      %p137 = scmp.ne.s32.totalorder %s126, %s127
      %p138 = scmp.eq.s32.totalorder %s15, 0
      %p139 = por %p137, %p138
      %p140 = scmp.ne.s32.totalorder %s126, %s127
      %p141 = scmp.eq.s32.totalorder %s16, 9
      %p142 = por %p140, %p141
      %p144 = scmp.ne.s32.totalorder %s127, %s143
      %p145 = scmp.eq.s32.totalorder %s16, 0
      %p146 = por %p144, %p145
      %s147 = ssub.s32 %s17, %s36
      %s148 = ssub.s32 %s18, %s32
      %s149 = sor.u32 %s147, %s148
      %p150 = scmp.eq.s32.totalorder %s149, 0
      %s152 = sadd.s32 %s151, 1
      %s153 = scalar_select %p150, %s151, %s152
      %p156 = pneg %p150
      %p157 = scmp.eq.s32.totalorder %s10, 9
      %p158 = por %p156, %p157
      %p159 = scmp.ne.s32.totalorder %s151, %s154
      %p160 = scmp.eq.s32.totalorder %s10, 0
      %p161 = por %p159, %p160
      %p162 = scmp.ne.s32.totalorder %s151, %s154
      %p163 = scmp.eq.s32.totalorder %s15, 9
      %p164 = por %p162, %p163
      %p165 = scmp.ne.s32.totalorder %s154, %s155
      %p166 = scmp.eq.s32.totalorder %s15, 0
      %p167 = por %p165, %p166
      %p168 = scmp.ne.s32.totalorder %s154, %s155
      %p169 = scmp.eq.s32.totalorder %s16, 9
      %p170 = por %p168, %p169
      %p172 = scmp.ne.s32.totalorder %s155, %s171
      %p173 = scmp.eq.s32.totalorder %s16, 0
      %p174 = por %p172, %p173
      %p175 = scmp.le.s32.totalorder 1, %s10
      %p176 = scmp.lt.s32.totalorder %s10, 11
      %p177 = pnand %p175, %p176
      %p178 = pneg %p177
      // Predicated region
      $region9: #{siglip_vision_forward.17} parent=5 // pred_check
        _
      $region10: #{siglip_vision_forward.17} parent=5 // pred_check_branch
        %180 = sbr.rel (%p177) target = $region12
      $region11: #{siglip_vision_forward.17} parent=5 // pred_region
        %s181 = ssub.s32 %s10, 1
        // Predicated region
        $region13: #{siglip_vision_forward.17} parent=11 // pred_check
          %p182 = pneg %p111
        $region14: #{siglip_vision_forward.17} parent=11 // pred_check_branch
          %184 = sbr.rel (%p182) target = $region16
        $region15: #{siglip_vision_forward.17} parent=11 // pred_region
          %p185 = scmp.lt.s32.totalorder %s21, 0
          %s186 = scalar_select %p185, %s21, 0
          %s187 = scalar_lea.vmem %s2, %s186
        $region16: #{siglip_vision_forward.17} parent=11 // pred_fallthru
          _
      $region12: #{siglip_vision_forward.17} parent=5 // pred_fallthru
        _
      %p188 = scmp.lt.s32.totalorder %s10, 10
      // Predicated region
      $region17: #{siglip_vision_forward.17} parent=5 // pred_check
        %p189 = pneg %p188
      $region18: #{siglip_vision_forward.17} parent=5 // pred_check_branch
        %191 = sbr.rel (%p189) target = $region20
      $region19: #{siglip_vision_forward.17} parent=5 // pred_region
        // Predicated region
        $region21: #{siglip_vision_forward.17} parent=19 // pred_check
          %p192 = pneg %p51
        $region22: #{siglip_vision_forward.17} parent=19 // pred_check_branch
          %194 = sbr.rel (%p192) target = $region24
        $region23: #{siglip_vision_forward.17} parent=19 // pred_region
          %s195 = sand.u32 %s41, 1
          %s196 = sand.u32 %s41, 1
          %s197 = smul.addr %s196, 16
          %s198 = scalar_lea.vmem [#allocation3], %s197
          %s199 = smul.u32 4, %s17
          %s200 = smul.addr %s199, 5
          %s201 = sadd.s32 %s19, %s200
          %s202 = smul.addr %s201, 4
          %s203 = scalar_lea.vmem %s0, %s202
          // Predicated region
          $region25: #{siglip_vision_forward.17} parent=23 // pred_check
            _
          $region26: #{siglip_vision_forward.17} parent=23 // pred_check_branch
            %205 = sbr.rel (0) target = $region28
          $region27: #{siglip_vision_forward.17} parent=23 // pred_region
            // Predicated region
            $region29: #{siglip_vision_forward.17} parent=27 // pred_check
              _
            $region30: #{siglip_vision_forward.17} parent=27 // pred_check_branch
              %207 = sbr.rel target = $region32
            $region31: #{siglip_vision_forward.17} parent=27 // pred_region
              // Predicated region
              $region44: #{siglip_vision_forward.17} parent=31 // pred_check
                _
              $region45: #{siglip_vision_forward.17} parent=31 // pred_check_branch
                %229 = sbr.rel (0) target = $region47
              $region46: #{siglip_vision_forward.17} parent=31 // pred_region
                loop: start=0, step=1, limit=1
                $region48: #{siglip_vision_forward.17} parent=46 // loop_pre_header
                  _
                $region49: #{siglip_vision_forward.17} parent=46 // loop_header
                  %s231 = sphi 0, %s235
                  %p232 = scmp.ge.s32.totalorder %s231, 1
                  %s236 = sphi %s203, %s203
                  %s237 = sphi %s198, %s198
                $region50: #{siglip_vision_forward.17} parent=46 // loop_header_branch
                  %234 = sbr.rel (%p232) target = $region54
                $region51: #{siglip_vision_forward.17} parent=46 // loop_body
                  _
                $region52: #{siglip_vision_forward.17} parent=46 // loop_footer
                  %s235 = sadd.s32 1, %s231
                $region53: #{siglip_vision_forward.17} parent=46 // loop_footer_branch
                  %230 = sbr.rel target = $region49
                $region54: #{siglip_vision_forward.17} parent=46 // loop_exit
                  _
                %s239 = ssub.s32 16, 1
                loop: start=0, step=1, limit=1
                $region55: #{siglip_vision_forward.17} parent=46 // loop_pre_header
                  _
                $region56: #{siglip_vision_forward.17} parent=46 // loop_header
                  %s241 = sphi 0, %s245
                  %p242 = scmp.ge.s32.totalorder %s241, 1
                  %s246 = sphi %s203, %s203
                  %s247 = sphi %s198, %s198
                $region57: #{siglip_vision_forward.17} parent=46 // loop_header_branch
                  %244 = sbr.rel (%p242) target = $region61
                $region58: #{siglip_vision_forward.17} parent=46 // loop_body
                  %v248 = vld [vmem:[%s246] sm:%s239]
                  %249 = vst [vmem:[%s247] sm:%s239] %v248
                  %v250 = vld [vmem:[%s246 + $0x14] sm:%s239]
                  %251 = vst [vmem:[%s247 + $0x4] sm:%s239] %v250
                  %v252 = vld [vmem:[%s246 + $0x28] sm:%s239]
                  %253 = vst [vmem:[%s247 + $0x8] sm:%s239] %v252
                  %v254 = vld [vmem:[%s246 + $0x3c] sm:%s239]
                  %255 = vst [vmem:[%s247 + $0xc] sm:%s239] %v254
                $region59: #{siglip_vision_forward.17} parent=46 // loop_footer
                  %s245 = sadd.s32 1, %s241
                $region60: #{siglip_vision_forward.17} parent=46 // loop_footer_branch
                  %240 = sbr.rel target = $region56
                $region61: #{siglip_vision_forward.17} parent=46 // loop_exit
                  _
              $region47: #{siglip_vision_forward.17} parent=31 // pred_fallthru
                _
            $region32: #{siglip_vision_forward.17} parent=27 // pred_fallthru
              _
            // Predicated region
            $region33: #{siglip_vision_forward.17} parent=27 // pred_check
              _
            $region34: #{siglip_vision_forward.17} parent=27 // pred_check_branch
              %209 = sbr.rel (0) target = $region36
            $region35: #{siglip_vision_forward.17} parent=27 // pred_region
              %s211 = ssub.s32 16, 1
              loop: start=0, step=1, limit=1
              $region37: #{siglip_vision_forward.17} parent=35 // loop_pre_header
                _
              $region38: #{siglip_vision_forward.17} parent=35 // loop_header
                %s213 = sphi 0, %s217
                %p214 = scmp.ge.s32.totalorder %s213, 1
                %s218 = sphi %s203, %s203
                %s219 = sphi %s198, %s198
              $region39: #{siglip_vision_forward.17} parent=35 // loop_header_branch
                %216 = sbr.rel (%p214) target = $region43
              $region40: #{siglip_vision_forward.17} parent=35 // loop_body
                %v220 = vld [vmem:[%s218] sm:%s211]
                %221 = vst [vmem:[%s219] sm:%s211] %v220
                %v222 = vld [vmem:[%s218 + $0x14] sm:%s211]
                %223 = vst [vmem:[%s219 + $0x4] sm:%s211] %v222
                %v224 = vld [vmem:[%s218 + $0x28] sm:%s211]
                %225 = vst [vmem:[%s219 + $0x8] sm:%s211] %v224
                %v226 = vld [vmem:[%s218 + $0x3c] sm:%s211]
                %227 = vst [vmem:[%s219 + $0xc] sm:%s211] %v226
              $region41: #{siglip_vision_forward.17} parent=35 // loop_footer
                %s217 = sadd.s32 1, %s213
              $region42: #{siglip_vision_forward.17} parent=35 // loop_footer_branch
                %212 = sbr.rel target = $region38
              $region43: #{siglip_vision_forward.17} parent=35 // loop_exit
                _
            $region36: #{siglip_vision_forward.17} parent=27 // pred_fallthru
              _
          $region28: #{siglip_vision_forward.17} parent=23 // pred_fallthru
            _
          %256 = vnop
        $region24: #{siglip_vision_forward.17} parent=19 // pred_fallthru
          _
        // Predicated region
        $region62: #{siglip_vision_forward.17} parent=19 // pred_check
          %p257 = pneg %p79
        $region63: #{siglip_vision_forward.17} parent=19 // pred_check_branch
          %259 = sbr.rel (%p257) target = $region65
        $region64: #{siglip_vision_forward.17} parent=19 // pred_region
          %s260 = smul.u32 16, %s19
          %p261 = scmp.lt.s32.totalorder %s260, 79
          %s262 = scalar_select %p261, %s260, 79
          %p263 = scmp.lt.s32.totalorder %s18, 0
          %s264 = scalar_select %p263, %s18, 0
          %s265 = sadd.s32 %s264, %s262
          %s266 = smul.addr %s265, 4
          %s267 = scalar_lea.vmem %s1, %s266
          %s268 = smul.u32 16, %s19
        $region65: #{siglip_vision_forward.17} parent=19 // pred_fallthru
          _
        // Predicated region
        $region66: #{siglip_vision_forward.17} parent=19 // pred_check
          %p269 = pneg %p133
        $region67: #{siglip_vision_forward.17} parent=19 // pred_check_branch
          %271 = sbr.rel (%p269) target = $region69
        $region68: #{siglip_vision_forward.17} parent=19 // pred_region
          %s272 = smul.u32 4, %s17
          %p273 = scmp.lt.s32.totalorder %s272, 7
          %s274 = scalar_select %p273, %s272, 7
          %p275 = scmp.lt.s32.totalorder %s18, 0
          %s276 = scalar_select %p275, %s18, 0
          %s277 = sadd.s32 %s276, %s274
          %s278 = smul.addr %s277, 4
          %s279 = scalar_lea.vmem %s3, %s278
          %s280 = smul.u32 4, %s17
        $region69: #{siglip_vision_forward.17} parent=19 // pred_fallthru
          _
      $region20: #{siglip_vision_forward.17} parent=5 // pred_fallthru
        _
      %p281 = scmp.le.s32.totalorder 1, %s10
      %p282 = scmp.lt.s32.totalorder %s10, 11
      %p283 = pnand %p281, %p282
      %p284 = pneg %p283
      // Predicated region
      $region70: #{siglip_vision_forward.17} parent=5 // pred_check
        _
      $region71: #{siglip_vision_forward.17} parent=5 // pred_check_branch
        %286 = sbr.rel (%p283) target = $region73
      $region72: #{siglip_vision_forward.17} parent=5 // pred_region
        %s287 = ssub.s32 %s10, 1
        %s288 = sand.u32 %s44, 1
        %s289 = sand.u32 %s44, 1
        %s290 = smul.addr %s289, 16
        %s291 = scalar_lea.vmem [#allocation3], %s290
        // Predicated region
        $region74: #{siglip_vision_forward.17} parent=72 // pred_check
          %p292 = pneg %p57
        $region75: #{siglip_vision_forward.17} parent=72 // pred_check_branch
          %294 = sbr.rel (%p292) target = $region77
        $region76: #{siglip_vision_forward.17} parent=72 // pred_region
          _
        $region77: #{siglip_vision_forward.17} parent=72 // pred_fallthru
          _
        %s295 = sand.u32 %s44, 1
        %s296 = sand.u32 %s44, 1
        %s297 = smul.addr %s296, 16
        %s298 = scalar_lea.vmem [#allocation3], %s297
        %p299 = pneg %p57
        %p300 = pneg %p54
        %s301 = smul.u32 16, %s22
        %p302 = scmp.lt.s32.totalorder %s301, 79
        %s303 = scalar_select %p302, %s301, 79
        %p304 = scmp.lt.s32.totalorder %s21, 0
        %s305 = scalar_select %p304, %s21, 0
        %s306 = sadd.s32 %s305, %s303
        %s307 = smul.addr %s306, 4
        %s308 = scalar_lea.vmem %s1, %s307
        %p309 = pneg %p85
        %p310 = pneg %p82
        %p311 = scmp.lt.s32.totalorder %s21, 0
        %s312 = scalar_select %p311, %s21, 0
        %s313 = scalar_lea.vmem %s2, %s312
        %p314 = pneg %p111
        %p315 = pneg %p108
        %s316 = smul.u32 4, %s20
        %p317 = scmp.lt.s32.totalorder %s316, 7
        %s318 = scalar_select %p317, %s316, 7
        %p319 = scmp.lt.s32.totalorder %s21, 0
        %s320 = scalar_select %p319, %s21, 0
        %s321 = sadd.s32 %s320, %s318
        %s322 = smul.addr %s321, 4
        %s323 = scalar_lea.vmem %s3, %s322
        %p324 = pneg %p139
        %p325 = pneg %p136
        %p326 = pneg %p167
        %p327 = pneg %p164
        %s328 = smul.u32 4, %s20
        %p329 = scmp.lt.s32.totalorder %s328, 7
        %s330 = scalar_select %p329, %s328, 7
        %p331 = scmp.lt.s32.totalorder %s21, 0
        %s332 = scalar_select %p331, %s21, 0
        %s333 = sadd.s32 %s332, %s330
        %s334 = smul.addr %s333, 4
        %s335 = scalar_lea.vmem %s4, %s334
        %s336 = smul.u32 4, %s20
        %s337 = smul.u32 16, %s22
        %p338 = scmp.lt.s32.totalorder %s337, 79
        %s339 = scalar_select %p338, %s337, 79
        %p340 = scmp.lt.s32.totalorder %s21, 0
        %s341 = scalar_select %p340, %s21, 0
        %s342 = sadd.s32 %s341, %s339
        %s343 = smul.addr %s342, 4
        %s344 = scalar_lea.vmem %s1, %s343
        %s345 = smul.u32 16, %s22
        %p346 = scmp.lt.s32.totalorder %s21, 0
        %s347 = scalar_select %p346, %s21, 0
        %s348 = scalar_lea.vmem %s2, %s347
        %s349 = smul.u32 4, %s20
        %p350 = scmp.lt.s32.totalorder %s349, 7
        %s351 = scalar_select %p350, %s349, 7
        %p352 = scmp.lt.s32.totalorder %s21, 0
        %s353 = scalar_select %p352, %s21, 0
        %s354 = sadd.s32 %s353, %s351
        %s355 = smul.addr %s354, 4
        %s356 = scalar_lea.vmem %s3, %s355
        %s357 = smul.u32 4, %s20
        %s358 = smul.u32 4, %s20
        %p359 = scmp.lt.s32.totalorder %s358, 7
        %s360 = scalar_select %p359, %s358, 7
        %p361 = scmp.lt.s32.totalorder %s21, 0
        %s362 = scalar_select %p361, %s21, 0
        %s363 = sadd.s32 %s362, %s360
        %s364 = smul.addr %s363, 4
        %s365 = scalar_lea.vmem %s4, %s364
        %s366 = smul.u32 4, %s20
        %v367 = vld [vmem:[%s291] sm:$0xf]
        %v368 = vld [vmem:[%s291 + $0x4] sm:$0xf]
        %v369 = vld [vmem:[%s291 + $0x8] sm:$0xf]
        %v370 = vld [vmem:[%s291 + $0xc] sm:$0xf]
        %v371 = vld [vmem:[%s344] sm:$0xf]
        %v372 = vld [vmem:[%s344 + $0x4] sm:$0xf]
        %v373 = vld [vmem:[%s344 + $0x8] sm:$0xf]
        %v374 = vld [vmem:[%s344 + $0xc] sm:$0xf]
        %v375 = vld [vmem:[%s344 + $0x10] sm:$0xf]
        %v376 = vld [vmem:[%s344 + $0x14] sm:$0xf]
        %v377 = vld [vmem:[%s344 + $0x18] sm:$0xf]
        %v378 = vld [vmem:[%s344 + $0x1c] sm:$0xf]
        %v379 = vld [vmem:[%s344 + $0x20] sm:$0xf]
        %v380 = vld [vmem:[%s344 + $0x24] sm:$0xf]
        %v381 = vld [vmem:[%s344 + $0x28] sm:$0xf]
        %v382 = vld [vmem:[%s344 + $0x2c] sm:$0xf]
        %v383 = vld [vmem:[%s344 + $0x30] sm:$0xf]
        %v384 = vld [vmem:[%s344 + $0x34] sm:$0xf]
        %v385 = vld [vmem:[%s344 + $0x38] sm:$0xf]
        %v386 = vld [vmem:[%s344 + $0x3c] sm:$0xf]
        %v391 = vunpack.c.l.b16 %v367
        %v392 = vunpack.c.l.b16 %v368
        %v393 = vunpack.c.l.b16 %v369
        %v394 = vunpack.c.l.b16 %v370
        %v395 = vpack.c.b16 %v392, %v391
        %v396 = vpack.c.b16 %v394, %v393
        %v415 = vunpack.c.l.b16 %v371
        %v416 = vunpack.c.l.b16 %v372
        %v417 = vunpack.c.l.b16 %v373
        %v418 = vunpack.c.l.b16 %v374
        %v419 = vunpack.c.l.b16 %v375
        %v420 = vunpack.c.l.b16 %v376
        %v421 = vunpack.c.l.b16 %v377
        %v422 = vunpack.c.l.b16 %v378
        %v423 = vunpack.c.l.b16 %v379
        %v424 = vunpack.c.l.b16 %v380
        %v425 = vunpack.c.l.b16 %v381
        %v426 = vunpack.c.l.b16 %v382
        %v427 = vunpack.c.l.b16 %v383
        %v428 = vunpack.c.l.b16 %v384
        %v429 = vunpack.c.l.b16 %v385
        %v430 = vunpack.c.l.b16 %v386
        %v431 = vpack.c.b16 %v416, %v415
        %v432 = vpack.c.b16 %v418, %v417
        %v433 = vpack.c.b16 %v420, %v419
        %v434 = vpack.c.b16 %v422, %v421
        %v435 = vpack.c.b16 %v424, %v423
        %v436 = vpack.c.b16 %v426, %v425
        %v437 = vpack.c.b16 %v428, %v427
        %v438 = vpack.c.b16 %v430, %v429
        %447 = vmatpush.bf16.msra.mxu0 %v438
        %448 = vmatpush.bf16.msra.mxu0 %v437
        %449 = vmatpush.bf16.msra.mxu0 %v436
        %450 = vmatpush.bf16.msra.mxu0 %v435
        %451 = vmatpush.bf16.msra.mxu0 %v434
        %452 = vmatpush.bf16.msra.mxu0 %v433
        %453 = vmatpush.bf16.msra.mxu0 %v432
        %454 = vmatpush.bf16.msra.mxu0 %v431
        %455 = vmatmul.bf16.gmra.mxu0 %v395
        %v456 = vpop.f32.mrf.mxu0
        %v457 = vadd.f32 0.0, %v456
        %v458 = vpop.f32.mrf.mxu0
        %v459 = vadd.f32 0.0, %v458
        %460 = vmatmul.bf16.gmra.mxu0 %v396
        %v461 = vpop.f32.mrf.mxu0
        %v462 = vadd.f32 0.0, %v461
        %v463 = vpop.f32.mrf.mxu0
        %v464 = vadd.f32 0.0, %v463
        %465 = vdwg.mxu0
        %p466 = scmp.eq.s32.totalorder %s22, 0
        // Predicated region
        $region78: #{siglip_vision_forward.17} parent=72 // pred_check
          %p467 = pneg %p466
        $region79: #{siglip_vision_forward.17} parent=72 // pred_check_branch
          %469 = sbr.rel (%p467) target = $region81
        $region80: #{siglip_vision_forward.17} parent=72 // pred_region
          %470 = vst [vmem:[#allocation2] sm:$0xff] 0.0
          %471 = vst [vmem:[#allocation2 + $0x8] sm:$0xff] 0.0
          %472 = vst [vmem:[#allocation2 + $0x10] sm:$0xff] 0.0
          %473 = vst [vmem:[#allocation2 + $0x18] sm:$0xff] 0.0
        $region81: #{siglip_vision_forward.17} parent=72 // pred_fallthru
          _
        %v474 = vld [vmem:[#allocation2] sm:$0xff]
        %v475 = vld [vmem:[#allocation2 + $0x8] sm:$0xff]
        %v476 = vld [vmem:[#allocation2 + $0x10] sm:$0xff]
        %v477 = vld [vmem:[#allocation2 + $0x18] sm:$0xff]
        %v478 = vadd.f32 %v474, %v457
        %v479 = vadd.f32 %v475, %v459
        %v480 = vadd.f32 %v476, %v462
        %v481 = vadd.f32 %v477, %v464
        %482 = vst [vmem:[#allocation2] sm:$0xff] %v478
        %483 = vst [vmem:[#allocation2 + $0x8] sm:$0xff] %v479
        %484 = vst [vmem:[#allocation2 + $0x10] sm:$0xff] %v480
        %485 = vst [vmem:[#allocation2 + $0x18] sm:$0xff] %v481
        %p486 = scmp.eq.s32.totalorder %s22, 4
        // Predicated region
        $region82: #{siglip_vision_forward.17} parent=72 // pred_check
          %p487 = pneg %p486
        $region83: #{siglip_vision_forward.17} parent=72 // pred_check_branch
          %489 = sbr.rel (%p487) target = $region85
        $region84: #{siglip_vision_forward.17} parent=72 // pred_region
          %v490 = vld [vmem:[#allocation2] sm:$0xff]
          %v491 = vld [vmem:[#allocation2 + $0x8] sm:$0xff]
          %v492 = vld [vmem:[#allocation2 + $0x10] sm:$0xff]
          %v493 = vld [vmem:[#allocation2 + $0x18] sm:$0xff]
          %v494 = vld [vmem:[%s348] sm:$0x1]
          %v495 = vunpack.c.l.bf16 %v494
          %v496 = vperm.slane %v495, 0
          %v497 = vadd.f32 %v490, %v496
          %v498 = vadd.f32 %v491, %v496
          %v499 = vadd.f32 %v492, %v496
          %v500 = vadd.f32 %v493, %v496
          %v501 = vld [vmem:[%s356] sm:$0xf]
          %v502 = vld [vmem:[%s356 + $0x4] sm:$0xf]
          %v503 = vld [vmem:[%s356 + $0x8] sm:$0xf]
          %v504 = vld [vmem:[%s356 + $0xc] sm:$0xf]
          %v505 = vunpack.c.l.bf16 %v501
          %v506 = vunpack.c.l.bf16 %v502
          %v507 = vunpack.c.l.bf16 %v503
          %v508 = vunpack.c.l.bf16 %v504
          %v509 = vadd.f32 %v497, %v505
          %v510 = vadd.f32 %v498, %v506
          %v511 = vadd.f32 %v499, %v507
          %v512 = vadd.f32 %v500, %v508
          %v513 = vpack.c.bf16 %v509, %v509
          %v514 = vpack.c.bf16 %v510, %v510
          %v515 = vpack.c.bf16 %v511, %v511
          %v516 = vpack.c.bf16 %v512, %v512
          %517 = vst [vmem:[%s365] sm:$0xf] %v513
          %518 = vst [vmem:[%s365 + $0x4] sm:$0xf] %v514
          %519 = vst [vmem:[%s365 + $0x8] sm:$0xf] %v515
          %520 = vst [vmem:[%s365 + $0xc] sm:$0xf] %v516
        $region85: #{siglip_vision_forward.17} parent=72 // pred_fallthru
          _
        %s521 = smul.u32 4, %s20
        %p522 = scmp.lt.s32.totalorder %s521, 7
        %s523 = scalar_select %p522, %s521, 7
        %p524 = scmp.lt.s32.totalorder %s21, 0
        %s525 = scalar_select %p524, %s21, 0
        %s526 = sadd.s32 %s525, %s523
        %s527 = smul.addr %s526, 4
        %s528 = scalar_lea.vmem %s4, %s527
        // Predicated region
        $region86: #{siglip_vision_forward.17} parent=72 // pred_check
          %p529 = pneg %p164
        $region87: #{siglip_vision_forward.17} parent=72 // pred_check_branch
          %531 = sbr.rel (%p529) target = $region89
        $region88: #{siglip_vision_forward.17} parent=72 // pred_region
          %s532 = smul.u32 4, %s20
        $region89: #{siglip_vision_forward.17} parent=72 // pred_fallthru
          _
      $region73: #{siglip_vision_forward.17} parent=5 // pred_fallthru
        _
      %p533 = scmp.le.s32.totalorder 2, %s10
      // Predicated region
      $region90: #{siglip_vision_forward.17} parent=5 // pred_check
        %p534 = pneg %p533
      $region91: #{siglip_vision_forward.17} parent=5 // pred_check_branch
        %536 = sbr.rel (%p534) target = $region93
      $region92: #{siglip_vision_forward.17} parent=5 // pred_region
        %s537 = ssub.s32 %s10, 2
        // Predicated region
        $region94: #{siglip_vision_forward.17} parent=92 // pred_check
          %p538 = pneg %p170
        $region95: #{siglip_vision_forward.17} parent=92 // pred_check_branch
          %540 = sbr.rel (%p538) target = $region97
        $region96: #{siglip_vision_forward.17} parent=92 // pred_region
          %s541 = smul.u32 4, %s23
          %p542 = scmp.lt.s32.totalorder %s541, 7
          %s543 = scalar_select %p542, %s541, 7
          %p544 = scmp.lt.s32.totalorder %s24, 0
          %s545 = scalar_select %p544, %s24, 0
          %s546 = sadd.s32 %s545, %s543
          %s547 = smul.addr %s546, 4
          %s548 = scalar_lea.vmem %s4, %s547
        $region97: #{siglip_vision_forward.17} parent=92 // pred_fallthru
          _
      $region93: #{siglip_vision_forward.17} parent=5 // pred_fallthru
        _
    $region6: #{siglip_vision_forward.17} parent=1 // loop_footer
      %s14 = sadd.s32 1, %s10
    $region7: #{siglip_vision_forward.17} parent=1 // loop_footer_branch
      %9 = sbr.rel target = $region3
    $region8: #{siglip_vision_forward.17} parent=1 // loop_exit
      _

// kernel: siglip_vision_forward.16
$region0: #{siglip_vision_forward.16}
  #allocation0 [shape = 'u32[]', space=smem, size = 0x4, offset = 0x4, fixed_abs, tag = 'smem constant byte address 0x4 - core index']
  #allocation1 [shape = 'u32[72,128]{1,0:T(1,128)}', space=vmem, size = 0x9000, scoped, tag = 'internal scratch']
  %s0 = inlined_call_operand.vmem [shape: bf16[64,128], index: 0, kind: input, shape index: {}]
  %s1 = inlined_call_operand.vmem [shape: bf16[128,640], index: 1, kind: input, shape index: {}]
  %s2 = inlined_call_operand.vmem [shape: bf16[1,640], index: 2, kind: input, shape index: {}]
  %s3 = inlined_call_operand.vmem [shape: bf16[1,128], index: 3, kind: input, shape index: {}]
  %s4 = inlined_call_operand.vmem [shape: bf16[1,128], index: 4, kind: input, shape index: {}]
  %s5 = inlined_call_operand.vmem [shape: bf16[64,640], index: 5, kind: output, shape index: {}]
  %s6 = sld [smem:[#allocation0]]
  $region131: #{siglip_vision_forward.16} parent=0
    _
  %s8 = ssub.s32 1, %s6
  %s9 = scalar_select 0, %s8, %s6
  $region1: #{siglip_vision_forward.16} parent=0
    #allocation2 [shape = 'u8[65536]{0}', space=vmem, size = 0x10000, scoped, tag = 'input window, operand 1']
    #allocation3 [shape = 'u8[16384]{0}', space=vmem, size = 0x4000, scoped, tag = 'output window, operand 0']
    loop: start=0, step=1, limit=12
    $region2: #{siglip_vision_forward.16} parent=1 // loop_pre_header
      _
    $region3: #{siglip_vision_forward.16} parent=1 // loop_header
      %s11 = sphi 0, %s15
      %p12 = scmp.ge.s32.totalorder %s11, 12
      %s18 = sphi 0, %s37
      %s19 = sphi 0, %s33
      %s20 = sphi 0, %s29
      %s21 = sphi 0, %s18
      %s22 = sphi 0, %s19
      %s23 = sphi 0, %s20
      %s24 = sphi 0, %s21
      %s25 = sphi 0, %s22
      %s26 = sphi 0, %s23
      %s42 = sphi 0, %s44
      %s45 = sphi 0, %s42
      %s46 = sphi 0, %s45
      %s62 = sphi 0, %s46
      %s70 = sphi 0, %s72
      %s73 = sphi 0, %s70
      %s74 = sphi 0, %s73
      %s90 = sphi 0, %s74
      %s96 = sphi 0, %s98
      %s99 = sphi 0, %s96
      %s100 = sphi 0, %s99
      %s116 = sphi 0, %s100
      %s120 = sphi 0, %s120
      %s122 = sphi 0, %s120
      %s123 = sphi 0, %s122
      %s137 = sphi 0, %s123
      %s141 = sphi 0, %s141
      %s143 = sphi 0, %s141
      %s144 = sphi 0, %s143
      %s158 = sphi 0, %s144
      %s166 = sphi 0, %s168
      %s169 = sphi 0, %s166
      %s170 = sphi 0, %s169
      %s186 = sphi 0, %s170
    $region4: #{siglip_vision_forward.16} parent=1 // loop_header_branch
      %14 = sbr.rel (%p12) target = $region8
    $region5: #{siglip_vision_forward.16} parent=1 // loop_body
      %s16 = ssub.s32 %s11, 1
      %s17 = ssub.s32 %s11, 2
      %s27 = sadd.s32 1, %s20
      %p28 = scmp.ge.s32.totalorder %s27, 1
      %s29 = scalar_select %p28, 0, %s27
      %s30 = sadd.s32 1, %s19
      %s31 = scalar_select %p28, %s30, %s19
      %p32 = scmp.ge.s32.totalorder %s31, 5
      %s33 = scalar_select %p32, 0, %s31
      %s34 = sadd.s32 1, %s18
      %s35 = scalar_select %p32, %s34, %s18
      %p36 = scmp.ge.s32.totalorder %s35, 2
      %s37 = scalar_select %p36, 0, %s35
      %s38 = ssub.s32 %s18, %s37
      %s39 = ssub.s32 %s20, %s29
      %s40 = sor.u32 %s38, %s39
      %p41 = scmp.eq.s32.totalorder %s40, 0
      %s43 = sadd.s32 %s42, 1
      %s44 = scalar_select %p41, %s42, %s43
      %p47 = pneg %p41
      %p48 = scmp.eq.s32.totalorder %s11, 9
      %p49 = por %p47, %p48
      %p50 = scmp.ne.s32.totalorder %s42, %s45
      %p51 = scmp.eq.s32.totalorder %s11, 0
      %p52 = por %p50, %p51
      %p53 = scmp.ne.s32.totalorder %s42, %s45
      %p54 = scmp.eq.s32.totalorder %s16, 9
      %p55 = por %p53, %p54
      %p56 = scmp.ne.s32.totalorder %s45, %s46
      %p57 = scmp.eq.s32.totalorder %s16, 0
      %p58 = por %p56, %p57
      %p59 = scmp.ne.s32.totalorder %s45, %s46
      %p60 = scmp.eq.s32.totalorder %s17, 9
      %p61 = por %p59, %p60
      %p63 = scmp.ne.s32.totalorder %s46, %s62
      %p64 = scmp.eq.s32.totalorder %s17, 0
      %p65 = por %p63, %p64
      %s66 = ssub.s32 %s20, %s29
      %s67 = ssub.s32 %s19, %s33
      %s68 = sor.u32 %s66, %s67
      %p69 = scmp.eq.s32.totalorder %s68, 0
      %s71 = sadd.s32 %s70, 1
      %s72 = scalar_select %p69, %s70, %s71
      %p75 = pneg %p69
      %p76 = scmp.eq.s32.totalorder %s11, 9
      %p77 = por %p75, %p76
      %p78 = scmp.ne.s32.totalorder %s70, %s73
      %p79 = scmp.eq.s32.totalorder %s11, 0
      %p80 = por %p78, %p79
      %p81 = scmp.ne.s32.totalorder %s70, %s73
      %p82 = scmp.eq.s32.totalorder %s16, 9
      %p83 = por %p81, %p82
      %p84 = scmp.ne.s32.totalorder %s73, %s74
      %p85 = scmp.eq.s32.totalorder %s16, 0
      %p86 = por %p84, %p85
      %p87 = scmp.ne.s32.totalorder %s73, %s74
      %p88 = scmp.eq.s32.totalorder %s17, 9
      %p89 = por %p87, %p88
      %p91 = scmp.ne.s32.totalorder %s74, %s90
      %p92 = scmp.eq.s32.totalorder %s17, 0
      %p93 = por %p91, %p92
      %s94 = ssub.s32 %s19, %s33
      %p95 = scmp.eq.s32.totalorder %s94, 0
      %s97 = sadd.s32 %s96, 1
      %s98 = scalar_select %p95, %s96, %s97
      %p101 = pneg %p95
      %p102 = scmp.eq.s32.totalorder %s11, 9
      %p103 = por %p101, %p102
      %p104 = scmp.ne.s32.totalorder %s96, %s99
      %p105 = scmp.eq.s32.totalorder %s11, 0
      %p106 = por %p104, %p105
      %p107 = scmp.ne.s32.totalorder %s96, %s99
      %p108 = scmp.eq.s32.totalorder %s16, 9
      %p109 = por %p107, %p108
      %p110 = scmp.ne.s32.totalorder %s99, %s100
      %p111 = scmp.eq.s32.totalorder %s16, 0
      %p112 = por %p110, %p111
      %p113 = scmp.ne.s32.totalorder %s99, %s100
      %p114 = scmp.eq.s32.totalorder %s17, 9
      %p115 = por %p113, %p114
      %p117 = scmp.ne.s32.totalorder %s100, %s116
      %p118 = scmp.eq.s32.totalorder %s17, 0
      %p119 = por %p117, %p118
      %s121 = sadd.s32 %s120, 1
      %p124 = scmp.eq.s32.totalorder %s11, 9
      %p125 = scmp.ne.s32.totalorder %s120, %s122
      %p126 = scmp.eq.s32.totalorder %s11, 0
      %p127 = por %p125, %p126
      %p128 = scmp.ne.s32.totalorder %s120, %s122
      %p129 = scmp.eq.s32.totalorder %s16, 9
      %p130 = por %p128, %p129
      %p131 = scmp.ne.s32.totalorder %s122, %s123
      %p132 = scmp.eq.s32.totalorder %s16, 0
      %p133 = por %p131, %p132
      %p134 = scmp.ne.s32.totalorder %s122, %s123
      %p135 = scmp.eq.s32.totalorder %s17, 9
      %p136 = por %p134, %p135
      %p138 = scmp.ne.s32.totalorder %s123, %s137
      %p139 = scmp.eq.s32.totalorder %s17, 0
      %p140 = por %p138, %p139
      %s142 = sadd.s32 %s141, 1
      %p145 = scmp.eq.s32.totalorder %s11, 9
      %p146 = scmp.ne.s32.totalorder %s141, %s143
      %p147 = scmp.eq.s32.totalorder %s11, 0
      %p148 = por %p146, %p147
      %p149 = scmp.ne.s32.totalorder %s141, %s143
      %p150 = scmp.eq.s32.totalorder %s16, 9
      %p151 = por %p149, %p150
      %p152 = scmp.ne.s32.totalorder %s143, %s144
      %p153 = scmp.eq.s32.totalorder %s16, 0
      %p154 = por %p152, %p153
      %p155 = scmp.ne.s32.totalorder %s143, %s144
      %p156 = scmp.eq.s32.totalorder %s17, 9
      %p157 = por %p155, %p156
      %p159 = scmp.ne.s32.totalorder %s144, %s158
      %p160 = scmp.eq.s32.totalorder %s17, 0
      %p161 = por %p159, %p160
      %s162 = ssub.s32 %s18, %s37
      %s163 = ssub.s32 %s19, %s33
      %s164 = sor.u32 %s162, %s163
      %p165 = scmp.eq.s32.totalorder %s164, 0
      %s167 = sadd.s32 %s166, 1
      %s168 = scalar_select %p165, %s166, %s167
      %p171 = pneg %p165
      %p172 = scmp.eq.s32.totalorder %s11, 9
      %p173 = por %p171, %p172
      %p174 = scmp.ne.s32.totalorder %s166, %s169
      %p175 = scmp.eq.s32.totalorder %s11, 0
      %p176 = por %p174, %p175
      %p177 = scmp.ne.s32.totalorder %s166, %s169
      %p178 = scmp.eq.s32.totalorder %s16, 9
      %p179 = por %p177, %p178
      %p180 = scmp.ne.s32.totalorder %s169, %s170
      %p181 = scmp.eq.s32.totalorder %s16, 0
      %p182 = por %p180, %p181
      %p183 = scmp.ne.s32.totalorder %s169, %s170
      %p184 = scmp.eq.s32.totalorder %s17, 9
      %p185 = por %p183, %p184
      %p187 = scmp.ne.s32.totalorder %s170, %s186
      %p188 = scmp.eq.s32.totalorder %s17, 0
      %p189 = por %p187, %p188
      %p190 = scmp.le.s32.totalorder 1, %s11
      %p191 = scmp.lt.s32.totalorder %s11, 11
      %p192 = pnand %p190, %p191
      %p193 = pneg %p192
      // Predicated region
      $region9: #{siglip_vision_forward.16} parent=5 // pred_check
        _
      $region10: #{siglip_vision_forward.16} parent=5 // pred_check_branch
        %195 = sbr.rel (%p192) target = $region12
      $region11: #{siglip_vision_forward.16} parent=5 // pred_region
        %s196 = ssub.s32 %s11, 1
        // Predicated region
        $region13: #{siglip_vision_forward.16} parent=11 // pred_check
          %p197 = pneg %p133
        $region14: #{siglip_vision_forward.16} parent=11 // pred_check_branch
          %199 = sbr.rel (%p197) target = $region16
        $region15: #{siglip_vision_forward.16} parent=11 // pred_region
          _
        $region16: #{siglip_vision_forward.16} parent=11 // pred_fallthru
          _
        // Predicated region
        $region17: #{siglip_vision_forward.16} parent=11 // pred_check
          %p200 = pneg %p154
        $region18: #{siglip_vision_forward.16} parent=11 // pred_check_branch
          %202 = sbr.rel (%p200) target = $region20
        $region19: #{siglip_vision_forward.16} parent=11 // pred_region
          _
        $region20: #{siglip_vision_forward.16} parent=11 // pred_fallthru
          _
      $region12: #{siglip_vision_forward.16} parent=5 // pred_fallthru
        _
      %p203 = scmp.lt.s32.totalorder %s11, 10
      // Predicated region
      $region21: #{siglip_vision_forward.16} parent=5 // pred_check
        %p204 = pneg %p203
      $region22: #{siglip_vision_forward.16} parent=5 // pred_check_branch
        %206 = sbr.rel (%p204) target = $region24
      $region23: #{siglip_vision_forward.16} parent=5 // pred_region
        // Predicated region
        $region25: #{siglip_vision_forward.16} parent=23 // pred_check
          %p207 = pneg %p52
        $region26: #{siglip_vision_forward.16} parent=23 // pred_check_branch
          %209 = sbr.rel (%p207) target = $region28
        $region27: #{siglip_vision_forward.16} parent=23 // pred_region
          %s210 = smul.u32 4, %s18
          %p211 = scmp.lt.s32.totalorder %s210, 7
          %s212 = scalar_select %p211, %s210, 7
          %p213 = scmp.lt.s32.totalorder %s20, 0
          %s214 = scalar_select %p213, %s20, 0
          %s215 = sadd.s32 %s214, %s212
          %s216 = smul.addr %s215, 4
          %s217 = scalar_lea.vmem %s0, %s216
          %s218 = smul.u32 4, %s18
        $region28: #{siglip_vision_forward.16} parent=23 // pred_fallthru
          _
        // Predicated region
        $region29: #{siglip_vision_forward.16} parent=23 // pred_check
          %p219 = pneg %p80
        $region30: #{siglip_vision_forward.16} parent=23 // pred_check_branch
          %221 = sbr.rel (%p219) target = $region32
        $region31: #{siglip_vision_forward.16} parent=23 // pred_region
          %s222 = sand.u32 %s70, 1
          %s223 = sand.u32 %s70, 1
          %s224 = smul.addr %s223, 64
          %s225 = scalar_lea.vmem [#allocation2], %s224
          %s226 = smul.u32 16, %s20
          %s227 = smul.addr %s226, 5
          %s228 = sadd.s32 %s19, %s227
          %s229 = smul.addr %s228, 4
          %s230 = scalar_lea.vmem %s1, %s229
          // Predicated region
          $region33: #{siglip_vision_forward.16} parent=31 // pred_check
            _
          $region34: #{siglip_vision_forward.16} parent=31 // pred_check_branch
            %232 = sbr.rel (0) target = $region36
          $region35: #{siglip_vision_forward.16} parent=31 // pred_region
            // Predicated region
            $region37: #{siglip_vision_forward.16} parent=35 // pred_check
              _
            $region38: #{siglip_vision_forward.16} parent=35 // pred_check_branch
              %234 = sbr.rel target = $region40
            $region39: #{siglip_vision_forward.16} parent=35 // pred_region
              // Predicated region
              $region52: #{siglip_vision_forward.16} parent=39 // pred_check
                _
              $region53: #{siglip_vision_forward.16} parent=39 // pred_check_branch
                %280 = sbr.rel (0) target = $region55
              $region54: #{siglip_vision_forward.16} parent=39 // pred_region
                loop: start=0, step=1, limit=1
                $region56: #{siglip_vision_forward.16} parent=54 // loop_pre_header
                  _
                $region57: #{siglip_vision_forward.16} parent=54 // loop_header
                  %s282 = sphi 0, %s286
                  %p283 = scmp.ge.s32.totalorder %s282, 1
                  %s287 = sphi %s230, %s230
                  %s288 = sphi %s225, %s225
                $region58: #{siglip_vision_forward.16} parent=54 // loop_header_branch
                  %285 = sbr.rel (%p283) target = $region62
                $region59: #{siglip_vision_forward.16} parent=54 // loop_body
                  _
                $region60: #{siglip_vision_forward.16} parent=54 // loop_footer
                  %s286 = sadd.s32 1, %s282
                $region61: #{siglip_vision_forward.16} parent=54 // loop_footer_branch
                  %281 = sbr.rel target = $region57
                $region62: #{siglip_vision_forward.16} parent=54 // loop_exit
                  _
                %s290 = ssub.s32 16, 1
                loop: start=0, step=1, limit=1
                $region63: #{siglip_vision_forward.16} parent=54 // loop_pre_header
                  _
                $region64: #{siglip_vision_forward.16} parent=54 // loop_header
                  %s292 = sphi 0, %s296
                  %p293 = scmp.ge.s32.totalorder %s292, 1
                  %s297 = sphi %s230, %s230
                  %s298 = sphi %s225, %s225
                $region65: #{siglip_vision_forward.16} parent=54 // loop_header_branch
                  %295 = sbr.rel (%p293) target = $region69
                $region66: #{siglip_vision_forward.16} parent=54 // loop_body
                  %v299 = vld [vmem:[%s297] sm:%s290]
                  %300 = vst [vmem:[%s298] sm:%s290] %v299
                  %v301 = vld [vmem:[%s297 + $0x14] sm:%s290]
                  %302 = vst [vmem:[%s298 + $0x4] sm:%s290] %v301
                  %v303 = vld [vmem:[%s297 + $0x28] sm:%s290]
                  %304 = vst [vmem:[%s298 + $0x8] sm:%s290] %v303
                  %v305 = vld [vmem:[%s297 + $0x3c] sm:%s290]
                  %306 = vst [vmem:[%s298 + $0xc] sm:%s290] %v305
                  %v307 = vld [vmem:[%s297 + $0x50] sm:%s290]
                  %308 = vst [vmem:[%s298 + $0x10] sm:%s290] %v307
                  %v309 = vld [vmem:[%s297 + $0x64] sm:%s290]
                  %310 = vst [vmem:[%s298 + $0x14] sm:%s290] %v309
                  %v311 = vld [vmem:[%s297 + $0x78] sm:%s290]
                  %312 = vst [vmem:[%s298 + $0x18] sm:%s290] %v311
                  %v313 = vld [vmem:[%s297 + $0x8c] sm:%s290]
                  %314 = vst [vmem:[%s298 + $0x1c] sm:%s290] %v313
                  %v315 = vld [vmem:[%s297 + $0xa0] sm:%s290]
                  %316 = vst [vmem:[%s298 + $0x20] sm:%s290] %v315
                  %v317 = vld [vmem:[%s297 + $0xb4] sm:%s290]
                  %318 = vst [vmem:[%s298 + $0x24] sm:%s290] %v317
                  %v319 = vld [vmem:[%s297 + $0xc8] sm:%s290]
                  %320 = vst [vmem:[%s298 + $0x28] sm:%s290] %v319
                  %v321 = vld [vmem:[%s297 + $0xdc] sm:%s290]
                  %322 = vst [vmem:[%s298 + $0x2c] sm:%s290] %v321
                  %v323 = vld [vmem:[%s297 + $0xf0] sm:%s290]
                  %324 = vst [vmem:[%s298 + $0x30] sm:%s290] %v323
                  %v325 = vld [vmem:[%s297 + $0x104] sm:%s290]
                  %326 = vst [vmem:[%s298 + $0x34] sm:%s290] %v325
                  %v327 = vld [vmem:[%s297 + $0x118] sm:%s290]
                  %328 = vst [vmem:[%s298 + $0x38] sm:%s290] %v327
                  %v329 = vld [vmem:[%s297 + $0x12c] sm:%s290]
                  %330 = vst [vmem:[%s298 + $0x3c] sm:%s290] %v329
                $region67: #{siglip_vision_forward.16} parent=54 // loop_footer
                  %s296 = sadd.s32 1, %s292
                $region68: #{siglip_vision_forward.16} parent=54 // loop_footer_branch
                  %291 = sbr.rel target = $region64
                $region69: #{siglip_vision_forward.16} parent=54 // loop_exit
                  _
              $region55: #{siglip_vision_forward.16} parent=39 // pred_fallthru
                _
            $region40: #{siglip_vision_forward.16} parent=35 // pred_fallthru
              _
            // Predicated region
            $region41: #{siglip_vision_forward.16} parent=35 // pred_check
              _
            $region42: #{siglip_vision_forward.16} parent=35 // pred_check_branch
              %236 = sbr.rel (0) target = $region44
            $region43: #{siglip_vision_forward.16} parent=35 // pred_region
              %s238 = ssub.s32 16, 1
              loop: start=0, step=1, limit=1
              $region45: #{siglip_vision_forward.16} parent=43 // loop_pre_header
                _
              $region46: #{siglip_vision_forward.16} parent=43 // loop_header
                %s240 = sphi 0, %s244
                %p241 = scmp.ge.s32.totalorder %s240, 1
                %s245 = sphi %s230, %s230
                %s246 = sphi %s225, %s225
              $region47: #{siglip_vision_forward.16} parent=43 // loop_header_branch
                %243 = sbr.rel (%p241) target = $region51
              $region48: #{siglip_vision_forward.16} parent=43 // loop_body
                %v247 = vld [vmem:[%s245] sm:%s238]
                %248 = vst [vmem:[%s246] sm:%s238] %v247
                %v249 = vld [vmem:[%s245 + $0x14] sm:%s238]
                %250 = vst [vmem:[%s246 + $0x4] sm:%s238] %v249
                %v251 = vld [vmem:[%s245 + $0x28] sm:%s238]
                %252 = vst [vmem:[%s246 + $0x8] sm:%s238] %v251
                %v253 = vld [vmem:[%s245 + $0x3c] sm:%s238]
                %254 = vst [vmem:[%s246 + $0xc] sm:%s238] %v253
                %v255 = vld [vmem:[%s245 + $0x50] sm:%s238]
                %256 = vst [vmem:[%s246 + $0x10] sm:%s238] %v255
                %v257 = vld [vmem:[%s245 + $0x64] sm:%s238]
                %258 = vst [vmem:[%s246 + $0x14] sm:%s238] %v257
                %v259 = vld [vmem:[%s245 + $0x78] sm:%s238]
                %260 = vst [vmem:[%s246 + $0x18] sm:%s238] %v259
                %v261 = vld [vmem:[%s245 + $0x8c] sm:%s238]
                %262 = vst [vmem:[%s246 + $0x1c] sm:%s238] %v261
                %v263 = vld [vmem:[%s245 + $0xa0] sm:%s238]
                %264 = vst [vmem:[%s246 + $0x20] sm:%s238] %v263
                %v265 = vld [vmem:[%s245 + $0xb4] sm:%s238]
                %266 = vst [vmem:[%s246 + $0x24] sm:%s238] %v265
                %v267 = vld [vmem:[%s245 + $0xc8] sm:%s238]
                %268 = vst [vmem:[%s246 + $0x28] sm:%s238] %v267
                %v269 = vld [vmem:[%s245 + $0xdc] sm:%s238]
                %270 = vst [vmem:[%s246 + $0x2c] sm:%s238] %v269
                %v271 = vld [vmem:[%s245 + $0xf0] sm:%s238]
                %272 = vst [vmem:[%s246 + $0x30] sm:%s238] %v271
                %v273 = vld [vmem:[%s245 + $0x104] sm:%s238]
                %274 = vst [vmem:[%s246 + $0x34] sm:%s238] %v273
                %v275 = vld [vmem:[%s245 + $0x118] sm:%s238]
                %276 = vst [vmem:[%s246 + $0x38] sm:%s238] %v275
                %v277 = vld [vmem:[%s245 + $0x12c] sm:%s238]
                %278 = vst [vmem:[%s246 + $0x3c] sm:%s238] %v277
              $region49: #{siglip_vision_forward.16} parent=43 // loop_footer
                %s244 = sadd.s32 1, %s240
              $region50: #{siglip_vision_forward.16} parent=43 // loop_footer_branch
                %239 = sbr.rel target = $region46
              $region51: #{siglip_vision_forward.16} parent=43 // loop_exit
                _
            $region44: #{siglip_vision_forward.16} parent=35 // pred_fallthru
              _
          $region36: #{siglip_vision_forward.16} parent=31 // pred_fallthru
            _
          %331 = vnop
        $region32: #{siglip_vision_forward.16} parent=23 // pred_fallthru
          _
        // Predicated region
        $region70: #{siglip_vision_forward.16} parent=23 // pred_check
          %p332 = pneg %p106
        $region71: #{siglip_vision_forward.16} parent=23 // pred_check_branch
          %334 = sbr.rel (%p332) target = $region73
        $region72: #{siglip_vision_forward.16} parent=23 // pred_region
          %p335 = scmp.lt.s32.totalorder %s19, 4
          %s336 = scalar_select %p335, %s19, 4
          %s337 = scalar_lea.vmem %s2, %s336
        $region73: #{siglip_vision_forward.16} parent=23 // pred_fallthru
          _
      $region24: #{siglip_vision_forward.16} parent=5 // pred_fallthru
        _
      %p338 = scmp.le.s32.totalorder 1, %s11
      %p339 = scmp.lt.s32.totalorder %s11, 11
      %p340 = pnand %p338, %p339
      %p341 = pneg %p340
      // Predicated region
      $region74: #{siglip_vision_forward.16} parent=5 // pred_check
        _
      $region75: #{siglip_vision_forward.16} parent=5 // pred_check_branch
        %343 = sbr.rel (%p340) target = $region77
      $region76: #{siglip_vision_forward.16} parent=5 // pred_region
        %s344 = ssub.s32 %s11, 1
        %s345 = sand.u32 %s73, 1
        %s346 = sand.u32 %s73, 1
        %s347 = smul.addr %s346, 64
        %s348 = scalar_lea.vmem [#allocation2], %s347
        // Predicated region
        $region78: #{siglip_vision_forward.16} parent=76 // pred_check
          %p349 = pneg %p86
        $region79: #{siglip_vision_forward.16} parent=76 // pred_check_branch
          %351 = sbr.rel (%p349) target = $region81
        $region80: #{siglip_vision_forward.16} parent=76 // pred_region
          _
        $region81: #{siglip_vision_forward.16} parent=76 // pred_fallthru
          _
        %s352 = smul.u32 4, %s21
        %p353 = scmp.lt.s32.totalorder %s352, 7
        %s354 = scalar_select %p353, %s352, 7
        %p355 = scmp.lt.s32.totalorder %s23, 0
        %s356 = scalar_select %p355, %s23, 0
        %s357 = sadd.s32 %s356, %s354
        %s358 = smul.addr %s357, 4
        %s359 = scalar_lea.vmem %s0, %s358
        %p360 = pneg %p58
        %p361 = pneg %p55
        %s362 = sand.u32 %s73, 1
        %s363 = sand.u32 %s73, 1
        %s364 = smul.addr %s363, 64
        %s365 = scalar_lea.vmem [#allocation2], %s364
        %p366 = pneg %p86
        %p367 = pneg %p83
        %p368 = scmp.lt.s32.totalorder %s22, 4
        %s369 = scalar_select %p368, %s22, 4
        %s370 = scalar_lea.vmem %s2, %s369
        %p371 = pneg %p112
        %p372 = pneg %p109
        %p373 = pneg %p133
        %p374 = pneg %p130
        %p375 = pneg %p154
        %p376 = pneg %p151
        %p377 = pneg %p182
        %p378 = pneg %p179
        %s379 = sand.u32 %s169, 1
        %s380 = sand.u32 %s169, 1
        %s381 = smul.addr %s380, 16
        %s382 = scalar_lea.vmem [#allocation3], %s381
        %s383 = smul.u32 4, %s21
        %p384 = scmp.lt.s32.totalorder %s383, 7
        %s385 = scalar_select %p384, %s383, 7
        %p386 = scmp.lt.s32.totalorder %s23, 0
        %s387 = scalar_select %p386, %s23, 0
        %s388 = sadd.s32 %s387, %s385
        %s389 = smul.addr %s388, 4
        %s390 = scalar_lea.vmem %s0, %s389
        %s391 = smul.u32 4, %s21
        %s392 = smul.u32 16, %s23
        %p393 = scmp.lt.s32.totalorder %s22, 4
        %s394 = scalar_select %p393, %s22, 4
        %s395 = scalar_lea.vmem %s2, %s394
        %s396 = smul.u32 4, %s21
        %v397 = vld [vmem:[%s390] sm:$0xf]
        %v398 = vld [vmem:[%s390 + $0x4] sm:$0xf]
        %v399 = vld [vmem:[%s390 + $0x8] sm:$0xf]
        %v400 = vld [vmem:[%s390 + $0xc] sm:$0xf]
        %v401 = vunpack.c.l.bf16 %v397
        %v402 = vunpack.c.l.bf16 %v398
        %v403 = vunpack.c.l.bf16 %v399
        %v404 = vunpack.c.l.bf16 %v400
        %405 = vadd.xlane.f32.xlu0 %v401
        %v406 = vpop.xlane.xlu0 %405
        %407 = vadd.xlane.f32.xlu0 %v402
        %v408 = vpop.xlane.xlu0 %407
        %409 = vadd.xlane.f32.xlu0 %v403
        %v410 = vpop.xlane.xlu0 %409
        %411 = vadd.xlane.f32.xlu0 %v404
        %v412 = vpop.xlane.xlu0 %411
        %v413 = vrcp.pop 128.0
        %v414 = vmul.f32 128.0, %v413
        %v415 = vsub.f32 1.0, %v414
        %v416 = vmul.f32 %v413, %v415
        %v417 = vadd.f32 %v413, %v416
        %vm418 = vweird.f32 %v413
        %v419 = vsel %vm418, %v413, %v417
        %v420 = vmul.f32 %v406, %v419
        %v421 = vmul.f32 %v408, %v419
        %v422 = vmul.f32 %v410, %v419
        %v423 = vmul.f32 %v412, %v419
        %v424 = vsub.f32 %v401, %v420
        %v425 = vsub.f32 %v402, %v421
        %v426 = vsub.f32 %v403, %v422
        %v427 = vsub.f32 %v404, %v423
        %v428 = vmul.f32 %v424, %v424
        %v429 = vmul.f32 %v425, %v425
        %v430 = vmul.f32 %v426, %v426
        %v431 = vmul.f32 %v427, %v427
        %432 = vadd.xlane.f32.xlu0 %v428
        %v433 = vpop.xlane.xlu0 %432
        %434 = vadd.xlane.f32.xlu0 %v429
        %v435 = vpop.xlane.xlu0 %434
        %436 = vadd.xlane.f32.xlu0 %v430
        %v437 = vpop.xlane.xlu0 %436
        %438 = vadd.xlane.f32.xlu0 %v431
        %v439 = vpop.xlane.xlu0 %438
        %v440 = vmul.f32 %v433, %v419
        %v441 = vmul.f32 %v435, %v419
        %v442 = vmul.f32 %v437, %v419
        %v443 = vmul.f32 %v439, %v419
        %v444 = vadd.f32 %v440, 1e-06
        %v445 = vadd.f32 %v441, 1e-06
        %v446 = vadd.f32 %v442, 1e-06
        %v447 = vadd.f32 %v443, 1e-06
        %v448 = vrsqrt.pop %v444
        %v449 = vmul.f32 %v448, %v444
        %v450 = vmul.f32 %v449, %v448
        %v451 = vmul.f32 0.5, %v450
        %v452 = vsub.f32 1.5, %v451
        %v453 = vmul.f32 %v448, %v452
        %vm454 = vweird.f32 %v444
        %vm455 = vweird.f32 %v448
        %vm456 = vmor %vm454, %vm455
        %v457 = vsel %vm456, %v448, %v453
        %v458 = vrsqrt.pop %v445
        %v459 = vmul.f32 %v458, %v445
        %v460 = vmul.f32 %v459, %v458
        %v461 = vmul.f32 0.5, %v460
        %v462 = vsub.f32 1.5, %v461
        %v463 = vmul.f32 %v458, %v462
        %vm464 = vweird.f32 %v445
        %vm465 = vweird.f32 %v458
        %vm466 = vmor %vm464, %vm465
        %v467 = vsel %vm466, %v458, %v463
        %v468 = vrsqrt.pop %v446
        %v469 = vmul.f32 %v468, %v446
        %v470 = vmul.f32 %v469, %v468
        %v471 = vmul.f32 0.5, %v470
        %v472 = vsub.f32 1.5, %v471
        %v473 = vmul.f32 %v468, %v472
        %vm474 = vweird.f32 %v446
        %vm475 = vweird.f32 %v468
        %vm476 = vmor %vm474, %vm475
        %v477 = vsel %vm476, %v468, %v473
        %v478 = vrsqrt.pop %v447
        %v479 = vmul.f32 %v478, %v447
        %v480 = vmul.f32 %v479, %v478
        %v481 = vmul.f32 0.5, %v480
        %v482 = vsub.f32 1.5, %v481
        %v483 = vmul.f32 %v478, %v482
        %vm484 = vweird.f32 %v447
        %vm485 = vweird.f32 %v478
        %vm486 = vmor %vm484, %vm485
        %v487 = vsel %vm486, %v478, %v483
        %v488 = vmul.f32 %v424, %v457
        %v489 = vmul.f32 %v425, %v467
        %v490 = vmul.f32 %v426, %v477
        %v491 = vmul.f32 %v427, %v487
        %v492 = vld [vmem:[%s3] sm:$0x1]
        %v493 = vunpack.c.l.bf16 %v492
        %v494 = vperm.slane %v493, 0
        %v495 = vmul.f32 %v488, %v494
        %v496 = vmul.f32 %v489, %v494
        %v497 = vmul.f32 %v490, %v494
        %v498 = vmul.f32 %v491, %v494
        %v499 = vld [vmem:[%s4] sm:$0x1]
        %v500 = vunpack.c.l.bf16 %v499
        %v501 = vperm.slane %v500, 0
        %v502 = vadd.f32 %v495, %v501
        %v503 = vadd.f32 %v496, %v501
        %v504 = vadd.f32 %v497, %v501
        %v505 = vadd.f32 %v498, %v501
        %v506 = vpack.c.bf16 %v503, %v502
        %v507 = vpack.c.bf16 %v505, %v504
        %v508 = vld [vmem:[%s348] sm:$0xf]
        %v509 = vld [vmem:[%s348 + $0x4] sm:$0xf]
        %v510 = vld [vmem:[%s348 + $0x8] sm:$0xf]
        %v511 = vld [vmem:[%s348 + $0xc] sm:$0xf]
        %v512 = vld [vmem:[%s348 + $0x10] sm:$0xf]
        %v513 = vld [vmem:[%s348 + $0x14] sm:$0xf]
        %v514 = vld [vmem:[%s348 + $0x18] sm:$0xf]
        %v515 = vld [vmem:[%s348 + $0x1c] sm:$0xf]
        %v516 = vld [vmem:[%s348 + $0x20] sm:$0xf]
        %v517 = vld [vmem:[%s348 + $0x24] sm:$0xf]
        %v518 = vld [vmem:[%s348 + $0x28] sm:$0xf]
        %v519 = vld [vmem:[%s348 + $0x2c] sm:$0xf]
        %v520 = vld [vmem:[%s348 + $0x30] sm:$0xf]
        %v521 = vld [vmem:[%s348 + $0x34] sm:$0xf]
        %v522 = vld [vmem:[%s348 + $0x38] sm:$0xf]
        %v523 = vld [vmem:[%s348 + $0x3c] sm:$0xf]
        %v524 = vld [vmem:[%s395] sm:$0x1]
        %v525 = vunpack.c.l.bf16 %v524
        %v526 = vperm.slane %v525, 0
        %v543 = vunpack.c.l.b16 %v508
        %v544 = vunpack.c.l.b16 %v509
        %v545 = vunpack.c.l.b16 %v510
        %v546 = vunpack.c.l.b16 %v511
        %v547 = vunpack.c.l.b16 %v512
        %v548 = vunpack.c.l.b16 %v513
        %v549 = vunpack.c.l.b16 %v514
        %v550 = vunpack.c.l.b16 %v515
        %v551 = vunpack.c.l.b16 %v516
        %v552 = vunpack.c.l.b16 %v517
        %v553 = vunpack.c.l.b16 %v518
        %v554 = vunpack.c.l.b16 %v519
        %v555 = vunpack.c.l.b16 %v520
        %v556 = vunpack.c.l.b16 %v521
        %v557 = vunpack.c.l.b16 %v522
        %v558 = vunpack.c.l.b16 %v523
        %v559 = vpack.c.b16 %v544, %v543
        %v560 = vpack.c.b16 %v546, %v545
        %v561 = vpack.c.b16 %v548, %v547
        %v562 = vpack.c.b16 %v550, %v549
        %v563 = vpack.c.b16 %v552, %v551
        %v564 = vpack.c.b16 %v554, %v553
        %v565 = vpack.c.b16 %v556, %v555
        %v566 = vpack.c.b16 %v558, %v557
        %575 = vmatpush.bf16.msra.mxu0 %v566
        %576 = vmatpush.bf16.msra.mxu0 %v565
        %577 = vmatpush.bf16.msra.mxu0 %v564
        %578 = vmatpush.bf16.msra.mxu0 %v563
        %579 = vmatpush.bf16.msra.mxu0 %v562
        %580 = vmatpush.bf16.msra.mxu0 %v561
        %581 = vmatpush.bf16.msra.mxu0 %v560
        %582 = vmatpush.bf16.msra.mxu0 %v559
        %583 = vmatmul.bf16.gmra.mxu0 %v506
        %v584 = vpop.f32.mrf.mxu0
        %v585 = vadd.f32 %v526, %v584
        %v586 = vpop.f32.mrf.mxu0
        %v587 = vadd.f32 %v526, %v586
        %588 = vmatmul.bf16.gmra.mxu0 %v507
        %v589 = vpop.f32.mrf.mxu0
        %v590 = vadd.f32 %v526, %v589
        %v591 = vpop.f32.mrf.mxu0
        %v592 = vadd.f32 %v526, %v591
        %593 = vdwg.mxu0
        %v594 = vmul.f32 %v585, 0.5
        %v595 = vmul.f32 %v587, 0.5
        %v596 = vmul.f32 %v590, 0.5
        %v597 = vmul.f32 %v592, 0.5
        %v598 = vmul.f32 %v585, 0.044715
        %v599 = vmul.f32 %v587, 0.044715
        %v600 = vmul.f32 %v590, 0.044715
        %v601 = vmul.f32 %v592, 0.044715
        %v602 = vmul.f32 %v598, %v585
        %v603 = vmul.f32 %v599, %v587
        %v604 = vmul.f32 %v600, %v590
        %v605 = vmul.f32 %v601, %v592
        %v606 = vmul.f32 %v602, %v585
        %v607 = vmul.f32 %v603, %v587
        %v608 = vmul.f32 %v604, %v590
        %v609 = vmul.f32 %v605, %v592
        %v610 = vadd.f32 %v585, %v606
        %v611 = vadd.f32 %v587, %v607
        %v612 = vadd.f32 %v590, %v608
        %v613 = vadd.f32 %v592, %v609
        %v614 = vmul.f32 %v610, 0.7978846
        %v615 = vmul.f32 %v611, 0.7978846
        %v616 = vmul.f32 %v612, 0.7978846
        %v617 = vmul.f32 %v613, 0.7978846
        %v618 = vtanh.pop %v614
        %v619 = vtanh.pop %v615
        %v620 = vtanh.pop %v616
        %v621 = vtanh.pop %v617
        %v622 = vadd.f32 %v618, 1.0
        %v623 = vadd.f32 %v619, 1.0
        %v624 = vadd.f32 %v620, 1.0
        %v625 = vadd.f32 %v621, 1.0
        %v626 = vmul.f32 %v594, %v622
        %v627 = vmul.f32 %v595, %v623
        %v628 = vmul.f32 %v596, %v624
        %v629 = vmul.f32 %v597, %v625
        %v630 = vpack.c.bf16 %v626, %v626
        %v631 = vpack.c.bf16 %v627, %v627
        %v632 = vpack.c.bf16 %v628, %v628
        %v633 = vpack.c.bf16 %v629, %v629
        %634 = vst [vmem:[%s382] sm:$0xf] %v630
        %635 = vst [vmem:[%s382 + $0x4] sm:$0xf] %v631
        %636 = vst [vmem:[%s382 + $0x8] sm:$0xf] %v632
        %637 = vst [vmem:[%s382 + $0xc] sm:$0xf] %v633
        %s638 = sand.u32 %s169, 1
        %s639 = sand.u32 %s169, 1
        %s640 = smul.addr %s639, 16
        %s641 = scalar_lea.vmem [#allocation3], %s640
        // Predicated region
        $region82: #{siglip_vision_forward.16} parent=76 // pred_check
          %p642 = pneg %p179
        $region83: #{siglip_vision_forward.16} parent=76 // pred_check_branch
          %644 = sbr.rel (%p642) target = $region85
        $region84: #{siglip_vision_forward.16} parent=76 // pred_region
          %s645 = smul.u32 4, %s21
          %s646 = smul.addr %s645, 5
          %s647 = sadd.s32 %s22, %s646
          %s648 = smul.addr %s647, 4
          %s649 = scalar_lea.vmem %s5, %s648
          // Predicated region
          $region86: #{siglip_vision_forward.16} parent=84 // pred_check
            _
          $region87: #{siglip_vision_forward.16} parent=84 // pred_check_branch
            %651 = sbr.rel (0) target = $region89
          $region88: #{siglip_vision_forward.16} parent=84 // pred_region
            // Predicated region
            $region90: #{siglip_vision_forward.16} parent=88 // pred_check
              _
            $region91: #{siglip_vision_forward.16} parent=88 // pred_check_branch
              %653 = sbr.rel target = $region93
            $region92: #{siglip_vision_forward.16} parent=88 // pred_region
              // Predicated region
              $region105: #{siglip_vision_forward.16} parent=92 // pred_check
                _
              $region106: #{siglip_vision_forward.16} parent=92 // pred_check_branch
                %675 = sbr.rel (0) target = $region108
              $region107: #{siglip_vision_forward.16} parent=92 // pred_region
                loop: start=0, step=1, limit=1
                $region109: #{siglip_vision_forward.16} parent=107 // loop_pre_header
                  _
                $region110: #{siglip_vision_forward.16} parent=107 // loop_header
                  %s677 = sphi 0, %s681
                  %p678 = scmp.ge.s32.totalorder %s677, 1
                  %s682 = sphi %s641, %s641
                  %s683 = sphi %s649, %s649
                $region111: #{siglip_vision_forward.16} parent=107 // loop_header_branch
                  %680 = sbr.rel (%p678) target = $region115
                $region112: #{siglip_vision_forward.16} parent=107 // loop_body
                  _
                $region113: #{siglip_vision_forward.16} parent=107 // loop_footer
                  %s681 = sadd.s32 1, %s677
                $region114: #{siglip_vision_forward.16} parent=107 // loop_footer_branch
                  %676 = sbr.rel target = $region110
                $region115: #{siglip_vision_forward.16} parent=107 // loop_exit
                  _
                %s685 = ssub.s32 16, 1
                loop: start=0, step=1, limit=1
                $region116: #{siglip_vision_forward.16} parent=107 // loop_pre_header
                  _
                $region117: #{siglip_vision_forward.16} parent=107 // loop_header
                  %s687 = sphi 0, %s691
                  %p688 = scmp.ge.s32.totalorder %s687, 1
                  %s692 = sphi %s641, %s641
                  %s693 = sphi %s649, %s649
                $region118: #{siglip_vision_forward.16} parent=107 // loop_header_branch
                  %690 = sbr.rel (%p688) target = $region122
                $region119: #{siglip_vision_forward.16} parent=107 // loop_body
                  %v694 = vld [vmem:[%s692] sm:%s685]
                  %695 = vst [vmem:[%s693] sm:%s685] %v694
                  %v696 = vld [vmem:[%s692 + $0x4] sm:%s685]
                  %697 = vst [vmem:[%s693 + $0x14] sm:%s685] %v696
                  %v698 = vld [vmem:[%s692 + $0x8] sm:%s685]
                  %699 = vst [vmem:[%s693 + $0x28] sm:%s685] %v698
                  %v700 = vld [vmem:[%s692 + $0xc] sm:%s685]
                  %701 = vst [vmem:[%s693 + $0x3c] sm:%s685] %v700
                $region120: #{siglip_vision_forward.16} parent=107 // loop_footer
                  %s691 = sadd.s32 1, %s687
                $region121: #{siglip_vision_forward.16} parent=107 // loop_footer_branch
                  %686 = sbr.rel target = $region117
                $region122: #{siglip_vision_forward.16} parent=107 // loop_exit
                  _
              $region108: #{siglip_vision_forward.16} parent=92 // pred_fallthru
                _
            $region93: #{siglip_vision_forward.16} parent=88 // pred_fallthru
              _
            // Predicated region
            $region94: #{siglip_vision_forward.16} parent=88 // pred_check
              _
            $region95: #{siglip_vision_forward.16} parent=88 // pred_check_branch
              %655 = sbr.rel (0) target = $region97
            $region96: #{siglip_vision_forward.16} parent=88 // pred_region
              %s657 = ssub.s32 16, 1
              loop: start=0, step=1, limit=1
              $region98: #{siglip_vision_forward.16} parent=96 // loop_pre_header
                _
              $region99: #{siglip_vision_forward.16} parent=96 // loop_header
                %s659 = sphi 0, %s663
                %p660 = scmp.ge.s32.totalorder %s659, 1
                %s664 = sphi %s641, %s641
                %s665 = sphi %s649, %s649
              $region100: #{siglip_vision_forward.16} parent=96 // loop_header_branch
                %662 = sbr.rel (%p660) target = $region104
              $region101: #{siglip_vision_forward.16} parent=96 // loop_body
                %v666 = vld [vmem:[%s664] sm:%s657]
                %667 = vst [vmem:[%s665] sm:%s657] %v666
                %v668 = vld [vmem:[%s664 + $0x4] sm:%s657]
                %669 = vst [vmem:[%s665 + $0x14] sm:%s657] %v668
                %v670 = vld [vmem:[%s664 + $0x8] sm:%s657]
                %671 = vst [vmem:[%s665 + $0x28] sm:%s657] %v670
                %v672 = vld [vmem:[%s664 + $0xc] sm:%s657]
                %673 = vst [vmem:[%s665 + $0x3c] sm:%s657] %v672
              $region102: #{siglip_vision_forward.16} parent=96 // loop_footer
                %s663 = sadd.s32 1, %s659
              $region103: #{siglip_vision_forward.16} parent=96 // loop_footer_branch
                %658 = sbr.rel target = $region99
              $region104: #{siglip_vision_forward.16} parent=96 // loop_exit
                _
            $region97: #{siglip_vision_forward.16} parent=88 // pred_fallthru
              _
          $region89: #{siglip_vision_forward.16} parent=84 // pred_fallthru
            _
          %702 = vnop
        $region85: #{siglip_vision_forward.16} parent=76 // pred_fallthru
          _
      $region77: #{siglip_vision_forward.16} parent=5 // pred_fallthru
        _
      %p703 = scmp.le.s32.totalorder 2, %s11
      // Predicated region
      $region123: #{siglip_vision_forward.16} parent=5 // pred_check
        %p704 = pneg %p703
      $region124: #{siglip_vision_forward.16} parent=5 // pred_check_branch
        %706 = sbr.rel (%p704) target = $region126
      $region125: #{siglip_vision_forward.16} parent=5 // pred_region
        %s707 = ssub.s32 %s11, 2
        // Predicated region
        $region127: #{siglip_vision_forward.16} parent=125 // pred_check
          %p708 = pneg %p185
        $region128: #{siglip_vision_forward.16} parent=125 // pred_check_branch
          %710 = sbr.rel (%p708) target = $region130
        $region129: #{siglip_vision_forward.16} parent=125 // pred_region
          %s711 = sand.u32 %s170, 1
          %s712 = sand.u32 %s170, 1
          %s713 = smul.addr %s712, 16
          %s714 = scalar_lea.vmem [#allocation3], %s713
        $region130: #{siglip_vision_forward.16} parent=125 // pred_fallthru
          _
      $region126: #{siglip_vision_forward.16} parent=5 // pred_fallthru
        _
    $region6: #{siglip_vision_forward.16} parent=1 // loop_footer
      %s15 = sadd.s32 1, %s11
    $region7: #{siglip_vision_forward.16} parent=1 // loop_footer_branch
      %10 = sbr.rel target = $region3
    $region8: #{siglip_vision_forward.16} parent=1 // loop_exit
      _

</llo_original>
